<compile_context>
chip_gen: v6e
topology: v6e:2x2x1
jax: 0.10.0
libtpu: 0.0.40
codegen_flags: <defaults>
</compile_context>

<pallas_src>
import jax
import jax.numpy as jnp
from jax import lax
from jax.experimental import pallas as pl
from jax.experimental.pallas import tpu as pltpu


def _round_up(n, m):
    return ((n + m - 1) // m) * m


def lstm_head_kernel(x_ref, w_ih_t_ref, w_hh_t_ref, b_ref,
                     scale_ref, shift_ref, w_fc_t_ref, b_fc_ref,
                     out_ref,
                     gx_ref, h_ref, c_ref, hs_ref):
    S = x_ref.shape[0]              # padded sequence length (multiple of 8)
    Hp = w_hh_t_ref.shape[0]        # padded hidden size (multiple of 128)

    # ---- 1) batched input projection for all timesteps: (S,Dp)@(Dp,4Hp)+b -> (S,4Hp)
    gx_ref[...] = jnp.dot(x_ref[...], w_ih_t_ref[...],
                          preferred_element_type=jnp.float32) + b_ref[...]

    # ---- 2) sequential LSTM recurrence (batch = 1), state kept in VMEM scratch
    h_ref[...] = jnp.zeros_like(h_ref)
    c_ref[...] = jnp.zeros_like(c_ref)

    def step(t, carry):
        gates = gx_ref[pl.ds(t, 1), :] + jnp.dot(
            h_ref[...], w_hh_t_ref[...], preferred_element_type=jnp.float32)
        # PyTorch gate order: i, f, g, o.  Each gate is a full 128-lane block.
        i = jax.nn.sigmoid(gates[:, 0:Hp])
        f = jax.nn.sigmoid(gates[:, Hp:2 * Hp])
        g = jnp.tanh(gates[:, 2 * Hp:3 * Hp])
        o = jax.nn.sigmoid(gates[:, 3 * Hp:4 * Hp])
        c = f * c_ref[...] + i * g
        h = o * jnp.tanh(c)
        c_ref[...] = c
        h_ref[...] = h
        hs_ref[pl.ds(t, 1), :] = h
        return carry

    # Fully unrolled: S is small and static -> static sublane indices, full LLO visibility.
    lax.fori_loop(0, S, step, 0, unroll=True)

    # ---- 3) head: Dropout(eval: identity) -> folded BN scale/shift -> ReLU -> Linear
    y = jnp.maximum(hs_ref[...] * scale_ref[...] + shift_ref[...], 0.0)
    out_ref[...] = jnp.dot(y, w_fc_t_ref[...],
                           preferred_element_type=jnp.float32) + b_fc_ref[...]


def lstm_forward(x, params):
    S, D = x.shape
    H = params["w_hh"].shape[1]
    C = params["w_fc"].shape[0]
    f32 = jnp.float32

    Sp = _round_up(S, 8)        # sublane-aligned time axis
    Dp = _round_up(D, 128)      # lane-aligned input features
    Hp = _round_up(H, 128)      # lane-aligned per-gate hidden block
    Cp = _round_up(C, 128)      # lane-dense output store

    # ---- pad input (zero rows/cols contribute exact zeros)
    x_p = jnp.zeros((Sp, Dp), f32).at[:S, :D].set(x.astype(f32))

    # ---- per-gate padded LSTM weights / bias (PyTorch gate order i, f, g, o).
    # Padded gate pre-activations are exactly 0 -> sigmoid=0.5 / tanh=0, and since the
    # padded c, h start at 0 they stay exactly 0, so padding never perturbs real lanes.
    w_ih = params["w_ih"]                              # (4H, D)
    w_hh = params["w_hh"]                              # (4H, H)
    b = params["b_ih"] + params["b_hh"]                # (4H,)

    w_ih_t_p = jnp.zeros((Dp, 4 * Hp), f32)
    w_hh_t_p = jnp.zeros((Hp, 4 * Hp), f32)
    b_p = jnp.zeros((1, 4 * Hp), f32)
    for g in range(4):
        w_ih_t_p = w_ih_t_p.at[:D, g * Hp:g * Hp + H].set(w_ih[g * H:(g + 1) * H, :].T)
        w_hh_t_p = w_hh_t_p.at[:H, g * Hp:g * Hp + H].set(w_hh[g * H:(g + 1) * H, :].T)
        b_p = b_p.at[0, g * Hp:g * Hp + H].set(b[g * H:(g + 1) * H])

    # ---- fold BatchNorm1d (eval mode) into a single scale/shift
    inv_std = lax.rsqrt(params["var"] + 1e-5)
    scale = params["gamma"] * inv_std
    shift = params["beta"] - params["mean"] * scale
    scale_p = jnp.zeros((1, Hp), f32).at[0, :H].set(scale)
    shift_p = jnp.zeros((1, Hp), f32).at[0, :H].set(shift)

    # ---- padded classifier (zero rows/cols -> padded lanes contribute nothing)
    w_fc_t_p = jnp.zeros((Hp, Cp), f32).at[:H, :C].set(params["w_fc"].T)
    b_fc_p = jnp.zeros((1, Cp), f32).at[0, :C].set(params["b_fc"])

    vmem_spec = pl.BlockSpec(memory_space=pltpu.MemorySpace.VMEM)

    out_p = pl.pallas_call(
        lstm_head_kernel,
        out_shape=jax.ShapeDtypeStruct((Sp, Cp), f32),
        in_specs=[vmem_spec] * 8,
        out_specs=vmem_spec,
        scratch_shapes=[
            pltpu.VMEM((Sp, 4 * Hp), f32),   # gx: x-projection for all steps
            pltpu.VMEM((1, Hp), f32),        # h state
            pltpu.VMEM((1, Hp), f32),        # c state
            pltpu.VMEM((Sp, Hp), f32),       # all hidden outputs
        ],
        compiler_params=pltpu.CompilerParams(vmem_limit_bytes=32 * 1024 * 1024),
    )(x_p, w_ih_t_p, w_hh_t_p, b_p, scale_p, shift_p, w_fc_t_p, b_fc_p)

    return out_p[:S, :C]


def reference_forward(x, p):
    """Pure-JAX reference mirroring the PyTorch module (eval mode)."""
    H = p["w_hh"].shape[1]
    gx = x @ p["w_ih"].T + p["b_ih"] + p["b_hh"]

    def step(carry, gxt):
        h, c = carry
        gates = gxt + h @ p["w_hh"].T
        i = jax.nn.sigmoid(gates[0:H])
        f = jax.nn.sigmoid(gates[H:2 * H])
        g = jnp.tanh(gates[2 * H:3 * H])
        o = jax.nn.sigmoid(gates[3 * H:4 * H])
        c = f * c + i * g
        h = o * jnp.tanh(c)
        return (h, c), h

    (_, _), hs = lax.scan(step, (jnp.zeros(H), jnp.zeros(H)), gx)
    y = (hs - p["mean"]) * lax.rsqrt(p["var"] + 1e-5) * p["gamma"] + p["beta"]
    y = jnp.maximum(y, 0.0)
    return y @ p["w_fc"].T + p["b_fc"]


def init_params(key, input_size, hidden, num_classes, forget):
    ks = jax.random.split(key, 6)
    scale = 1.0 / jnp.sqrt(hidden)
    w_ih = jax.random.uniform(ks[0], (4 * hidden, input_size), jnp.float32, -scale, scale)
    w_hh = jax.random.uniform(ks[1], (4 * hidden, hidden), jnp.float32, -scale, scale)
    b_ih = jax.random.uniform(ks[2], (4 * hidden,), jnp.float32, -scale, scale)
    b_hh = jax.random.uniform(ks[3], (4 * hidden,), jnp.float32, -scale, scale)
    # forget-gate bias fill (rows [H:2H] of both biases), as in the PyTorch __init__
    b_ih = b_ih.at[hidden:2 * hidden].set(forget)
    b_hh = b_hh.at[hidden:2 * hidden].set(forget)
    fc_scale = 1.0 / jnp.sqrt(hidden)
    w_fc = jax.random.uniform(ks[4], (num_classes, hidden), jnp.float32, -fc_scale, fc_scale)
    b_fc = jax.random.uniform(ks[5], (num_classes,), jnp.float32, -fc_scale, fc_scale)
    return {
        "w_ih": w_ih, "w_hh": w_hh, "b_ih": b_ih, "b_hh": b_hh,
        # BatchNorm1d fresh-module defaults (eval mode)
        "gamma": jnp.ones((hidden,), jnp.float32),
        "beta": jnp.zeros((hidden,), jnp.float32),
        "mean": jnp.zeros((hidden,), jnp.float32),
        "var": jnp.ones((hidden,), jnp.float32),
        "w_fc": w_fc, "b_fc": b_fc,
    }


if __name__ == "__main__":
    seq_len, input_size, hidden, num_classes, forget = 8, 16, 32, 10, 1.0
    key = jax.random.PRNGKey(0)
    kx, kp = jax.random.split(key)
    x = jax.random.normal(kx, (seq_len, input_size), jnp.float32)
    params = init_params(kp, input_size, hidden, num_classes, forget)

    out = lstm_forward(x, params)
    out = jax.block_until_ready(out)

    ref = reference_forward(x, params)
    assert out.shape == (seq_len, num_classes)
    assert jnp.allclose(out, ref, atol=1e-4, rtol=1e-4), "mismatch vs JAX reference"

    print("KERNEL_OK")
</pallas_src>

<mosaic_0001>
module attributes {stable_mosaic.version = 11 : i64} {
  func.func @lstm_head_kernel(%arg0: memref<8x128xf32, #tpu.memory_space<vmem>>, %arg1: memref<128x512xf32, #tpu.memory_space<vmem>>, %arg2: memref<128x512xf32, #tpu.memory_space<vmem>>, %arg3: memref<1x512xf32, #tpu.memory_space<vmem>>, %arg4: memref<1x128xf32, #tpu.memory_space<vmem>>, %arg5: memref<1x128xf32, #tpu.memory_space<vmem>>, %arg6: memref<128x128xf32, #tpu.memory_space<vmem>>, %arg7: memref<1x128xf32, #tpu.memory_space<vmem>>, %arg8: memref<8x128xf32, #tpu.memory_space<vmem>>, %arg9: memref<8x512xf32, #tpu.memory_space<vmem>>, %arg10: memref<1x128xf32, #tpu.memory_space<vmem>>, %arg11: memref<1x128xf32, #tpu.memory_space<vmem>>, %arg12: memref<8x128xf32, #tpu.memory_space<vmem>>) attributes {dimension_semantics = [], scalar_prefetch = 0 : i64, scratch_operands = 4 : i64, tpu.core_type = #tpu.core_type<tc>} {
    %c0 = arith.constant 0 : index
    %c0_0 = arith.constant 0 : index
    %0 = vector.load %arg0[%c0, %c0_0] : memref<8x128xf32, #tpu.memory_space<vmem>>, vector<8x128xf32>
    %c0_1 = arith.constant 0 : index
    %c0_2 = arith.constant 0 : index
    %1 = vector.load %arg1[%c0_1, %c0_2] : memref<128x512xf32, #tpu.memory_space<vmem>>, vector<128x512xf32>
    %cst = arith.constant dense<0.000000e+00> : vector<8x512xf32>
    %2 = tpu.matmul %0, %1, %cst {dimension_numbers = #tpu.dot_dimension_numbers<[1], [0], [0], [1], [0, 0, 1, 1], [], []>} : vector<8x128xf32>, vector<128x512xf32>, vector<8x512xf32> -> vector<8x512xf32>
    %c0_3 = arith.constant 0 : index
    %c0_4 = arith.constant 0 : index
    %3 = vector.load %arg3[%c0_3, %c0_4] : memref<1x512xf32, #tpu.memory_space<vmem>>, vector<1x512xf32>
    %4 = vector.broadcast %3 : vector<1x512xf32> to vector<8x512xf32>
    %5 = arith.addf %2, %4 : vector<8x512xf32>
    %c0_5 = arith.constant 0 : index
    %c0_6 = arith.constant 0 : index
    %6 = vector.load %arg9[%c0_5, %c0_6] : memref<8x512xf32, #tpu.memory_space<vmem>>, vector<8x512xf32>
    tpu.vector_store %arg9[%c0_5, %c0_6], %5 {strides = array<i32>} : memref<8x512xf32, #tpu.memory_space<vmem>>, vector<8x512xf32>,
    %cst_7 = arith.constant 0.000000e+00 : f32
    %7 = vector.broadcast %cst_7 : f32 to vector<1x128xf32>
    %c0_8 = arith.constant 0 : index
    %c0_9 = arith.constant 0 : index
    %8 = vector.load %arg10[%c0_8, %c0_9] : memref<1x128xf32, #tpu.memory_space<vmem>>, vector<1x128xf32>
    tpu.vector_store %arg10[%c0_8, %c0_9], %7 {strides = array<i32>} : memref<1x128xf32, #tpu.memory_space<vmem>>, vector<1x128xf32>,
    %cst_10 = arith.constant 0.000000e+00 : f32
    %9 = vector.broadcast %cst_10 : f32 to vector<1x128xf32>
    %c0_11 = arith.constant 0 : index
    %c0_12 = arith.constant 0 : index
    %10 = vector.load %arg11[%c0_11, %c0_12] : memref<1x128xf32, #tpu.memory_space<vmem>>, vector<1x128xf32>
    tpu.vector_store %arg11[%c0_11, %c0_12], %9 {strides = array<i32>} : memref<1x128xf32, #tpu.memory_space<vmem>>, vector<1x128xf32>,
    %c0_i32 = arith.constant 0 : i32
    %11 = arith.index_cast %c0_i32 : i32 to index
    %c0_13 = arith.constant 0 : index
    %12 = vector.load %arg9[%11, %c0_13] : memref<8x512xf32, #tpu.memory_space<vmem>>, vector<1x512xf32>
    %c0_14 = arith.constant 0 : index
    %c0_15 = arith.constant 0 : index
    %13 = vector.load %arg10[%c0_14, %c0_15] : memref<1x128xf32, #tpu.memory_space<vmem>>, vector<1x128xf32>
    %c0_16 = arith.constant 0 : index
    %c0_17 = arith.constant 0 : index
    %14 = vector.load %arg2[%c0_16, %c0_17] : memref<128x512xf32, #tpu.memory_space<vmem>>, vector<128x512xf32>
    %cst_18 = arith.constant dense<0.000000e+00> : vector<1x512xf32>
    %15 = tpu.matmul %13, %14, %cst_18 {dimension_numbers = #tpu.dot_dimension_numbers<[1], [0], [0], [1], [0, 0, 1, 1], [], []>} : vector<1x128xf32>, vector<128x512xf32>, vector<1x512xf32> -> vector<1x512xf32>
    %16 = arith.addf %12, %15 : vector<1x512xf32>
    %17 = vector.extract_strided_slice %16 {offsets = [0, 0], sizes = [1, 128], strides = [1, 1]} : vector<1x512xf32> to vector<1x128xf32>
    %18 = arith.negf %17 : vector<1x128xf32>
    %19 = math.exp %18 : vector<1x128xf32>
    %cst_19 = arith.constant 1.000000e+00 : f32
    %20 = vector.broadcast %cst_19 : f32 to vector<1x128xf32>
    %21 = arith.addf %20, %19 : vector<1x128xf32>
    %22 = arith.divf %20, %21 : vector<1x128xf32>
    %23 = vector.extract_strided_slice %16 {offsets = [0, 128], sizes = [1, 128], strides = [1, 1]} : vector<1x512xf32> to vector<1x128xf32>
    %24 = arith.negf %23 : vector<1x128xf32>
    %25 = math.exp %24 : vector<1x128xf32>
    %cst_20 = arith.constant 1.000000e+00 : f32
    %26 = vector.broadcast %cst_20 : f32 to vector<1x128xf32>
    %27 = arith.addf %26, %25 : vector<1x128xf32>
    %28 = arith.divf %26, %27 : vector<1x128xf32>
    %29 = vector.extract_strided_slice %16 {offsets = [0, 256], sizes = [1, 128], strides = [1, 1]} : vector<1x512xf32> to vector<1x128xf32>
    %30 = math.tanh %29 : vector<1x128xf32>
    %31 = vector.extract_strided_slice %16 {offsets = [0, 384], sizes = [1, 128], strides = [1, 1]} : vector<1x512xf32> to vector<1x128xf32>
    %32 = arith.negf %31 : vector<1x128xf32>
    %33 = math.exp %32 : vector<1x128xf32>
    %cst_21 = arith.constant 1.000000e+00 : f32
    %34 = vector.broadcast %cst_21 : f32 to vector<1x128xf32>
    %35 = arith.addf %34, %33 : vector<1x128xf32>
    %36 = arith.divf %34, %35 : vector<1x128xf32>
    %c0_22 = arith.constant 0 : index
    %c0_23 = arith.constant 0 : index
    %37 = vector.load %arg11[%c0_22, %c0_23] : memref<1x128xf32, #tpu.memory_space<vmem>>, vector<1x128xf32>
    %38 = arith.mulf %28, %37 : vector<1x128xf32>
    %39 = arith.mulf %22, %30 : vector<1x128xf32>
    %40 = arith.addf %38, %39 : vector<1x128xf32>
    %41 = math.tanh %40 : vector<1x128xf32>
    %42 = arith.mulf %36, %41 : vector<1x128xf32>
    %c0_24 = arith.constant 0 : index
    %c0_25 = arith.constant 0 : index
    %43 = vector.load %arg11[%c0_24, %c0_25] : memref<1x128xf32, #tpu.memory_space<vmem>>, vector<1x128xf32>
    tpu.vector_store %arg11[%c0_24, %c0_25], %40 {strides = array<i32>} : memref<1x128xf32, #tpu.memory_space<vmem>>, vector<1x128xf32>,
    %c0_26 = arith.constant 0 : index
    %c0_27 = arith.constant 0 : index
    %44 = vector.load %arg10[%c0_26, %c0_27] : memref<1x128xf32, #tpu.memory_space<vmem>>, vector<1x128xf32>
    tpu.vector_store %arg10[%c0_26, %c0_27], %42 {strides = array<i32>} : memref<1x128xf32, #tpu.memory_space<vmem>>, vector<1x128xf32>,
    %45 = arith.index_cast %c0_i32 : i32 to index
    %c0_28 = arith.constant 0 : index
    %46 = vector.load %arg12[%45, %c0_28] : memref<8x128xf32, #tpu.memory_space<vmem>>, vector<1x128xf32>
    tpu.vector_store %arg12[%45, %c0_28], %42 {strides = array<i32>} : memref<8x128xf32, #tpu.memory_space<vmem>>, vector<1x128xf32>,
    %c1_i32 = arith.constant 1 : i32
    %47 = arith.index_cast %c1_i32 : i32 to index
    %c0_29 = arith.constant 0 : index
    %48 = vector.load %arg9[%47, %c0_29] : memref<8x512xf32, #tpu.memory_space<vmem>>, vector<1x512xf32>
    %c0_30 = arith.constant 0 : index
    %c0_31 = arith.constant 0 : index
    %49 = vector.load %arg10[%c0_30, %c0_31] : memref<1x128xf32, #tpu.memory_space<vmem>>, vector<1x128xf32>
    %c0_32 = arith.constant 0 : index
    %c0_33 = arith.constant 0 : index
    %50 = vector.load %arg2[%c0_32, %c0_33] : memref<128x512xf32, #tpu.memory_space<vmem>>, vector<128x512xf32>
    %cst_34 = arith.constant dense<0.000000e+00> : vector<1x512xf32>
    %51 = tpu.matmul %49, %50, %cst_34 {dimension_numbers = #tpu.dot_dimension_numbers<[1], [0], [0], [1], [0, 0, 1, 1], [], []>} : vector<1x128xf32>, vector<128x512xf32>, vector<1x512xf32> -> vector<1x512xf32>
    %52 = arith.addf %48, %51 : vector<1x512xf32>
    %53 = vector.extract_strided_slice %52 {offsets = [0, 0], sizes = [1, 128], strides = [1, 1]} : vector<1x512xf32> to vector<1x128xf32>
    %54 = arith.negf %53 : vector<1x128xf32>
    %55 = math.exp %54 : vector<1x128xf32>
    %cst_35 = arith.constant 1.000000e+00 : f32
    %56 = vector.broadcast %cst_35 : f32 to vector<1x128xf32>
    %57 = arith.addf %56, %55 : vector<1x128xf32>
    %58 = arith.divf %56, %57 : vector<1x128xf32>
    %59 = vector.extract_strided_slice %52 {offsets = [0, 128], sizes = [1, 128], strides = [1, 1]} : vector<1x512xf32> to vector<1x128xf32>
    %60 = arith.negf %59 : vector<1x128xf32>
    %61 = math.exp %60 : vector<1x128xf32>
    %cst_36 = arith.constant 1.000000e+00 : f32
    %62 = vector.broadcast %cst_36 : f32 to vector<1x128xf32>
    %63 = arith.addf %62, %61 : vector<1x128xf32>
    %64 = arith.divf %62, %63 : vector<1x128xf32>
    %65 = vector.extract_strided_slice %52 {offsets = [0, 256], sizes = [1, 128], strides = [1, 1]} : vector<1x512xf32> to vector<1x128xf32>
    %66 = math.tanh %65 : vector<1x128xf32>
    %67 = vector.extract_strided_slice %52 {offsets = [0, 384], sizes = [1, 128], strides = [1, 1]} : vector<1x512xf32> to vector<1x128xf32>
    %68 = arith.negf %67 : vector<1x128xf32>
    %69 = math.exp %68 : vector<1x128xf32>
    %cst_37 = arith.constant 1.000000e+00 : f32
    %70 = vector.broadcast %cst_37 : f32 to vector<1x128xf32>
    %71 = arith.addf %70, %69 : vector<1x128xf32>
    %72 = arith.divf %70, %71 : vector<1x128xf32>
    %c0_38 = arith.constant 0 : index
    %c0_39 = arith.constant 0 : index
    %73 = vector.load %arg11[%c0_38, %c0_39] : memref<1x128xf32, #tpu.memory_space<vmem>>, vector<1x128xf32>
    %74 = arith.mulf %64, %73 : vector<1x128xf32>
    %75 = arith.mulf %58, %66 : vector<1x128xf32>
    %76 = arith.addf %74, %75 : vector<1x128xf32>
    %77 = math.tanh %76 : vector<1x128xf32>
    %78 = arith.mulf %72, %77 : vector<1x128xf32>
    %c0_40 = arith.constant 0 : index
    %c0_41 = arith.constant 0 : index
    %79 = vector.load %arg11[%c0_40, %c0_41] : memref<1x128xf32, #tpu.memory_space<vmem>>, vector<1x128xf32>
    tpu.vector_store %arg11[%c0_40, %c0_41], %76 {strides = array<i32>} : memref<1x128xf32, #tpu.memory_space<vmem>>, vector<1x128xf32>,
    %c0_42 = arith.constant 0 : index
    %c0_43 = arith.constant 0 : index
    %80 = vector.load %arg10[%c0_42, %c0_43] : memref<1x128xf32, #tpu.memory_space<vmem>>, vector<1x128xf32>
    tpu.vector_store %arg10[%c0_42, %c0_43], %78 {strides = array<i32>} : memref<1x128xf32, #tpu.memory_space<vmem>>, vector<1x128xf32>,
    %81 = arith.index_cast %c1_i32 : i32 to index
    %c0_44 = arith.constant 0 : index
    %82 = vector.load %arg12[%81, %c0_44] : memref<8x128xf32, #tpu.memory_space<vmem>>, vector<1x128xf32>
    tpu.vector_store %arg12[%81, %c0_44], %78 {strides = array<i32>} : memref<8x128xf32, #tpu.memory_space<vmem>>, vector<1x128xf32>,
    %c2_i32 = arith.constant 2 : i32
    %83 = arith.index_cast %c2_i32 : i32 to index
    %c0_45 = arith.constant 0 : index
    %84 = vector.load %arg9[%83, %c0_45] : memref<8x512xf32, #tpu.memory_space<vmem>>, vector<1x512xf32>
    %c0_46 = arith.constant 0 : index
    %c0_47 = arith.constant 0 : index
    %85 = vector.load %arg10[%c0_46, %c0_47] : memref<1x128xf32, #tpu.memory_space<vmem>>, vector<1x128xf32>
    %c0_48 = arith.constant 0 : index
    %c0_49 = arith.constant 0 : index
    %86 = vector.load %arg2[%c0_48, %c0_49] : memref<128x512xf32, #tpu.memory_space<vmem>>, vector<128x512xf32>
    %cst_50 = arith.constant dense<0.000000e+00> : vector<1x512xf32>
    %87 = tpu.matmul %85, %86, %cst_50 {dimension_numbers = #tpu.dot_dimension_numbers<[1], [0], [0], [1], [0, 0, 1, 1], [], []>} : vector<1x128xf32>, vector<128x512xf32>, vector<1x512xf32> -> vector<1x512xf32>
    %88 = arith.addf %84, %87 : vector<1x512xf32>
    %89 = vector.extract_strided_slice %88 {offsets = [0, 0], sizes = [1, 128], strides = [1, 1]} : vector<1x512xf32> to vector<1x128xf32>
    %90 = arith.negf %89 : vector<1x128xf32>
    %91 = math.exp %90 : vector<1x128xf32>
    %cst_51 = arith.constant 1.000000e+00 : f32
    %92 = vector.broadcast %cst_51 : f32 to vector<1x128xf32>
    %93 = arith.addf %92, %91 : vector<1x128xf32>
    %94 = arith.divf %92, %93 : vector<1x128xf32>
    %95 = vector.extract_strided_slice %88 {offsets = [0, 128], sizes = [1, 128], strides = [1, 1]} : vector<1x512xf32> to vector<1x128xf32>
    %96 = arith.negf %95 : vector<1x128xf32>
    %97 = math.exp %96 : vector<1x128xf32>
    %cst_52 = arith.constant 1.000000e+00 : f32
    %98 = vector.broadcast %cst_52 : f32 to vector<1x128xf32>
    %99 = arith.addf %98, %97 : vector<1x128xf32>
    %100 = arith.divf %98, %99 : vector<1x128xf32>
    %101 = vector.extract_strided_slice %88 {offsets = [0, 256], sizes = [1, 128], strides = [1, 1]} : vector<1x512xf32> to vector<1x128xf32>
    %102 = math.tanh %101 : vector<1x128xf32>
    %103 = vector.extract_strided_slice %88 {offsets = [0, 384], sizes = [1, 128], strides = [1, 1]} : vector<1x512xf32> to vector<1x128xf32>
    %104 = arith.negf %103 : vector<1x128xf32>
    %105 = math.exp %104 : vector<1x128xf32>
    %cst_53 = arith.constant 1.000000e+00 : f32
    %106 = vector.broadcast %cst_53 : f32 to vector<1x128xf32>
    %107 = arith.addf %106, %105 : vector<1x128xf32>
    %108 = arith.divf %106, %107 : vector<1x128xf32>
    %c0_54 = arith.constant 0 : index
    %c0_55 = arith.constant 0 : index
    %109 = vector.load %arg11[%c0_54, %c0_55] : memref<1x128xf32, #tpu.memory_space<vmem>>, vector<1x128xf32>
    %110 = arith.mulf %100, %109 : vector<1x128xf32>
    %111 = arith.mulf %94, %102 : vector<1x128xf32>
    %112 = arith.addf %110, %111 : vector<1x128xf32>
    %113 = math.tanh %112 : vector<1x128xf32>
    %114 = arith.mulf %108, %113 : vector<1x128xf32>
    %c0_56 = arith.constant 0 : index
    %c0_57 = arith.constant 0 : index
    %115 = vector.load %arg11[%c0_56, %c0_57] : memref<1x128xf32, #tpu.memory_space<vmem>>, vector<1x128xf32>
    tpu.vector_store %arg11[%c0_56, %c0_57], %112 {strides = array<i32>} : memref<1x128xf32, #tpu.memory_space<vmem>>, vector<1x128xf32>,
    %c0_58 = arith.constant 0 : index
    %c0_59 = arith.constant 0 : index
    %116 = vector.load %arg10[%c0_58, %c0_59] : memref<1x128xf32, #tpu.memory_space<vmem>>, vector<1x128xf32>
    tpu.vector_store %arg10[%c0_58, %c0_59], %114 {strides = array<i32>} : memref<1x128xf32, #tpu.memory_space<vmem>>, vector<1x128xf32>,
    %117 = arith.index_cast %c2_i32 : i32 to index
    %c0_60 = arith.constant 0 : index
    %118 = vector.load %arg12[%117, %c0_60] : memref<8x128xf32, #tpu.memory_space<vmem>>, vector<1x128xf32>
    tpu.vector_store %arg12[%117, %c0_60], %114 {strides = array<i32>} : memref<8x128xf32, #tpu.memory_space<vmem>>, vector<1x128xf32>,
    %c3_i32 = arith.constant 3 : i32
    %119 = arith.index_cast %c3_i32 : i32 to index
    %c0_61 = arith.constant 0 : index
    %120 = vector.load %arg9[%119, %c0_61] : memref<8x512xf32, #tpu.memory_space<vmem>>, vector<1x512xf32>
    %c0_62 = arith.constant 0 : index
    %c0_63 = arith.constant 0 : index
    %121 = vector.load %arg10[%c0_62, %c0_63] : memref<1x128xf32, #tpu.memory_space<vmem>>, vector<1x128xf32>
    %c0_64 = arith.constant 0 : index
    %c0_65 = arith.constant 0 : index
    %122 = vector.load %arg2[%c0_64, %c0_65] : memref<128x512xf32, #tpu.memory_space<vmem>>, vector<128x512xf32>
    %cst_66 = arith.constant dense<0.000000e+00> : vector<1x512xf32>
    %123 = tpu.matmul %121, %122, %cst_66 {dimension_numbers = #tpu.dot_dimension_numbers<[1], [0], [0], [1], [0, 0, 1, 1], [], []>} : vector<1x128xf32>, vector<128x512xf32>, vector<1x512xf32> -> vector<1x512xf32>
    %124 = arith.addf %120, %123 : vector<1x512xf32>
    %125 = vector.extract_strided_slice %124 {offsets = [0, 0], sizes = [1, 128], strides = [1, 1]} : vector<1x512xf32> to vector<1x128xf32>
    %126 = arith.negf %125 : vector<1x128xf32>
    %127 = math.exp %126 : vector<1x128xf32>
    %cst_67 = arith.constant 1.000000e+00 : f32
    %128 = vector.broadcast %cst_67 : f32 to vector<1x128xf32>
    %129 = arith.addf %128, %127 : vector<1x128xf32>
    %130 = arith.divf %128, %129 : vector<1x128xf32>
    %131 = vector.extract_strided_slice %124 {offsets = [0, 128], sizes = [1, 128], strides = [1, 1]} : vector<1x512xf32> to vector<1x128xf32>
    %132 = arith.negf %131 : vector<1x128xf32>
    %133 = math.exp %132 : vector<1x128xf32>
    %cst_68 = arith.constant 1.000000e+00 : f32
    %134 = vector.broadcast %cst_68 : f32 to vector<1x128xf32>
    %135 = arith.addf %134, %133 : vector<1x128xf32>
    %136 = arith.divf %134, %135 : vector<1x128xf32>
    %137 = vector.extract_strided_slice %124 {offsets = [0, 256], sizes = [1, 128], strides = [1, 1]} : vector<1x512xf32> to vector<1x128xf32>
    %138 = math.tanh %137 : vector<1x128xf32>
    %139 = vector.extract_strided_slice %124 {offsets = [0, 384], sizes = [1, 128], strides = [1, 1]} : vector<1x512xf32> to vector<1x128xf32>
    %140 = arith.negf %139 : vector<1x128xf32>
    %141 = math.exp %140 : vector<1x128xf32>
    %cst_69 = arith.constant 1.000000e+00 : f32
    %142 = vector.broadcast %cst_69 : f32 to vector<1x128xf32>
    %143 = arith.addf %142, %141 : vector<1x128xf32>
    %144 = arith.divf %142, %143 : vector<1x128xf32>
    %c0_70 = arith.constant 0 : index
    %c0_71 = arith.constant 0 : index
    %145 = vector.load %arg11[%c0_70, %c0_71] : memref<1x128xf32, #tpu.memory_space<vmem>>, vector<1x128xf32>
    %146 = arith.mulf %136, %145 : vector<1x128xf32>
    %147 = arith.mulf %130, %138 : vector<1x128xf32>
    %148 = arith.addf %146, %147 : vector<1x128xf32>
    %149 = math.tanh %148 : vector<1x128xf32>
    %150 = arith.mulf %144, %149 : vector<1x128xf32>
    %c0_72 = arith.constant 0 : index
    %c0_73 = arith.constant 0 : index
    %151 = vector.load %arg11[%c0_72, %c0_73] : memref<1x128xf32, #tpu.memory_space<vmem>>, vector<1x128xf32>
    tpu.vector_store %arg11[%c0_72, %c0_73], %148 {strides = array<i32>} : memref<1x128xf32, #tpu.memory_space<vmem>>, vector<1x128xf32>,
    %c0_74 = arith.constant 0 : index
    %c0_75 = arith.constant 0 : index
    %152 = vector.load %arg10[%c0_74, %c0_75] : memref<1x128xf32, #tpu.memory_space<vmem>>, vector<1x128xf32>
    tpu.vector_store %arg10[%c0_74, %c0_75], %150 {strides = array<i32>} : memref<1x128xf32, #tpu.memory_space<vmem>>, vector<1x128xf32>,
    %153 = arith.index_cast %c3_i32 : i32 to index
    %c0_76 = arith.constant 0 : index
    %154 = vector.load %arg12[%153, %c0_76] : memref<8x128xf32, #tpu.memory_space<vmem>>, vector<1x128xf32>
    tpu.vector_store %arg12[%153, %c0_76], %150 {strides = array<i32>} : memref<8x128xf32, #tpu.memory_space<vmem>>, vector<1x128xf32>,
    %c4_i32 = arith.constant 4 : i32
    %155 = arith.index_cast %c4_i32 : i32 to index
    %c0_77 = arith.constant 0 : index
    %156 = vector.load %arg9[%155, %c0_77] : memref<8x512xf32, #tpu.memory_space<vmem>>, vector<1x512xf32>
    %c0_78 = arith.constant 0 : index
    %c0_79 = arith.constant 0 : index
    %157 = vector.load %arg10[%c0_78, %c0_79] : memref<1x128xf32, #tpu.memory_space<vmem>>, vector<1x128xf32>
    %c0_80 = arith.constant 0 : index
    %c0_81 = arith.constant 0 : index
    %158 = vector.load %arg2[%c0_80, %c0_81] : memref<128x512xf32, #tpu.memory_space<vmem>>, vector<128x512xf32>
    %cst_82 = arith.constant dense<0.000000e+00> : vector<1x512xf32>
    %159 = tpu.matmul %157, %158, %cst_82 {dimension_numbers = #tpu.dot_dimension_numbers<[1], [0], [0], [1], [0, 0, 1, 1], [], []>} : vector<1x128xf32>, vector<128x512xf32>, vector<1x512xf32> -> vector<1x512xf32>
    %160 = arith.addf %156, %159 : vector<1x512xf32>
    %161 = vector.extract_strided_slice %160 {offsets = [0, 0], sizes = [1, 128], strides = [1, 1]} : vector<1x512xf32> to vector<1x128xf32>
    %162 = arith.negf %161 : vector<1x128xf32>
    %163 = math.exp %162 : vector<1x128xf32>
    %cst_83 = arith.constant 1.000000e+00 : f32
    %164 = vector.broadcast %cst_83 : f32 to vector<1x128xf32>
    %165 = arith.addf %164, %163 : vector<1x128xf32>
    %166 = arith.divf %164, %165 : vector<1x128xf32>
    %167 = vector.extract_strided_slice %160 {offsets = [0, 128], sizes = [1, 128], strides = [1, 1]} : vector<1x512xf32> to vector<1x128xf32>
    %168 = arith.negf %167 : vector<1x128xf32>
    %169 = math.exp %168 : vector<1x128xf32>
    %cst_84 = arith.constant 1.000000e+00 : f32
    %170 = vector.broadcast %cst_84 : f32 to vector<1x128xf32>
    %171 = arith.addf %170, %169 : vector<1x128xf32>
    %172 = arith.divf %170, %171 : vector<1x128xf32>
    %173 = vector.extract_strided_slice %160 {offsets = [0, 256], sizes = [1, 128], strides = [1, 1]} : vector<1x512xf32> to vector<1x128xf32>
    %174 = math.tanh %173 : vector<1x128xf32>
    %175 = vector.extract_strided_slice %160 {offsets = [0, 384], sizes = [1, 128], strides = [1, 1]} : vector<1x512xf32> to vector<1x128xf32>
    %176 = arith.negf %175 : vector<1x128xf32>
    %177 = math.exp %176 : vector<1x128xf32>
    %cst_85 = arith.constant 1.000000e+00 : f32
    %178 = vector.broadcast %cst_85 : f32 to vector<1x128xf32>
    %179 = arith.addf %178, %177 : vector<1x128xf32>
    %180 = arith.divf %178, %179 : vector<1x128xf32>
    %c0_86 = arith.constant 0 : index
    %c0_87 = arith.constant 0 : index
    %181 = vector.load %arg11[%c0_86, %c0_87] : memref<1x128xf32, #tpu.memory_space<vmem>>, vector<1x128xf32>
    %182 = arith.mulf %172, %181 : vector<1x128xf32>
    %183 = arith.mulf %166, %174 : vector<1x128xf32>
    %184 = arith.addf %182, %183 : vector<1x128xf32>
    %185 = math.tanh %184 : vector<1x128xf32>
    %186 = arith.mulf %180, %185 : vector<1x128xf32>
    %c0_88 = arith.constant 0 : index
    %c0_89 = arith.constant 0 : index
    %187 = vector.load %arg11[%c0_88, %c0_89] : memref<1x128xf32, #tpu.memory_space<vmem>>, vector<1x128xf32>
    tpu.vector_store %arg11[%c0_88, %c0_89], %184 {strides = array<i32>} : memref<1x128xf32, #tpu.memory_space<vmem>>, vector<1x128xf32>,
    %c0_90 = arith.constant 0 : index
    %c0_91 = arith.constant 0 : index
    %188 = vector.load %arg10[%c0_90, %c0_91] : memref<1x128xf32, #tpu.memory_space<vmem>>, vector<1x128xf32>
    tpu.vector_store %arg10[%c0_90, %c0_91], %186 {strides = array<i32>} : memref<1x128xf32, #tpu.memory_space<vmem>>, vector<1x128xf32>,
    %189 = arith.index_cast %c4_i32 : i32 to index
    %c0_92 = arith.constant 0 : index
    %190 = vector.load %arg12[%189, %c0_92] : memref<8x128xf32, #tpu.memory_space<vmem>>, vector<1x128xf32>
    tpu.vector_store %arg12[%189, %c0_92], %186 {strides = array<i32>} : memref<8x128xf32, #tpu.memory_space<vmem>>, vector<1x128xf32>,
    %c5_i32 = arith.constant 5 : i32
    %191 = arith.index_cast %c5_i32 : i32 to index
    %c0_93 = arith.constant 0 : index
    %192 = vector.load %arg9[%191, %c0_93] : memref<8x512xf32, #tpu.memory_space<vmem>>, vector<1x512xf32>
    %c0_94 = arith.constant 0 : index
    %c0_95 = arith.constant 0 : index
    %193 = vector.load %arg10[%c0_94, %c0_95] : memref<1x128xf32, #tpu.memory_space<vmem>>, vector<1x128xf32>
    %c0_96 = arith.constant 0 : index
    %c0_97 = arith.constant 0 : index
    %194 = vector.load %arg2[%c0_96, %c0_97] : memref<128x512xf32, #tpu.memory_space<vmem>>, vector<128x512xf32>
    %cst_98 = arith.constant dense<0.000000e+00> : vector<1x512xf32>
    %195 = tpu.matmul %193, %194, %cst_98 {dimension_numbers = #tpu.dot_dimension_numbers<[1], [0], [0], [1], [0, 0, 1, 1], [], []>} : vector<1x128xf32>, vector<128x512xf32>, vector<1x512xf32> -> vector<1x512xf32>
    %196 = arith.addf %192, %195 : vector<1x512xf32>
    %197 = vector.extract_strided_slice %196 {offsets = [0, 0], sizes = [1, 128], strides = [1, 1]} : vector<1x512xf32> to vector<1x128xf32>
    %198 = arith.negf %197 : vector<1x128xf32>
    %199 = math.exp %198 : vector<1x128xf32>
    %cst_99 = arith.constant 1.000000e+00 : f32
    %200 = vector.broadcast %cst_99 : f32 to vector<1x128xf32>
    %201 = arith.addf %200, %199 : vector<1x128xf32>
    %202 = arith.divf %200, %201 : vector<1x128xf32>
    %203 = vector.extract_strided_slice %196 {offsets = [0, 128], sizes = [1, 128], strides = [1, 1]} : vector<1x512xf32> to vector<1x128xf32>
    %204 = arith.negf %203 : vector<1x128xf32>
    %205 = math.exp %204 : vector<1x128xf32>
    %cst_100 = arith.constant 1.000000e+00 : f32
    %206 = vector.broadcast %cst_100 : f32 to vector<1x128xf32>
    %207 = arith.addf %206, %205 : vector<1x128xf32>
    %208 = arith.divf %206, %207 : vector<1x128xf32>
    %209 = vector.extract_strided_slice %196 {offsets = [0, 256], sizes = [1, 128], strides = [1, 1]} : vector<1x512xf32> to vector<1x128xf32>
    %210 = math.tanh %209 : vector<1x128xf32>
    %211 = vector.extract_strided_slice %196 {offsets = [0, 384], sizes = [1, 128], strides = [1, 1]} : vector<1x512xf32> to vector<1x128xf32>
    %212 = arith.negf %211 : vector<1x128xf32>
    %213 = math.exp %212 : vector<1x128xf32>
    %cst_101 = arith.constant 1.000000e+00 : f32
    %214 = vector.broadcast %cst_101 : f32 to vector<1x128xf32>
    %215 = arith.addf %214, %213 : vector<1x128xf32>
    %216 = arith.divf %214, %215 : vector<1x128xf32>
    %c0_102 = arith.constant 0 : index
    %c0_103 = arith.constant 0 : index
    %217 = vector.load %arg11[%c0_102, %c0_103] : memref<1x128xf32, #tpu.memory_space<vmem>>, vector<1x128xf32>
    %218 = arith.mulf %208, %217 : vector<1x128xf32>
    %219 = arith.mulf %202, %210 : vector<1x128xf32>
    %220 = arith.addf %218, %219 : vector<1x128xf32>
    %221 = math.tanh %220 : vector<1x128xf32>
    %222 = arith.mulf %216, %221 : vector<1x128xf32>
    %c0_104 = arith.constant 0 : index
    %c0_105 = arith.constant 0 : index
    %223 = vector.load %arg11[%c0_104, %c0_105] : memref<1x128xf32, #tpu.memory_space<vmem>>, vector<1x128xf32>
    tpu.vector_store %arg11[%c0_104, %c0_105], %220 {strides = array<i32>} : memref<1x128xf32, #tpu.memory_space<vmem>>, vector<1x128xf32>,
    %c0_106 = arith.constant 0 : index
    %c0_107 = arith.constant 0 : index
    %224 = vector.load %arg10[%c0_106, %c0_107] : memref<1x128xf32, #tpu.memory_space<vmem>>, vector<1x128xf32>
    tpu.vector_store %arg10[%c0_106, %c0_107], %222 {strides = array<i32>} : memref<1x128xf32, #tpu.memory_space<vmem>>, vector<1x128xf32>,
    %225 = arith.index_cast %c5_i32 : i32 to index
    %c0_108 = arith.constant 0 : index
    %226 = vector.load %arg12[%225, %c0_108] : memref<8x128xf32, #tpu.memory_space<vmem>>, vector<1x128xf32>
    tpu.vector_store %arg12[%225, %c0_108], %222 {strides = array<i32>} : memref<8x128xf32, #tpu.memory_space<vmem>>, vector<1x128xf32>,
    %c6_i32 = arith.constant 6 : i32
    %227 = arith.index_cast %c6_i32 : i32 to index
    %c0_109 = arith.constant 0 : index
    %228 = vector.load %arg9[%227, %c0_109] : memref<8x512xf32, #tpu.memory_space<vmem>>, vector<1x512xf32>
    %c0_110 = arith.constant 0 : index
    %c0_111 = arith.constant 0 : index
    %229 = vector.load %arg10[%c0_110, %c0_111] : memref<1x128xf32, #tpu.memory_space<vmem>>, vector<1x128xf32>
    %c0_112 = arith.constant 0 : index
    %c0_113 = arith.constant 0 : index
    %230 = vector.load %arg2[%c0_112, %c0_113] : memref<128x512xf32, #tpu.memory_space<vmem>>, vector<128x512xf32>
    %cst_114 = arith.constant dense<0.000000e+00> : vector<1x512xf32>
    %231 = tpu.matmul %229, %230, %cst_114 {dimension_numbers = #tpu.dot_dimension_numbers<[1], [0], [0], [1], [0, 0, 1, 1], [], []>} : vector<1x128xf32>, vector<128x512xf32>, vector<1x512xf32> -> vector<1x512xf32>
    %232 = arith.addf %228, %231 : vector<1x512xf32>
    %233 = vector.extract_strided_slice %232 {offsets = [0, 0], sizes = [1, 128], strides = [1, 1]} : vector<1x512xf32> to vector<1x128xf32>
    %234 = arith.negf %233 : vector<1x128xf32>
    %235 = math.exp %234 : vector<1x128xf32>
    %cst_115 = arith.constant 1.000000e+00 : f32
    %236 = vector.broadcast %cst_115 : f32 to vector<1x128xf32>
    %237 = arith.addf %236, %235 : vector<1x128xf32>
    %238 = arith.divf %236, %237 : vector<1x128xf32>
    %239 = vector.extract_strided_slice %232 {offsets = [0, 128], sizes = [1, 128], strides = [1, 1]} : vector<1x512xf32> to vector<1x128xf32>
    %240 = arith.negf %239 : vector<1x128xf32>
    %241 = math.exp %240 : vector<1x128xf32>
    %cst_116 = arith.constant 1.000000e+00 : f32
    %242 = vector.broadcast %cst_116 : f32 to vector<1x128xf32>
    %243 = arith.addf %242, %241 : vector<1x128xf32>
    %244 = arith.divf %242, %243 : vector<1x128xf32>
    %245 = vector.extract_strided_slice %232 {offsets = [0, 256], sizes = [1, 128], strides = [1, 1]} : vector<1x512xf32> to vector<1x128xf32>
    %246 = math.tanh %245 : vector<1x128xf32>
    %247 = vector.extract_strided_slice %232 {offsets = [0, 384], sizes = [1, 128], strides = [1, 1]} : vector<1x512xf32> to vector<1x128xf32>
    %248 = arith.negf %247 : vector<1x128xf32>
    %249 = math.exp %248 : vector<1x128xf32>
    %cst_117 = arith.constant 1.000000e+00 : f32
    %250 = vector.broadcast %cst_117 : f32 to vector<1x128xf32>
    %251 = arith.addf %250, %249 : vector<1x128xf32>
    %252 = arith.divf %250, %251 : vector<1x128xf32>
    %c0_118 = arith.constant 0 : index
    %c0_119 = arith.constant 0 : index
    %253 = vector.load %arg11[%c0_118, %c0_119] : memref<1x128xf32, #tpu.memory_space<vmem>>, vector<1x128xf32>
    %254 = arith.mulf %244, %253 : vector<1x128xf32>
    %255 = arith.mulf %238, %246 : vector<1x128xf32>
    %256 = arith.addf %254, %255 : vector<1x128xf32>
    %257 = math.tanh %256 : vector<1x128xf32>
    %258 = arith.mulf %252, %257 : vector<1x128xf32>
    %c0_120 = arith.constant 0 : index
    %c0_121 = arith.constant 0 : index
    %259 = vector.load %arg11[%c0_120, %c0_121] : memref<1x128xf32, #tpu.memory_space<vmem>>, vector<1x128xf32>
    tpu.vector_store %arg11[%c0_120, %c0_121], %256 {strides = array<i32>} : memref<1x128xf32, #tpu.memory_space<vmem>>, vector<1x128xf32>,
    %c0_122 = arith.constant 0 : index
    %c0_123 = arith.constant 0 : index
    %260 = vector.load %arg10[%c0_122, %c0_123] : memref<1x128xf32, #tpu.memory_space<vmem>>, vector<1x128xf32>
    tpu.vector_store %arg10[%c0_122, %c0_123], %258 {strides = array<i32>} : memref<1x128xf32, #tpu.memory_space<vmem>>, vector<1x128xf32>,
    %261 = arith.index_cast %c6_i32 : i32 to index
    %c0_124 = arith.constant 0 : index
    %262 = vector.load %arg12[%261, %c0_124] : memref<8x128xf32, #tpu.memory_space<vmem>>, vector<1x128xf32>
    tpu.vector_store %arg12[%261, %c0_124], %258 {strides = array<i32>} : memref<8x128xf32, #tpu.memory_space<vmem>>, vector<1x128xf32>,
    %c7_i32 = arith.constant 7 : i32
    %263 = arith.index_cast %c7_i32 : i32 to index
    %c0_125 = arith.constant 0 : index
    %264 = vector.load %arg9[%263, %c0_125] : memref<8x512xf32, #tpu.memory_space<vmem>>, vector<1x512xf32>
    %c0_126 = arith.constant 0 : index
    %c0_127 = arith.constant 0 : index
    %265 = vector.load %arg10[%c0_126, %c0_127] : memref<1x128xf32, #tpu.memory_space<vmem>>, vector<1x128xf32>
    %c0_128 = arith.constant 0 : index
    %c0_129 = arith.constant 0 : index
    %266 = vector.load %arg2[%c0_128, %c0_129] : memref<128x512xf32, #tpu.memory_space<vmem>>, vector<128x512xf32>
    %cst_130 = arith.constant dense<0.000000e+00> : vector<1x512xf32>
    %267 = tpu.matmul %265, %266, %cst_130 {dimension_numbers = #tpu.dot_dimension_numbers<[1], [0], [0], [1], [0, 0, 1, 1], [], []>} : vector<1x128xf32>, vector<128x512xf32>, vector<1x512xf32> -> vector<1x512xf32>
    %268 = arith.addf %264, %267 : vector<1x512xf32>
    %269 = vector.extract_strided_slice %268 {offsets = [0, 0], sizes = [1, 128], strides = [1, 1]} : vector<1x512xf32> to vector<1x128xf32>
    %270 = arith.negf %269 : vector<1x128xf32>
    %271 = math.exp %270 : vector<1x128xf32>
    %cst_131 = arith.constant 1.000000e+00 : f32
    %272 = vector.broadcast %cst_131 : f32 to vector<1x128xf32>
    %273 = arith.addf %272, %271 : vector<1x128xf32>
    %274 = arith.divf %272, %273 : vector<1x128xf32>
    %275 = vector.extract_strided_slice %268 {offsets = [0, 128], sizes = [1, 128], strides = [1, 1]} : vector<1x512xf32> to vector<1x128xf32>
    %276 = arith.negf %275 : vector<1x128xf32>
    %277 = math.exp %276 : vector<1x128xf32>
    %cst_132 = arith.constant 1.000000e+00 : f32
    %278 = vector.broadcast %cst_132 : f32 to vector<1x128xf32>
    %279 = arith.addf %278, %277 : vector<1x128xf32>
    %280 = arith.divf %278, %279 : vector<1x128xf32>
    %281 = vector.extract_strided_slice %268 {offsets = [0, 256], sizes = [1, 128], strides = [1, 1]} : vector<1x512xf32> to vector<1x128xf32>
    %282 = math.tanh %281 : vector<1x128xf32>
    %283 = vector.extract_strided_slice %268 {offsets = [0, 384], sizes = [1, 128], strides = [1, 1]} : vector<1x512xf32> to vector<1x128xf32>
    %284 = arith.negf %283 : vector<1x128xf32>
    %285 = math.exp %284 : vector<1x128xf32>
    %cst_133 = arith.constant 1.000000e+00 : f32
    %286 = vector.broadcast %cst_133 : f32 to vector<1x128xf32>
    %287 = arith.addf %286, %285 : vector<1x128xf32>
    %288 = arith.divf %286, %287 : vector<1x128xf32>
    %c0_134 = arith.constant 0 : index
    %c0_135 = arith.constant 0 : index
    %289 = vector.load %arg11[%c0_134, %c0_135] : memref<1x128xf32, #tpu.memory_space<vmem>>, vector<1x128xf32>
    %290 = arith.mulf %280, %289 : vector<1x128xf32>
    %291 = arith.mulf %274, %282 : vector<1x128xf32>
    %292 = arith.addf %290, %291 : vector<1x128xf32>
    %293 = math.tanh %292 : vector<1x128xf32>
    %294 = arith.mulf %288, %293 : vector<1x128xf32>
    %c0_136 = arith.constant 0 : index
    %c0_137 = arith.constant 0 : index
    %295 = vector.load %arg11[%c0_136, %c0_137] : memref<1x128xf32, #tpu.memory_space<vmem>>, vector<1x128xf32>
    tpu.vector_store %arg11[%c0_136, %c0_137], %292 {strides = array<i32>} : memref<1x128xf32, #tpu.memory_space<vmem>>, vector<1x128xf32>,
    %c0_138 = arith.constant 0 : index
    %c0_139 = arith.constant 0 : index
    %296 = vector.load %arg10[%c0_138, %c0_139] : memref<1x128xf32, #tpu.memory_space<vmem>>, vector<1x128xf32>
    tpu.vector_store %arg10[%c0_138, %c0_139], %294 {strides = array<i32>} : memref<1x128xf32, #tpu.memory_space<vmem>>, vector<1x128xf32>,
    %297 = arith.index_cast %c7_i32 : i32 to index
    %c0_140 = arith.constant 0 : index
    %298 = vector.load %arg12[%297, %c0_140] : memref<8x128xf32, #tpu.memory_space<vmem>>, vector<1x128xf32>
    tpu.vector_store %arg12[%297, %c0_140], %294 {strides = array<i32>} : memref<8x128xf32, #tpu.memory_space<vmem>>, vector<1x128xf32>,
    %c8_i32 = arith.constant 8 : i32
    %c0_141 = arith.constant 0 : index
    %c0_142 = arith.constant 0 : index
    %299 = vector.load %arg12[%c0_141, %c0_142] : memref<8x128xf32, #tpu.memory_space<vmem>>, vector<8x128xf32>
    %c0_143 = arith.constant 0 : index
    %c0_144 = arith.constant 0 : index
    %300 = vector.load %arg4[%c0_143, %c0_144] : memref<1x128xf32, #tpu.memory_space<vmem>>, vector<1x128xf32>
    %301 = vector.broadcast %300 : vector<1x128xf32> to vector<8x128xf32>
    %302 = arith.mulf %299, %301 : vector<8x128xf32>
    %c0_145 = arith.constant 0 : index
    %c0_146 = arith.constant 0 : index
    %303 = vector.load %arg5[%c0_145, %c0_146] : memref<1x128xf32, #tpu.memory_space<vmem>>, vector<1x128xf32>
    %304 = vector.broadcast %303 : vector<1x128xf32> to vector<8x128xf32>
    %305 = arith.addf %302, %304 : vector<8x128xf32>
    %cst_147 = arith.constant 0.000000e+00 : f32
    %306 = vector.broadcast %cst_147 : f32 to vector<8x128xf32>
    %307 = arith.maximumf %305, %306 : vector<8x128xf32>
    %c0_148 = arith.constant 0 : index
    %c0_149 = arith.constant 0 : index
    %308 = vector.load %arg6[%c0_148, %c0_149] : memref<128x128xf32, #tpu.memory_space<vmem>>, vector<128x128xf32>
    %cst_150 = arith.constant dense<0.000000e+00> : vector<8x128xf32>
    %309 = tpu.matmul %307, %308, %cst_150 {dimension_numbers = #tpu.dot_dimension_numbers<[1], [0], [0], [1], [0, 0, 1, 1], [], []>} : vector<8x128xf32>, vector<128x128xf32>, vector<8x128xf32> -> vector<8x128xf32>
    %c0_151 = arith.constant 0 : index
    %c0_152 = arith.constant 0 : index
    %310 = vector.load %arg7[%c0_151, %c0_152] : memref<1x128xf32, #tpu.memory_space<vmem>>, vector<1x128xf32>
    %311 = vector.broadcast %310 : vector<1x128xf32> to vector<8x128xf32>
    %312 = arith.addf %309, %311 : vector<8x128xf32>
    %c0_153 = arith.constant 0 : index
    %c0_154 = arith.constant 0 : index
    %313 = vector.load %arg8[%c0_153, %c0_154] : memref<8x128xf32, #tpu.memory_space<vmem>>, vector<8x128xf32>
    tpu.vector_store %arg8[%c0_153, %c0_154], %312 {strides = array<i32>} : memref<8x128xf32, #tpu.memory_space<vmem>>, vector<8x128xf32>,
    return
  }
}

</mosaic_0001>

<llo_original>
// kernel: tpu_custom_call.1
$region0: #{tpu_custom_call.1}
  #allocation0 [shape = 'u32[]', space=smem, size = 0x4, offset = 0x4, fixed_abs, tag = 'smem constant byte address 0x4 - core index']
  #allocation1 [shape = 'u32[144,128]{1,0:T(1,128)}', space=vmem, size = 0x12000, scoped, tag = 'internal scratch']
  #allocation2 [shape = 'f32[8,512]{1,0:T(8,128)}', space=vmem, size = 0x4000, scoped, tag = 'scratch operand']
  #allocation3 [shape = 'f32[1,128]{1,0:T(1,128)}', space=vmem, size = 0x200, scoped, tag = 'scratch operand']
  #allocation4 [shape = 'f32[1,128]{1,0:T(1,128)}', space=vmem, size = 0x200, scoped, tag = 'scratch operand']
  #allocation5 [shape = 'f32[8,128]{1,0:T(8,128)}', space=vmem, size = 0x1000, scoped, tag = 'scratch operand']
  %s0 = inlined_call_operand.hbm [shape: f32[8,128], index: 0, kind: input, shape index: {}]
  %s1 = inlined_call_operand.hbm [shape: f32[128,512], index: 1, kind: input, shape index: {}]
  %s2 = inlined_call_operand.hbm [shape: f32[128,512], index: 2, kind: input, shape index: {}]
  %s3 = inlined_call_operand.vmem [shape: f32[1,512], index: 3, kind: input, shape index: {}]
  %s4 = inlined_call_operand.vmem [shape: f32[1,128], index: 4, kind: input, shape index: {}]
  %s5 = inlined_call_operand.vmem [shape: f32[1,128], index: 5, kind: input, shape index: {}]
  %s6 = inlined_call_operand.hbm [shape: f32[128,128], index: 6, kind: input, shape index: {}]
  %s7 = inlined_call_operand.vmem [shape: f32[1,128], index: 7, kind: input, shape index: {}]
  %s8 = inlined_call_operand.hbm [shape: f32[8,128], index: 8, kind: output, shape index: {}]
  %s9 = sld [smem:[#allocation0]]
  $region58: #{tpu_custom_call.1} parent=0
    _
  %s11 = ssub.s32 1, %s9
  %s12 = scalar_select 0, %s11, %s9
  $region1: #{tpu_custom_call.1} parent=0
    #allocation6 [shape = 'u8[4096]{0}', space=vmem, size = 0x1000, scoped, tag = 'input window, operand 0, single buffered']
    #allocation7 [shape = 's32[1]{0}', space=sflag, size = 0x4, scoped, tag = 'scoped memory for tpu_custom_call.1']
    #allocation8 [shape = 's32[1]{0}', space=sflag, size = 0x4, scoped, tag = 'scoped memory for tpu_custom_call.1']
    #allocation9 [shape = 'u8[262144]{0}', space=vmem, size = 0x40000, scoped, tag = 'input window, operand 1, single buffered']
    #allocation10 [shape = 's32[1]{0}', space=sflag, size = 0x4, scoped, tag = 'scoped memory for tpu_custom_call.1']
    #allocation11 [shape = 'u8[262144]{0}', space=vmem, size = 0x40000, scoped, tag = 'input window, operand 2, single buffered']
    #allocation12 [shape = 'u8[65536]{0}', space=vmem, size = 0x10000, scoped, tag = 'input window, operand 6, single buffered']
    #allocation13 [shape = 's32[1]{0}', space=sflag, size = 0x4, scoped, tag = 'scoped memory for tpu_custom_call.1']
    #allocation14 [shape = 'u8[4096]{0}', space=vmem, size = 0x1000, scoped, tag = 'output window, operand 0, single buffered']
    %13 = vsyncpa [#allocation7], 0
    %14 = vsyncpa [#allocation10], 0
    %15 = vsyncpa [#allocation13], 0
    %16 = vsyncpa [#allocation8], 0
    // Predicated region
    $region2: #{tpu_custom_call.1} parent=1 // pred_check
      _
    $region3: #{tpu_custom_call.1} parent=1 // pred_check_branch
      %18 = sbr.rel (0) target = $region5
    $region4: #{tpu_custom_call.1} parent=1 // pred_region
      %s20 = ssub.s32 128, 128
      %21 = vsyncadd [#allocation7], %s20
      %s23 = sshll.u32 [#allocation6], 4
      %s24 = int_to_ptr.vmem [resolvable:$true] %s23
      %26 = dma.hbm_to_vmem [thread:$0]  %s0, 128, %s24, [#allocation7]
    $region5: #{tpu_custom_call.1} parent=1 // pred_fallthru
      _
    // Predicated region
    $region6: #{tpu_custom_call.1} parent=1 // pred_check
      _
    $region7: #{tpu_custom_call.1} parent=1 // pred_check_branch
      %28 = sbr.rel (0) target = $region9
    $region8: #{tpu_custom_call.1} parent=1 // pred_region
      %s30 = ssub.s32 8192, 8192
      %31 = vsyncadd [#allocation10], %s30
      %s32 = sshll.u32 [#allocation9], 4
      %s33 = int_to_ptr.vmem [resolvable:$true] %s32
      %38 = dma.hbm_to_vmem [thread:$0]  %s1, 8192, %s33, [#allocation10], 512, 512, 32
    $region9: #{tpu_custom_call.1} parent=1 // pred_fallthru
      _
    // Predicated region
    $region10: #{tpu_custom_call.1} parent=1 // pred_check
      _
    $region11: #{tpu_custom_call.1} parent=1 // pred_check_branch
      %40 = sbr.rel (0) target = $region13
    $region12: #{tpu_custom_call.1} parent=1 // pred_region
      %s42 = ssub.s32 8192, 8192
      %43 = vsyncadd [#allocation10], %s42
      %s44 = sshll.u32 [#allocation11], 4
      %s45 = int_to_ptr.vmem [resolvable:$true] %s44
      %50 = dma.hbm_to_vmem [thread:$0]  %s2, 8192, %s45, [#allocation10], 512, 512, 32
    $region13: #{tpu_custom_call.1} parent=1 // pred_fallthru
      _
    // Predicated region
    $region14: #{tpu_custom_call.1} parent=1 // pred_check
      _
    $region15: #{tpu_custom_call.1} parent=1 // pred_check_branch
      %52 = sbr.rel (0) target = $region17
    $region16: #{tpu_custom_call.1} parent=1 // pred_region
      _
    $region17: #{tpu_custom_call.1} parent=1 // pred_fallthru
      _
    // Predicated region
    $region18: #{tpu_custom_call.1} parent=1 // pred_check
      _
    $region19: #{tpu_custom_call.1} parent=1 // pred_check_branch
      %54 = sbr.rel (0) target = $region21
    $region20: #{tpu_custom_call.1} parent=1 // pred_region
      _
    $region21: #{tpu_custom_call.1} parent=1 // pred_fallthru
      _
    // Predicated region
    $region22: #{tpu_custom_call.1} parent=1 // pred_check
      _
    $region23: #{tpu_custom_call.1} parent=1 // pred_check_branch
      %56 = sbr.rel (0) target = $region25
    $region24: #{tpu_custom_call.1} parent=1 // pred_region
      _
    $region25: #{tpu_custom_call.1} parent=1 // pred_fallthru
      _
    // Predicated region
    $region26: #{tpu_custom_call.1} parent=1 // pred_check
      _
    $region27: #{tpu_custom_call.1} parent=1 // pred_check_branch
      %58 = sbr.rel (0) target = $region29
    $region28: #{tpu_custom_call.1} parent=1 // pred_region
      %s60 = ssub.s32 2048, 2048
      %61 = vsyncadd [#allocation13], %s60
      %s62 = sshll.u32 [#allocation12], 4
      %s63 = int_to_ptr.vmem [resolvable:$true] %s62
      %68 = dma.hbm_to_vmem [thread:$0]  %s6, 2048, %s63, [#allocation13], 128, 128, 8
    $region29: #{tpu_custom_call.1} parent=1 // pred_fallthru
      _
    // Predicated region
    $region30: #{tpu_custom_call.1} parent=1 // pred_check
      _
    $region31: #{tpu_custom_call.1} parent=1 // pred_check_branch
      %70 = sbr.rel (0) target = $region33
    $region32: #{tpu_custom_call.1} parent=1 // pred_region
      _
    $region33: #{tpu_custom_call.1} parent=1 // pred_fallthru
      _
    // Predicated region
    $region34: #{tpu_custom_call.1} parent=1 // pred_check
      _
    $region35: #{tpu_custom_call.1} parent=1 // pred_check_branch
      %72 = sbr.rel (0) target = $region37
    $region36: #{tpu_custom_call.1} parent=1 // pred_region
      %73 = dma.done [#allocation7], 128
    $region37: #{tpu_custom_call.1} parent=1 // pred_fallthru
      _
    // Predicated region
    $region38: #{tpu_custom_call.1} parent=1 // pred_check
      _
    $region39: #{tpu_custom_call.1} parent=1 // pred_check_branch
      %75 = sbr.rel (0) target = $region41
    $region40: #{tpu_custom_call.1} parent=1 // pred_region
      %76 = dma.done [#allocation10], 8192
    $region41: #{tpu_custom_call.1} parent=1 // pred_fallthru
      _
    // Predicated region
    $region42: #{tpu_custom_call.1} parent=1 // pred_check
      _
    $region43: #{tpu_custom_call.1} parent=1 // pred_check_branch
      %78 = sbr.rel (0) target = $region45
    $region44: #{tpu_custom_call.1} parent=1 // pred_region
      %79 = dma.done [#allocation10], 8192
    $region45: #{tpu_custom_call.1} parent=1 // pred_fallthru
      _
    // Predicated region
    $region46: #{tpu_custom_call.1} parent=1 // pred_check
      _
    $region47: #{tpu_custom_call.1} parent=1 // pred_check_branch
      %81 = sbr.rel (0) target = $region49
    $region48: #{tpu_custom_call.1} parent=1 // pred_region
      %82 = dma.done [#allocation13], 2048
    $region49: #{tpu_custom_call.1} parent=1 // pred_fallthru
      _
    %v83 = vld [vmem:[#allocation6] sm:$0xff]
    %v84 = vld [vmem:[#allocation9] sm:$0xff]
    %v85 = vld [vmem:[#allocation9 + $0x8] sm:$0xff]
    %v86 = vld [vmem:[#allocation9 + $0x10] sm:$0xff]
    %v87 = vld [vmem:[#allocation9 + $0x18] sm:$0xff]
    %v88 = vld [vmem:[#allocation9 + $0x20] sm:$0xff]
    %v89 = vld [vmem:[#allocation9 + $0x28] sm:$0xff]
    %v90 = vld [vmem:[#allocation9 + $0x30] sm:$0xff]
    %v91 = vld [vmem:[#allocation9 + $0x38] sm:$0xff]
    %v92 = vld [vmem:[#allocation9 + $0x40] sm:$0xff]
    %v93 = vld [vmem:[#allocation9 + $0x48] sm:$0xff]
    %v94 = vld [vmem:[#allocation9 + $0x50] sm:$0xff]
    %v95 = vld [vmem:[#allocation9 + $0x58] sm:$0xff]
    %v96 = vld [vmem:[#allocation9 + $0x60] sm:$0xff]
    %v97 = vld [vmem:[#allocation9 + $0x68] sm:$0xff]
    %v98 = vld [vmem:[#allocation9 + $0x70] sm:$0xff]
    %v99 = vld [vmem:[#allocation9 + $0x78] sm:$0xff]
    %v100 = vld [vmem:[#allocation9 + $0x80] sm:$0xff]
    %v101 = vld [vmem:[#allocation9 + $0x88] sm:$0xff]
    %v102 = vld [vmem:[#allocation9 + $0x90] sm:$0xff]
    %v103 = vld [vmem:[#allocation9 + $0x98] sm:$0xff]
    %v104 = vld [vmem:[#allocation9 + $0xa0] sm:$0xff]
    %v105 = vld [vmem:[#allocation9 + $0xa8] sm:$0xff]
    %v106 = vld [vmem:[#allocation9 + $0xb0] sm:$0xff]
    %v107 = vld [vmem:[#allocation9 + $0xb8] sm:$0xff]
    %v108 = vld [vmem:[#allocation9 + $0xc0] sm:$0xff]
    %v109 = vld [vmem:[#allocation9 + $0xc8] sm:$0xff]
    %v110 = vld [vmem:[#allocation9 + $0xd0] sm:$0xff]
    %v111 = vld [vmem:[#allocation9 + $0xd8] sm:$0xff]
    %v112 = vld [vmem:[#allocation9 + $0xe0] sm:$0xff]
    %v113 = vld [vmem:[#allocation9 + $0xe8] sm:$0xff]
    %v114 = vld [vmem:[#allocation9 + $0xf0] sm:$0xff]
    %v115 = vld [vmem:[#allocation9 + $0xf8] sm:$0xff]
    %v116 = vld [vmem:[#allocation9 + $0x100] sm:$0xff]
    %v117 = vld [vmem:[#allocation9 + $0x108] sm:$0xff]
    %v118 = vld [vmem:[#allocation9 + $0x110] sm:$0xff]
    %v119 = vld [vmem:[#allocation9 + $0x118] sm:$0xff]
    %v120 = vld [vmem:[#allocation9 + $0x120] sm:$0xff]
    %v121 = vld [vmem:[#allocation9 + $0x128] sm:$0xff]
    %v122 = vld [vmem:[#allocation9 + $0x130] sm:$0xff]
    %v123 = vld [vmem:[#allocation9 + $0x138] sm:$0xff]
    %v124 = vld [vmem:[#allocation9 + $0x140] sm:$0xff]
    %v125 = vld [vmem:[#allocation9 + $0x148] sm:$0xff]
    %v126 = vld [vmem:[#allocation9 + $0x150] sm:$0xff]
    %v127 = vld [vmem:[#allocation9 + $0x158] sm:$0xff]
    %v128 = vld [vmem:[#allocation9 + $0x160] sm:$0xff]
    %v129 = vld [vmem:[#allocation9 + $0x168] sm:$0xff]
    %v130 = vld [vmem:[#allocation9 + $0x170] sm:$0xff]
    %v131 = vld [vmem:[#allocation9 + $0x178] sm:$0xff]
    %v132 = vld [vmem:[#allocation9 + $0x180] sm:$0xff]
    %v133 = vld [vmem:[#allocation9 + $0x188] sm:$0xff]
    %v134 = vld [vmem:[#allocation9 + $0x190] sm:$0xff]
    %v135 = vld [vmem:[#allocation9 + $0x198] sm:$0xff]
    %v136 = vld [vmem:[#allocation9 + $0x1a0] sm:$0xff]
    %v137 = vld [vmem:[#allocation9 + $0x1a8] sm:$0xff]
    %v138 = vld [vmem:[#allocation9 + $0x1b0] sm:$0xff]
    %v139 = vld [vmem:[#allocation9 + $0x1b8] sm:$0xff]
    %v140 = vld [vmem:[#allocation9 + $0x1c0] sm:$0xff]
    %v141 = vld [vmem:[#allocation9 + $0x1c8] sm:$0xff]
    %v142 = vld [vmem:[#allocation9 + $0x1d0] sm:$0xff]
    %v143 = vld [vmem:[#allocation9 + $0x1d8] sm:$0xff]
    %v144 = vld [vmem:[#allocation9 + $0x1e0] sm:$0xff]
    %v145 = vld [vmem:[#allocation9 + $0x1e8] sm:$0xff]
    %v146 = vld [vmem:[#allocation9 + $0x1f0] sm:$0xff]
    %v147 = vld [vmem:[#allocation9 + $0x1f8] sm:$0xff]
    %v148 = vld [vmem:[%s3] sm:$0xf]
    %v150 = vlaneseq
    %v151 = vshrl.u32 %v150, 7
    %v152 = vsub.s32 0, %v151
    %v153 = vrot.slane %v148, %v152
    %v154 = vlaneseq
    %v155 = vshrl.u32 %v154, 7
    %v156 = vsub.s32 1, %v155
    %v157 = vrot.slane %v148, %v156
    %v158 = vlaneseq
    %v159 = vshrl.u32 %v158, 7
    %v160 = vsub.s32 2, %v159
    %v161 = vrot.slane %v148, %v160
    %v162 = vlaneseq
    %v163 = vshrl.u32 %v162, 7
    %v164 = vsub.s32 3, %v163
    %v165 = vrot.slane %v148, %v164
    %170 = vmatprep.subr.mxu0 %v145
    %171 = vmatpush1.msra.mxu0 %v144
    %172 = vmatprep.subr.mxu0 %v141
    %173 = vmatpush1.msra.mxu0 %v140
    %174 = vmatprep.subr.mxu0 %v137
    %175 = vmatpush1.msra.mxu0 %v136
    %176 = vmatprep.subr.mxu0 %v133
    %177 = vmatpush1.msra.mxu0 %v132
    %178 = vmatprep.subr.mxu0 %v129
    %179 = vmatpush1.msra.mxu0 %v128
    %180 = vmatprep.subr.mxu0 %v125
    %181 = vmatpush1.msra.mxu0 %v124
    %182 = vmatprep.subr.mxu0 %v121
    %183 = vmatpush1.msra.mxu0 %v120
    %184 = vmatprep.subr.mxu0 %v117
    %185 = vmatpush1.msra.mxu0 %v116
    %186 = vmatprep.subr.mxu0 %v113
    %187 = vmatpush1.msra.mxu0 %v112
    %188 = vmatprep.subr.mxu0 %v109
    %189 = vmatpush1.msra.mxu0 %v108
    %190 = vmatprep.subr.mxu0 %v105
    %191 = vmatpush1.msra.mxu0 %v104
    %192 = vmatprep.subr.mxu0 %v101
    %193 = vmatpush1.msra.mxu0 %v100
    %194 = vmatprep.subr.mxu0 %v97
    %195 = vmatpush1.msra.mxu0 %v96
    %196 = vmatprep.subr.mxu0 %v93
    %197 = vmatpush1.msra.mxu0 %v92
    %198 = vmatprep.subr.mxu0 %v89
    %199 = vmatpush1.msra.mxu0 %v88
    %200 = vmatprep.subr.mxu0 %v85
    %201 = vmatpush1.msra.mxu0 %v84
    %202 = vmatprep.subr.mxu0 0.0
    %203 = vmatpush2.msra.mxu0 0.0
    %204 = vmatprep.subr.mxu0 0.0
    %205 = vmatpush2.msra.mxu0 0.0
    %206 = vmatprep.subr.mxu0 0.0
    %207 = vmatpush2.msra.mxu0 0.0
    %208 = vmatprep.subr.mxu0 0.0
    %209 = vmatpush2.msra.mxu0 0.0
    %210 = vmatprep.subr.mxu0 0.0
    %211 = vmatpush2.msra.mxu0 0.0
    %212 = vmatprep.subr.mxu0 0.0
    %213 = vmatpush2.msra.mxu0 0.0
    %214 = vmatprep.subr.mxu0 0.0
    %215 = vmatpush2.msra.mxu0 0.0
    %216 = vmatprep.subr.mxu0 0.0
    %217 = vmatpush2.msra.mxu0 0.0
    %218 = vmatprep.subr.mxu0 0.0
    %219 = vmatpush2.msra.mxu0 0.0
    %220 = vmatprep.subr.mxu0 0.0
    %221 = vmatpush2.msra.mxu0 0.0
    %222 = vmatprep.subr.mxu0 0.0
    %223 = vmatpush2.msra.mxu0 0.0
    %224 = vmatprep.subr.mxu0 0.0
    %225 = vmatpush2.msra.mxu0 0.0
    %226 = vmatprep.subr.mxu0 0.0
    %227 = vmatpush2.msra.mxu0 0.0
    %228 = vmatprep.subr.mxu0 0.0
    %229 = vmatpush2.msra.mxu0 0.0
    %230 = vmatprep.subr.mxu0 0.0
    %231 = vmatpush2.msra.mxu0 0.0
    %232 = vmatprep.subr.mxu0 0.0
    %233 = vmatpush2.msra.mxu0 0.0
    %234 = vmatprep.mubr.f32.mxu0 0.0
    %235 = vmatmul.mubr.f32.gmra.mxu0 %v83
    %v236 = vpop.f32.mrf.mxu0
    %v237 = vadd.f32 %v153, %v236
    %v238 = vpop.f32.mrf.mxu0
    %v239 = vadd.f32 %v157, %v238
    %240 = vdwg.mxu0
    %241 = vmatprep.subr.mxu0 %v147
    %242 = vmatpush1.msra.mxu0 %v146
    %243 = vmatprep.subr.mxu0 %v143
    %244 = vmatpush1.msra.mxu0 %v142
    %245 = vmatprep.subr.mxu0 %v139
    %246 = vmatpush1.msra.mxu0 %v138
    %247 = vmatprep.subr.mxu0 %v135
    %248 = vmatpush1.msra.mxu0 %v134
    %249 = vmatprep.subr.mxu0 %v131
    %250 = vmatpush1.msra.mxu0 %v130
    %251 = vmatprep.subr.mxu0 %v127
    %252 = vmatpush1.msra.mxu0 %v126
    %253 = vmatprep.subr.mxu0 %v123
    %254 = vmatpush1.msra.mxu0 %v122
    %255 = vmatprep.subr.mxu0 %v119
    %256 = vmatpush1.msra.mxu0 %v118
    %257 = vmatprep.subr.mxu0 %v115
    %258 = vmatpush1.msra.mxu0 %v114
    %259 = vmatprep.subr.mxu0 %v111
    %260 = vmatpush1.msra.mxu0 %v110
    %261 = vmatprep.subr.mxu0 %v107
    %262 = vmatpush1.msra.mxu0 %v106
    %263 = vmatprep.subr.mxu0 %v103
    %264 = vmatpush1.msra.mxu0 %v102
    %265 = vmatprep.subr.mxu0 %v99
    %266 = vmatpush1.msra.mxu0 %v98
    %267 = vmatprep.subr.mxu0 %v95
    %268 = vmatpush1.msra.mxu0 %v94
    %269 = vmatprep.subr.mxu0 %v91
    %270 = vmatpush1.msra.mxu0 %v90
    %271 = vmatprep.subr.mxu0 %v87
    %272 = vmatpush1.msra.mxu0 %v86
    %273 = vmatprep.subr.mxu0 0.0
    %274 = vmatpush2.msra.mxu0 0.0
    %275 = vmatprep.subr.mxu0 0.0
    %276 = vmatpush2.msra.mxu0 0.0
    %277 = vmatprep.subr.mxu0 0.0
    %278 = vmatpush2.msra.mxu0 0.0
    %279 = vmatprep.subr.mxu0 0.0
    %280 = vmatpush2.msra.mxu0 0.0
    %281 = vmatprep.subr.mxu0 0.0
    %282 = vmatpush2.msra.mxu0 0.0
    %283 = vmatprep.subr.mxu0 0.0
    %284 = vmatpush2.msra.mxu0 0.0
    %285 = vmatprep.subr.mxu0 0.0
    %286 = vmatpush2.msra.mxu0 0.0
    %287 = vmatprep.subr.mxu0 0.0
    %288 = vmatpush2.msra.mxu0 0.0
    %289 = vmatprep.subr.mxu0 0.0
    %290 = vmatpush2.msra.mxu0 0.0
    %291 = vmatprep.subr.mxu0 0.0
    %292 = vmatpush2.msra.mxu0 0.0
    %293 = vmatprep.subr.mxu0 0.0
    %294 = vmatpush2.msra.mxu0 0.0
    %295 = vmatprep.subr.mxu0 0.0
    %296 = vmatpush2.msra.mxu0 0.0
    %297 = vmatprep.subr.mxu0 0.0
    %298 = vmatpush2.msra.mxu0 0.0
    %299 = vmatprep.subr.mxu0 0.0
    %300 = vmatpush2.msra.mxu0 0.0
    %301 = vmatprep.subr.mxu0 0.0
    %302 = vmatpush2.msra.mxu0 0.0
    %303 = vmatprep.subr.mxu0 0.0
    %304 = vmatpush2.msra.mxu0 0.0
    %305 = vmatprep.mubr.f32.mxu0 0.0
    %306 = vmatmul.mubr.f32.gmra.mxu0 %v83
    %v307 = vpop.f32.mrf.mxu0
    %v308 = vadd.f32 %v161, %v307
    %v309 = vpop.f32.mrf.mxu0
    %v310 = vadd.f32 %v165, %v309
    %311 = vdwg.mxu0
    %312 = vst [vmem:[#allocation2] sm:$0xff] %v237
    %313 = vst [vmem:[#allocation2 + $0x8] sm:$0xff] %v239
    %314 = vst [vmem:[#allocation2 + $0x10] sm:$0xff] %v308
    %315 = vst [vmem:[#allocation2 + $0x18] sm:$0xff] %v310
    %316 = vst [vmem:[#allocation3] sm:$0x1] 0.0
    %317 = vst [vmem:[#allocation4] sm:$0x1] 0.0
    %v318 = vld [vmem:[#allocation2] ss:$8 sm:$0xf]
    %v319 = vld [vmem:[#allocation3] sm:$0x1]
    %v320 = vld [vmem:[#allocation11] sm:$0xff]
    %v321 = vld [vmem:[#allocation11 + $0x8] sm:$0xff]
    %v322 = vld [vmem:[#allocation11 + $0x10] sm:$0xff]
    %v323 = vld [vmem:[#allocation11 + $0x18] sm:$0xff]
    %v324 = vld [vmem:[#allocation11 + $0x20] sm:$0xff]
    %v325 = vld [vmem:[#allocation11 + $0x28] sm:$0xff]
    %v326 = vld [vmem:[#allocation11 + $0x30] sm:$0xff]
    %v327 = vld [vmem:[#allocation11 + $0x38] sm:$0xff]
    %v328 = vld [vmem:[#allocation11 + $0x40] sm:$0xff]
    %v329 = vld [vmem:[#allocation11 + $0x48] sm:$0xff]
    %v330 = vld [vmem:[#allocation11 + $0x50] sm:$0xff]
    %v331 = vld [vmem:[#allocation11 + $0x58] sm:$0xff]
    %v332 = vld [vmem:[#allocation11 + $0x60] sm:$0xff]
    %v333 = vld [vmem:[#allocation11 + $0x68] sm:$0xff]
    %v334 = vld [vmem:[#allocation11 + $0x70] sm:$0xff]
    %v335 = vld [vmem:[#allocation11 + $0x78] sm:$0xff]
    %v336 = vld [vmem:[#allocation11 + $0x80] sm:$0xff]
    %v337 = vld [vmem:[#allocation11 + $0x88] sm:$0xff]
    %v338 = vld [vmem:[#allocation11 + $0x90] sm:$0xff]
    %v339 = vld [vmem:[#allocation11 + $0x98] sm:$0xff]
    %v340 = vld [vmem:[#allocation11 + $0xa0] sm:$0xff]
    %v341 = vld [vmem:[#allocation11 + $0xa8] sm:$0xff]
    %v342 = vld [vmem:[#allocation11 + $0xb0] sm:$0xff]
    %v343 = vld [vmem:[#allocation11 + $0xb8] sm:$0xff]
    %v344 = vld [vmem:[#allocation11 + $0xc0] sm:$0xff]
    %v345 = vld [vmem:[#allocation11 + $0xc8] sm:$0xff]
    %v346 = vld [vmem:[#allocation11 + $0xd0] sm:$0xff]
    %v347 = vld [vmem:[#allocation11 + $0xd8] sm:$0xff]
    %v348 = vld [vmem:[#allocation11 + $0xe0] sm:$0xff]
    %v349 = vld [vmem:[#allocation11 + $0xe8] sm:$0xff]
    %v350 = vld [vmem:[#allocation11 + $0xf0] sm:$0xff]
    %v351 = vld [vmem:[#allocation11 + $0xf8] sm:$0xff]
    %v352 = vld [vmem:[#allocation11 + $0x100] sm:$0xff]
    %v353 = vld [vmem:[#allocation11 + $0x108] sm:$0xff]
    %v354 = vld [vmem:[#allocation11 + $0x110] sm:$0xff]
    %v355 = vld [vmem:[#allocation11 + $0x118] sm:$0xff]
    %v356 = vld [vmem:[#allocation11 + $0x120] sm:$0xff]
    %v357 = vld [vmem:[#allocation11 + $0x128] sm:$0xff]
    %v358 = vld [vmem:[#allocation11 + $0x130] sm:$0xff]
    %v359 = vld [vmem:[#allocation11 + $0x138] sm:$0xff]
    %v360 = vld [vmem:[#allocation11 + $0x140] sm:$0xff]
    %v361 = vld [vmem:[#allocation11 + $0x148] sm:$0xff]
    %v362 = vld [vmem:[#allocation11 + $0x150] sm:$0xff]
    %v363 = vld [vmem:[#allocation11 + $0x158] sm:$0xff]
    %v364 = vld [vmem:[#allocation11 + $0x160] sm:$0xff]
    %v365 = vld [vmem:[#allocation11 + $0x168] sm:$0xff]
    %v366 = vld [vmem:[#allocation11 + $0x170] sm:$0xff]
    %v367 = vld [vmem:[#allocation11 + $0x178] sm:$0xff]
    %v368 = vld [vmem:[#allocation11 + $0x180] sm:$0xff]
    %v369 = vld [vmem:[#allocation11 + $0x188] sm:$0xff]
    %v370 = vld [vmem:[#allocation11 + $0x190] sm:$0xff]
    %v371 = vld [vmem:[#allocation11 + $0x198] sm:$0xff]
    %v372 = vld [vmem:[#allocation11 + $0x1a0] sm:$0xff]
    %v373 = vld [vmem:[#allocation11 + $0x1a8] sm:$0xff]
    %v374 = vld [vmem:[#allocation11 + $0x1b0] sm:$0xff]
    %v375 = vld [vmem:[#allocation11 + $0x1b8] sm:$0xff]
    %v376 = vld [vmem:[#allocation11 + $0x1c0] sm:$0xff]
    %v377 = vld [vmem:[#allocation11 + $0x1c8] sm:$0xff]
    %v378 = vld [vmem:[#allocation11 + $0x1d0] sm:$0xff]
    %v379 = vld [vmem:[#allocation11 + $0x1d8] sm:$0xff]
    %v380 = vld [vmem:[#allocation11 + $0x1e0] sm:$0xff]
    %v381 = vld [vmem:[#allocation11 + $0x1e8] sm:$0xff]
    %v382 = vld [vmem:[#allocation11 + $0x1f0] sm:$0xff]
    %v383 = vld [vmem:[#allocation11 + $0x1f8] sm:$0xff]
    %384 = vmatprep.subr.mxu0 %v381
    %385 = vmatpush1.msra.mxu0 %v380
    %386 = vmatprep.subr.mxu0 %v377
    %387 = vmatpush1.msra.mxu0 %v376
    %388 = vmatprep.subr.mxu0 %v373
    %389 = vmatpush1.msra.mxu0 %v372
    %390 = vmatprep.subr.mxu0 %v369
    %391 = vmatpush1.msra.mxu0 %v368
    %392 = vmatprep.subr.mxu0 %v365
    %393 = vmatpush1.msra.mxu0 %v364
    %394 = vmatprep.subr.mxu0 %v361
    %395 = vmatpush1.msra.mxu0 %v360
    %396 = vmatprep.subr.mxu0 %v357
    %397 = vmatpush1.msra.mxu0 %v356
    %398 = vmatprep.subr.mxu0 %v353
    %399 = vmatpush1.msra.mxu0 %v352
    %400 = vmatprep.subr.mxu0 %v349
    %401 = vmatpush1.msra.mxu0 %v348
    %402 = vmatprep.subr.mxu0 %v345
    %403 = vmatpush1.msra.mxu0 %v344
    %404 = vmatprep.subr.mxu0 %v341
    %405 = vmatpush1.msra.mxu0 %v340
    %406 = vmatprep.subr.mxu0 %v337
    %407 = vmatpush1.msra.mxu0 %v336
    %408 = vmatprep.subr.mxu0 %v333
    %409 = vmatpush1.msra.mxu0 %v332
    %410 = vmatprep.subr.mxu0 %v329
    %411 = vmatpush1.msra.mxu0 %v328
    %412 = vmatprep.subr.mxu0 %v325
    %413 = vmatpush1.msra.mxu0 %v324
    %414 = vmatprep.subr.mxu0 %v321
    %415 = vmatpush1.msra.mxu0 %v320
    %416 = vmatprep.subr.mxu0 0.0
    %417 = vmatpush2.msra.mxu0 0.0
    %418 = vmatprep.subr.mxu0 0.0
    %419 = vmatpush2.msra.mxu0 0.0
    %420 = vmatprep.subr.mxu0 0.0
    %421 = vmatpush2.msra.mxu0 0.0
    %422 = vmatprep.subr.mxu0 0.0
    %423 = vmatpush2.msra.mxu0 0.0
    %424 = vmatprep.subr.mxu0 0.0
    %425 = vmatpush2.msra.mxu0 0.0
    %426 = vmatprep.subr.mxu0 0.0
    %427 = vmatpush2.msra.mxu0 0.0
    %428 = vmatprep.subr.mxu0 0.0
    %429 = vmatpush2.msra.mxu0 0.0
    %430 = vmatprep.subr.mxu0 0.0
    %431 = vmatpush2.msra.mxu0 0.0
    %432 = vmatprep.subr.mxu0 0.0
    %433 = vmatpush2.msra.mxu0 0.0
    %434 = vmatprep.subr.mxu0 0.0
    %435 = vmatpush2.msra.mxu0 0.0
    %436 = vmatprep.subr.mxu0 0.0
    %437 = vmatpush2.msra.mxu0 0.0
    %438 = vmatprep.subr.mxu0 0.0
    %439 = vmatpush2.msra.mxu0 0.0
    %440 = vmatprep.subr.mxu0 0.0
    %441 = vmatpush2.msra.mxu0 0.0
    %442 = vmatprep.subr.mxu0 0.0
    %443 = vmatpush2.msra.mxu0 0.0
    %444 = vmatprep.subr.mxu0 0.0
    %445 = vmatpush2.msra.mxu0 0.0
    %446 = vmatprep.subr.mxu0 0.0
    %447 = vmatpush2.msra.mxu0 0.0
    %448 = vmatprep.mubr.f32.mxu0 0.0
    %449 = vmatmul.mubr.f32.gmra.mxu0 %v319
    %v450 = vpop.f32.mrf.mxu0
    %v451 = vadd.f32 0.0, %v450
    %v452 = vpop.f32.mrf.mxu0
    %v453 = vadd.f32 0.0, %v452
    %454 = vdwg.mxu0
    %455 = vmatprep.subr.mxu0 %v383
    %456 = vmatpush1.msra.mxu0 %v382
    %457 = vmatprep.subr.mxu0 %v379
    %458 = vmatpush1.msra.mxu0 %v378
    %459 = vmatprep.subr.mxu0 %v375
    %460 = vmatpush1.msra.mxu0 %v374
    %461 = vmatprep.subr.mxu0 %v371
    %462 = vmatpush1.msra.mxu0 %v370
    %463 = vmatprep.subr.mxu0 %v367
    %464 = vmatpush1.msra.mxu0 %v366
    %465 = vmatprep.subr.mxu0 %v363
    %466 = vmatpush1.msra.mxu0 %v362
    %467 = vmatprep.subr.mxu0 %v359
    %468 = vmatpush1.msra.mxu0 %v358
    %469 = vmatprep.subr.mxu0 %v355
    %470 = vmatpush1.msra.mxu0 %v354
    %471 = vmatprep.subr.mxu0 %v351
    %472 = vmatpush1.msra.mxu0 %v350
    %473 = vmatprep.subr.mxu0 %v347
    %474 = vmatpush1.msra.mxu0 %v346
    %475 = vmatprep.subr.mxu0 %v343
    %476 = vmatpush1.msra.mxu0 %v342
    %477 = vmatprep.subr.mxu0 %v339
    %478 = vmatpush1.msra.mxu0 %v338
    %479 = vmatprep.subr.mxu0 %v335
    %480 = vmatpush1.msra.mxu0 %v334
    %481 = vmatprep.subr.mxu0 %v331
    %482 = vmatpush1.msra.mxu0 %v330
    %483 = vmatprep.subr.mxu0 %v327
    %484 = vmatpush1.msra.mxu0 %v326
    %485 = vmatprep.subr.mxu0 %v323
    %486 = vmatpush1.msra.mxu0 %v322
    %487 = vmatprep.subr.mxu0 0.0
    %488 = vmatpush2.msra.mxu0 0.0
    %489 = vmatprep.subr.mxu0 0.0
    %490 = vmatpush2.msra.mxu0 0.0
    %491 = vmatprep.subr.mxu0 0.0
    %492 = vmatpush2.msra.mxu0 0.0
    %493 = vmatprep.subr.mxu0 0.0
    %494 = vmatpush2.msra.mxu0 0.0
    %495 = vmatprep.subr.mxu0 0.0
    %496 = vmatpush2.msra.mxu0 0.0
    %497 = vmatprep.subr.mxu0 0.0
    %498 = vmatpush2.msra.mxu0 0.0
    %499 = vmatprep.subr.mxu0 0.0
    %500 = vmatpush2.msra.mxu0 0.0
    %501 = vmatprep.subr.mxu0 0.0
    %502 = vmatpush2.msra.mxu0 0.0
    %503 = vmatprep.subr.mxu0 0.0
    %504 = vmatpush2.msra.mxu0 0.0
    %505 = vmatprep.subr.mxu0 0.0
    %506 = vmatpush2.msra.mxu0 0.0
    %507 = vmatprep.subr.mxu0 0.0
    %508 = vmatpush2.msra.mxu0 0.0
    %509 = vmatprep.subr.mxu0 0.0
    %510 = vmatpush2.msra.mxu0 0.0
    %511 = vmatprep.subr.mxu0 0.0
    %512 = vmatpush2.msra.mxu0 0.0
    %513 = vmatprep.subr.mxu0 0.0
    %514 = vmatpush2.msra.mxu0 0.0
    %515 = vmatprep.subr.mxu0 0.0
    %516 = vmatpush2.msra.mxu0 0.0
    %517 = vmatprep.subr.mxu0 0.0
    %518 = vmatpush2.msra.mxu0 0.0
    %519 = vmatprep.mubr.f32.mxu0 0.0
    %520 = vmatmul.mubr.f32.gmra.mxu0 %v319
    %v521 = vpop.f32.mrf.mxu0
    %v522 = vadd.f32 0.0, %v521
    %v523 = vpop.f32.mrf.mxu0
    %v524 = vadd.f32 0.0, %v523
    %525 = vdwg.mxu0
    %v530 = vcombine.low %v451, %v453
    %v531 = vcombine.low %v522, %v524
    %v533 = vunpack.c.l.s4 1966171168
    %v534 = vunpack.c.0.s8 %v533
    %v535 = vlaneseq
    %v536 = vshrl.u32 %v535, 7
    %v537 = vsub.s32 %v534, %v536
    %v538 = vrot.slane %v530, %v537
    %v540 = vunpack.c.l.s4 1966171168
    %v541 = vunpack.c.0.s8 %v540
    %v542 = vlaneseq
    %v543 = vshrl.u32 %v542, 7
    %v544 = vsub.s32 %v541, %v543
    %v545 = vrot.slane %v531, %v544
    %v546 = vcombine.low %v538, %v545
    %v548 = vunpack.c.l.s4 1966171168
    %v549 = vunpack.c.0.s8 %v548
    %v550 = vlaneseq
    %v551 = vshrl.u32 %v550, 7
    %v552 = vsub.s32 %v549, %v551
    %v553 = vrot.slane %v546, %v552
    %v555 = vadd.f32 %v318, %v553
    %v556 = vxor.u32 %v555, 2147483648
    %v557 = vmul.f32 %v556, 1.442695
    %v558 = vpow.pop %v557
    %v559 = vadd.f32 %v558, 1.0
    %v560 = vrcp.pop %v559
    %v561 = vmul.f32 1.0, %v560
    %v563 = vrot.slane %v555, 1
    %v565 = vxor.u32 %v563, 2147483648
    %v566 = vmul.f32 %v565, 1.442695
    %v567 = vpow.pop %v566
    %v568 = vadd.f32 %v567, 1.0
    %v569 = vrcp.pop %v568
    %v570 = vmul.f32 1.0, %v569
    %v571 = vrot.slane %v555, 2
    %v573 = vtanh.pop %v571
    %v574 = vrot.slane %v555, 3
    %v576 = vxor.u32 %v574, 2147483648
    %v577 = vmul.f32 %v576, 1.442695
    %v578 = vpow.pop %v577
    %v579 = vadd.f32 %v578, 1.0
    %v580 = vrcp.pop %v579
    %v581 = vmul.f32 1.0, %v580
    %v582 = vld [vmem:[#allocation4] sm:$0x1]
    %v583 = vmul.f32 %v570, %v582
    %v584 = vmul.f32 %v561, %v573
    %v585 = vadd.f32 %v583, %v584
    %v586 = vtanh.pop %v585
    %v587 = vmul.f32 %v581, %v586
    %588 = vst [vmem:[#allocation4] sm:$0x1] %v585
    %589 = vst [vmem:[#allocation3] sm:$0x1] %v587
    %590 = vst [vmem:[#allocation5] sm:$0x1] %v587
    %s591 = scalar_lea.vmem [#allocation2], 1
    %v592 = vld [vmem:[%s591] ss:$8 sm:$0xf]
    %v593 = vld [vmem:[#allocation3] sm:$0x1]
    %v594 = vld [vmem:[#allocation11] sm:$0xff]
    %v595 = vld [vmem:[#allocation11 + $0x8] sm:$0xff]
    %v596 = vld [vmem:[#allocation11 + $0x10] sm:$0xff]
    %v597 = vld [vmem:[#allocation11 + $0x18] sm:$0xff]
    %v598 = vld [vmem:[#allocation11 + $0x20] sm:$0xff]
    %v599 = vld [vmem:[#allocation11 + $0x28] sm:$0xff]
    %v600 = vld [vmem:[#allocation11 + $0x30] sm:$0xff]
    %v601 = vld [vmem:[#allocation11 + $0x38] sm:$0xff]
    %v602 = vld [vmem:[#allocation11 + $0x40] sm:$0xff]
    %v603 = vld [vmem:[#allocation11 + $0x48] sm:$0xff]
    %v604 = vld [vmem:[#allocation11 + $0x50] sm:$0xff]
    %v605 = vld [vmem:[#allocation11 + $0x58] sm:$0xff]
    %v606 = vld [vmem:[#allocation11 + $0x60] sm:$0xff]
    %v607 = vld [vmem:[#allocation11 + $0x68] sm:$0xff]
    %v608 = vld [vmem:[#allocation11 + $0x70] sm:$0xff]
    %v609 = vld [vmem:[#allocation11 + $0x78] sm:$0xff]
    %v610 = vld [vmem:[#allocation11 + $0x80] sm:$0xff]
    %v611 = vld [vmem:[#allocation11 + $0x88] sm:$0xff]
    %v612 = vld [vmem:[#allocation11 + $0x90] sm:$0xff]
    %v613 = vld [vmem:[#allocation11 + $0x98] sm:$0xff]
    %v614 = vld [vmem:[#allocation11 + $0xa0] sm:$0xff]
    %v615 = vld [vmem:[#allocation11 + $0xa8] sm:$0xff]
    %v616 = vld [vmem:[#allocation11 + $0xb0] sm:$0xff]
    %v617 = vld [vmem:[#allocation11 + $0xb8] sm:$0xff]
    %v618 = vld [vmem:[#allocation11 + $0xc0] sm:$0xff]
    %v619 = vld [vmem:[#allocation11 + $0xc8] sm:$0xff]
    %v620 = vld [vmem:[#allocation11 + $0xd0] sm:$0xff]
    %v621 = vld [vmem:[#allocation11 + $0xd8] sm:$0xff]
    %v622 = vld [vmem:[#allocation11 + $0xe0] sm:$0xff]
    %v623 = vld [vmem:[#allocation11 + $0xe8] sm:$0xff]
    %v624 = vld [vmem:[#allocation11 + $0xf0] sm:$0xff]
    %v625 = vld [vmem:[#allocation11 + $0xf8] sm:$0xff]
    %v626 = vld [vmem:[#allocation11 + $0x100] sm:$0xff]
    %v627 = vld [vmem:[#allocation11 + $0x108] sm:$0xff]
    %v628 = vld [vmem:[#allocation11 + $0x110] sm:$0xff]
    %v629 = vld [vmem:[#allocation11 + $0x118] sm:$0xff]
    %v630 = vld [vmem:[#allocation11 + $0x120] sm:$0xff]
    %v631 = vld [vmem:[#allocation11 + $0x128] sm:$0xff]
    %v632 = vld [vmem:[#allocation11 + $0x130] sm:$0xff]
    %v633 = vld [vmem:[#allocation11 + $0x138] sm:$0xff]
    %v634 = vld [vmem:[#allocation11 + $0x140] sm:$0xff]
    %v635 = vld [vmem:[#allocation11 + $0x148] sm:$0xff]
    %v636 = vld [vmem:[#allocation11 + $0x150] sm:$0xff]
    %v637 = vld [vmem:[#allocation11 + $0x158] sm:$0xff]
    %v638 = vld [vmem:[#allocation11 + $0x160] sm:$0xff]
    %v639 = vld [vmem:[#allocation11 + $0x168] sm:$0xff]
    %v640 = vld [vmem:[#allocation11 + $0x170] sm:$0xff]
    %v641 = vld [vmem:[#allocation11 + $0x178] sm:$0xff]
    %v642 = vld [vmem:[#allocation11 + $0x180] sm:$0xff]
    %v643 = vld [vmem:[#allocation11 + $0x188] sm:$0xff]
    %v644 = vld [vmem:[#allocation11 + $0x190] sm:$0xff]
    %v645 = vld [vmem:[#allocation11 + $0x198] sm:$0xff]
    %v646 = vld [vmem:[#allocation11 + $0x1a0] sm:$0xff]
    %v647 = vld [vmem:[#allocation11 + $0x1a8] sm:$0xff]
    %v648 = vld [vmem:[#allocation11 + $0x1b0] sm:$0xff]
    %v649 = vld [vmem:[#allocation11 + $0x1b8] sm:$0xff]
    %v650 = vld [vmem:[#allocation11 + $0x1c0] sm:$0xff]
    %v651 = vld [vmem:[#allocation11 + $0x1c8] sm:$0xff]
    %v652 = vld [vmem:[#allocation11 + $0x1d0] sm:$0xff]
    %v653 = vld [vmem:[#allocation11 + $0x1d8] sm:$0xff]
    %v654 = vld [vmem:[#allocation11 + $0x1e0] sm:$0xff]
    %v655 = vld [vmem:[#allocation11 + $0x1e8] sm:$0xff]
    %v656 = vld [vmem:[#allocation11 + $0x1f0] sm:$0xff]
    %v657 = vld [vmem:[#allocation11 + $0x1f8] sm:$0xff]
    %658 = vmatprep.subr.mxu0 %v655
    %659 = vmatpush1.msra.mxu0 %v654
    %660 = vmatprep.subr.mxu0 %v651
    %661 = vmatpush1.msra.mxu0 %v650
    %662 = vmatprep.subr.mxu0 %v647
    %663 = vmatpush1.msra.mxu0 %v646
    %664 = vmatprep.subr.mxu0 %v643
    %665 = vmatpush1.msra.mxu0 %v642
    %666 = vmatprep.subr.mxu0 %v639
    %667 = vmatpush1.msra.mxu0 %v638
    %668 = vmatprep.subr.mxu0 %v635
    %669 = vmatpush1.msra.mxu0 %v634
    %670 = vmatprep.subr.mxu0 %v631
    %671 = vmatpush1.msra.mxu0 %v630
    %672 = vmatprep.subr.mxu0 %v627
    %673 = vmatpush1.msra.mxu0 %v626
    %674 = vmatprep.subr.mxu0 %v623
    %675 = vmatpush1.msra.mxu0 %v622
    %676 = vmatprep.subr.mxu0 %v619
    %677 = vmatpush1.msra.mxu0 %v618
    %678 = vmatprep.subr.mxu0 %v615
    %679 = vmatpush1.msra.mxu0 %v614
    %680 = vmatprep.subr.mxu0 %v611
    %681 = vmatpush1.msra.mxu0 %v610
    %682 = vmatprep.subr.mxu0 %v607
    %683 = vmatpush1.msra.mxu0 %v606
    %684 = vmatprep.subr.mxu0 %v603
    %685 = vmatpush1.msra.mxu0 %v602
    %686 = vmatprep.subr.mxu0 %v599
    %687 = vmatpush1.msra.mxu0 %v598
    %688 = vmatprep.subr.mxu0 %v595
    %689 = vmatpush1.msra.mxu0 %v594
    %690 = vmatprep.subr.mxu0 0.0
    %691 = vmatpush2.msra.mxu0 0.0
    %692 = vmatprep.subr.mxu0 0.0
    %693 = vmatpush2.msra.mxu0 0.0
    %694 = vmatprep.subr.mxu0 0.0
    %695 = vmatpush2.msra.mxu0 0.0
    %696 = vmatprep.subr.mxu0 0.0
    %697 = vmatpush2.msra.mxu0 0.0
    %698 = vmatprep.subr.mxu0 0.0
    %699 = vmatpush2.msra.mxu0 0.0
    %700 = vmatprep.subr.mxu0 0.0
    %701 = vmatpush2.msra.mxu0 0.0
    %702 = vmatprep.subr.mxu0 0.0
    %703 = vmatpush2.msra.mxu0 0.0
    %704 = vmatprep.subr.mxu0 0.0
    %705 = vmatpush2.msra.mxu0 0.0
    %706 = vmatprep.subr.mxu0 0.0
    %707 = vmatpush2.msra.mxu0 0.0
    %708 = vmatprep.subr.mxu0 0.0
    %709 = vmatpush2.msra.mxu0 0.0
    %710 = vmatprep.subr.mxu0 0.0
    %711 = vmatpush2.msra.mxu0 0.0
    %712 = vmatprep.subr.mxu0 0.0
    %713 = vmatpush2.msra.mxu0 0.0
    %714 = vmatprep.subr.mxu0 0.0
    %715 = vmatpush2.msra.mxu0 0.0
    %716 = vmatprep.subr.mxu0 0.0
    %717 = vmatpush2.msra.mxu0 0.0
    %718 = vmatprep.subr.mxu0 0.0
    %719 = vmatpush2.msra.mxu0 0.0
    %720 = vmatprep.subr.mxu0 0.0
    %721 = vmatpush2.msra.mxu0 0.0
    %722 = vmatprep.mubr.f32.mxu0 0.0
    %723 = vmatmul.mubr.f32.gmra.mxu0 %v593
    %v724 = vpop.f32.mrf.mxu0
    %v725 = vadd.f32 0.0, %v724
    %v726 = vpop.f32.mrf.mxu0
    %v727 = vadd.f32 0.0, %v726
    %728 = vdwg.mxu0
    %729 = vmatprep.subr.mxu0 %v657
    %730 = vmatpush1.msra.mxu0 %v656
    %731 = vmatprep.subr.mxu0 %v653
    %732 = vmatpush1.msra.mxu0 %v652
    %733 = vmatprep.subr.mxu0 %v649
    %734 = vmatpush1.msra.mxu0 %v648
    %735 = vmatprep.subr.mxu0 %v645
    %736 = vmatpush1.msra.mxu0 %v644
    %737 = vmatprep.subr.mxu0 %v641
    %738 = vmatpush1.msra.mxu0 %v640
    %739 = vmatprep.subr.mxu0 %v637
    %740 = vmatpush1.msra.mxu0 %v636
    %741 = vmatprep.subr.mxu0 %v633
    %742 = vmatpush1.msra.mxu0 %v632
    %743 = vmatprep.subr.mxu0 %v629
    %744 = vmatpush1.msra.mxu0 %v628
    %745 = vmatprep.subr.mxu0 %v625
    %746 = vmatpush1.msra.mxu0 %v624
    %747 = vmatprep.subr.mxu0 %v621
    %748 = vmatpush1.msra.mxu0 %v620
    %749 = vmatprep.subr.mxu0 %v617
    %750 = vmatpush1.msra.mxu0 %v616
    %751 = vmatprep.subr.mxu0 %v613
    %752 = vmatpush1.msra.mxu0 %v612
    %753 = vmatprep.subr.mxu0 %v609
    %754 = vmatpush1.msra.mxu0 %v608
    %755 = vmatprep.subr.mxu0 %v605
    %756 = vmatpush1.msra.mxu0 %v604
    %757 = vmatprep.subr.mxu0 %v601
    %758 = vmatpush1.msra.mxu0 %v600
    %759 = vmatprep.subr.mxu0 %v597
    %760 = vmatpush1.msra.mxu0 %v596
    %761 = vmatprep.subr.mxu0 0.0
    %762 = vmatpush2.msra.mxu0 0.0
    %763 = vmatprep.subr.mxu0 0.0
    %764 = vmatpush2.msra.mxu0 0.0
    %765 = vmatprep.subr.mxu0 0.0
    %766 = vmatpush2.msra.mxu0 0.0
    %767 = vmatprep.subr.mxu0 0.0
    %768 = vmatpush2.msra.mxu0 0.0
    %769 = vmatprep.subr.mxu0 0.0
    %770 = vmatpush2.msra.mxu0 0.0
    %771 = vmatprep.subr.mxu0 0.0
    %772 = vmatpush2.msra.mxu0 0.0
    %773 = vmatprep.subr.mxu0 0.0
    %774 = vmatpush2.msra.mxu0 0.0
    %775 = vmatprep.subr.mxu0 0.0
    %776 = vmatpush2.msra.mxu0 0.0
    %777 = vmatprep.subr.mxu0 0.0
    %778 = vmatpush2.msra.mxu0 0.0
    %779 = vmatprep.subr.mxu0 0.0
    %780 = vmatpush2.msra.mxu0 0.0
    %781 = vmatprep.subr.mxu0 0.0
    %782 = vmatpush2.msra.mxu0 0.0
    %783 = vmatprep.subr.mxu0 0.0
    %784 = vmatpush2.msra.mxu0 0.0
    %785 = vmatprep.subr.mxu0 0.0
    %786 = vmatpush2.msra.mxu0 0.0
    %787 = vmatprep.subr.mxu0 0.0
    %788 = vmatpush2.msra.mxu0 0.0
    %789 = vmatprep.subr.mxu0 0.0
    %790 = vmatpush2.msra.mxu0 0.0
    %791 = vmatprep.subr.mxu0 0.0
    %792 = vmatpush2.msra.mxu0 0.0
    %793 = vmatprep.mubr.f32.mxu0 0.0
    %794 = vmatmul.mubr.f32.gmra.mxu0 %v593
    %v795 = vpop.f32.mrf.mxu0
    %v796 = vadd.f32 0.0, %v795
    %v797 = vpop.f32.mrf.mxu0
    %v798 = vadd.f32 0.0, %v797
    %799 = vdwg.mxu0
    %v804 = vcombine.low %v725, %v727
    %v805 = vcombine.low %v796, %v798
    %v807 = vunpack.c.l.s4 1966171168
    %v808 = vunpack.c.0.s8 %v807
    %v809 = vlaneseq
    %v810 = vshrl.u32 %v809, 7
    %v811 = vsub.s32 %v808, %v810
    %v812 = vrot.slane %v804, %v811
    %v814 = vunpack.c.l.s4 1966171168
    %v815 = vunpack.c.0.s8 %v814
    %v816 = vlaneseq
    %v817 = vshrl.u32 %v816, 7
    %v818 = vsub.s32 %v815, %v817
    %v819 = vrot.slane %v805, %v818
    %v820 = vcombine.low %v812, %v819
    %v822 = vunpack.c.l.s4 1966171168
    %v823 = vunpack.c.0.s8 %v822
    %v824 = vlaneseq
    %v825 = vshrl.u32 %v824, 7
    %v826 = vsub.s32 %v823, %v825
    %v827 = vrot.slane %v820, %v826
    %v829 = vadd.f32 %v592, %v827
    %v830 = vxor.u32 %v829, 2147483648
    %v831 = vmul.f32 %v830, 1.442695
    %v832 = vpow.pop %v831
    %v833 = vadd.f32 %v832, 1.0
    %v834 = vrcp.pop %v833
    %v835 = vmul.f32 1.0, %v834
    %v837 = vrot.slane %v829, 1
    %v839 = vxor.u32 %v837, 2147483648
    %v840 = vmul.f32 %v839, 1.442695
    %v841 = vpow.pop %v840
    %v842 = vadd.f32 %v841, 1.0
    %v843 = vrcp.pop %v842
    %v844 = vmul.f32 1.0, %v843
    %v845 = vrot.slane %v829, 2
    %v847 = vtanh.pop %v845
    %v848 = vrot.slane %v829, 3
    %v850 = vxor.u32 %v848, 2147483648
    %v851 = vmul.f32 %v850, 1.442695
    %v852 = vpow.pop %v851
    %v853 = vadd.f32 %v852, 1.0
    %v854 = vrcp.pop %v853
    %v855 = vmul.f32 1.0, %v854
    %v856 = vld [vmem:[#allocation4] sm:$0x1]
    %v857 = vmul.f32 %v844, %v856
    %v858 = vmul.f32 %v835, %v847
    %v859 = vadd.f32 %v857, %v858
    %v860 = vtanh.pop %v859
    %v861 = vmul.f32 %v855, %v860
    %862 = vst [vmem:[#allocation4] sm:$0x1] %v859
    %863 = vst [vmem:[#allocation3] sm:$0x1] %v861
    %864 = vst [vmem:[#allocation5 + $0x1] sm:$0x1] %v861
    %s865 = scalar_lea.vmem [#allocation2], 2
    %v866 = vld [vmem:[%s865] ss:$8 sm:$0xf]
    %v867 = vld [vmem:[#allocation3] sm:$0x1]
    %v868 = vld [vmem:[#allocation11] sm:$0xff]
    %v869 = vld [vmem:[#allocation11 + $0x8] sm:$0xff]
    %v870 = vld [vmem:[#allocation11 + $0x10] sm:$0xff]
    %v871 = vld [vmem:[#allocation11 + $0x18] sm:$0xff]
    %v872 = vld [vmem:[#allocation11 + $0x20] sm:$0xff]
    %v873 = vld [vmem:[#allocation11 + $0x28] sm:$0xff]
    %v874 = vld [vmem:[#allocation11 + $0x30] sm:$0xff]
    %v875 = vld [vmem:[#allocation11 + $0x38] sm:$0xff]
    %v876 = vld [vmem:[#allocation11 + $0x40] sm:$0xff]
    %v877 = vld [vmem:[#allocation11 + $0x48] sm:$0xff]
    %v878 = vld [vmem:[#allocation11 + $0x50] sm:$0xff]
    %v879 = vld [vmem:[#allocation11 + $0x58] sm:$0xff]
    %v880 = vld [vmem:[#allocation11 + $0x60] sm:$0xff]
    %v881 = vld [vmem:[#allocation11 + $0x68] sm:$0xff]
    %v882 = vld [vmem:[#allocation11 + $0x70] sm:$0xff]
    %v883 = vld [vmem:[#allocation11 + $0x78] sm:$0xff]
    %v884 = vld [vmem:[#allocation11 + $0x80] sm:$0xff]
    %v885 = vld [vmem:[#allocation11 + $0x88] sm:$0xff]
    %v886 = vld [vmem:[#allocation11 + $0x90] sm:$0xff]
    %v887 = vld [vmem:[#allocation11 + $0x98] sm:$0xff]
    %v888 = vld [vmem:[#allocation11 + $0xa0] sm:$0xff]
    %v889 = vld [vmem:[#allocation11 + $0xa8] sm:$0xff]
    %v890 = vld [vmem:[#allocation11 + $0xb0] sm:$0xff]
    %v891 = vld [vmem:[#allocation11 + $0xb8] sm:$0xff]
    %v892 = vld [vmem:[#allocation11 + $0xc0] sm:$0xff]
    %v893 = vld [vmem:[#allocation11 + $0xc8] sm:$0xff]
    %v894 = vld [vmem:[#allocation11 + $0xd0] sm:$0xff]
    %v895 = vld [vmem:[#allocation11 + $0xd8] sm:$0xff]
    %v896 = vld [vmem:[#allocation11 + $0xe0] sm:$0xff]
    %v897 = vld [vmem:[#allocation11 + $0xe8] sm:$0xff]
    %v898 = vld [vmem:[#allocation11 + $0xf0] sm:$0xff]
    %v899 = vld [vmem:[#allocation11 + $0xf8] sm:$0xff]
    %v900 = vld [vmem:[#allocation11 + $0x100] sm:$0xff]
    %v901 = vld [vmem:[#allocation11 + $0x108] sm:$0xff]
    %v902 = vld [vmem:[#allocation11 + $0x110] sm:$0xff]
    %v903 = vld [vmem:[#allocation11 + $0x118] sm:$0xff]
    %v904 = vld [vmem:[#allocation11 + $0x120] sm:$0xff]
    %v905 = vld [vmem:[#allocation11 + $0x128] sm:$0xff]
    %v906 = vld [vmem:[#allocation11 + $0x130] sm:$0xff]
    %v907 = vld [vmem:[#allocation11 + $0x138] sm:$0xff]
    %v908 = vld [vmem:[#allocation11 + $0x140] sm:$0xff]
    %v909 = vld [vmem:[#allocation11 + $0x148] sm:$0xff]
    %v910 = vld [vmem:[#allocation11 + $0x150] sm:$0xff]
    %v911 = vld [vmem:[#allocation11 + $0x158] sm:$0xff]
    %v912 = vld [vmem:[#allocation11 + $0x160] sm:$0xff]
    %v913 = vld [vmem:[#allocation11 + $0x168] sm:$0xff]
    %v914 = vld [vmem:[#allocation11 + $0x170] sm:$0xff]
    %v915 = vld [vmem:[#allocation11 + $0x178] sm:$0xff]
    %v916 = vld [vmem:[#allocation11 + $0x180] sm:$0xff]
    %v917 = vld [vmem:[#allocation11 + $0x188] sm:$0xff]
    %v918 = vld [vmem:[#allocation11 + $0x190] sm:$0xff]
    %v919 = vld [vmem:[#allocation11 + $0x198] sm:$0xff]
    %v920 = vld [vmem:[#allocation11 + $0x1a0] sm:$0xff]
    %v921 = vld [vmem:[#allocation11 + $0x1a8] sm:$0xff]
    %v922 = vld [vmem:[#allocation11 + $0x1b0] sm:$0xff]
    %v923 = vld [vmem:[#allocation11 + $0x1b8] sm:$0xff]
    %v924 = vld [vmem:[#allocation11 + $0x1c0] sm:$0xff]
    %v925 = vld [vmem:[#allocation11 + $0x1c8] sm:$0xff]
    %v926 = vld [vmem:[#allocation11 + $0x1d0] sm:$0xff]
    %v927 = vld [vmem:[#allocation11 + $0x1d8] sm:$0xff]
    %v928 = vld [vmem:[#allocation11 + $0x1e0] sm:$0xff]
    %v929 = vld [vmem:[#allocation11 + $0x1e8] sm:$0xff]
    %v930 = vld [vmem:[#allocation11 + $0x1f0] sm:$0xff]
    %v931 = vld [vmem:[#allocation11 + $0x1f8] sm:$0xff]
    %932 = vmatprep.subr.mxu0 %v929
    %933 = vmatpush1.msra.mxu0 %v928
    %934 = vmatprep.subr.mxu0 %v925
    %935 = vmatpush1.msra.mxu0 %v924
    %936 = vmatprep.subr.mxu0 %v921
    %937 = vmatpush1.msra.mxu0 %v920
    %938 = vmatprep.subr.mxu0 %v917
    %939 = vmatpush1.msra.mxu0 %v916
    %940 = vmatprep.subr.mxu0 %v913
    %941 = vmatpush1.msra.mxu0 %v912
    %942 = vmatprep.subr.mxu0 %v909
    %943 = vmatpush1.msra.mxu0 %v908
    %944 = vmatprep.subr.mxu0 %v905
    %945 = vmatpush1.msra.mxu0 %v904
    %946 = vmatprep.subr.mxu0 %v901
    %947 = vmatpush1.msra.mxu0 %v900
    %948 = vmatprep.subr.mxu0 %v897
    %949 = vmatpush1.msra.mxu0 %v896
    %950 = vmatprep.subr.mxu0 %v893
    %951 = vmatpush1.msra.mxu0 %v892
    %952 = vmatprep.subr.mxu0 %v889
    %953 = vmatpush1.msra.mxu0 %v888
    %954 = vmatprep.subr.mxu0 %v885
    %955 = vmatpush1.msra.mxu0 %v884
    %956 = vmatprep.subr.mxu0 %v881
    %957 = vmatpush1.msra.mxu0 %v880
    %958 = vmatprep.subr.mxu0 %v877
    %959 = vmatpush1.msra.mxu0 %v876
    %960 = vmatprep.subr.mxu0 %v873
    %961 = vmatpush1.msra.mxu0 %v872
    %962 = vmatprep.subr.mxu0 %v869
    %963 = vmatpush1.msra.mxu0 %v868
    %964 = vmatprep.subr.mxu0 0.0
    %965 = vmatpush2.msra.mxu0 0.0
    %966 = vmatprep.subr.mxu0 0.0
    %967 = vmatpush2.msra.mxu0 0.0
    %968 = vmatprep.subr.mxu0 0.0
    %969 = vmatpush2.msra.mxu0 0.0
    %970 = vmatprep.subr.mxu0 0.0
    %971 = vmatpush2.msra.mxu0 0.0
    %972 = vmatprep.subr.mxu0 0.0
    %973 = vmatpush2.msra.mxu0 0.0
    %974 = vmatprep.subr.mxu0 0.0
    %975 = vmatpush2.msra.mxu0 0.0
    %976 = vmatprep.subr.mxu0 0.0
    %977 = vmatpush2.msra.mxu0 0.0
    %978 = vmatprep.subr.mxu0 0.0
    %979 = vmatpush2.msra.mxu0 0.0
    %980 = vmatprep.subr.mxu0 0.0
    %981 = vmatpush2.msra.mxu0 0.0
    %982 = vmatprep.subr.mxu0 0.0
    %983 = vmatpush2.msra.mxu0 0.0
    %984 = vmatprep.subr.mxu0 0.0
    %985 = vmatpush2.msra.mxu0 0.0
    %986 = vmatprep.subr.mxu0 0.0
    %987 = vmatpush2.msra.mxu0 0.0
    %988 = vmatprep.subr.mxu0 0.0
    %989 = vmatpush2.msra.mxu0 0.0
    %990 = vmatprep.subr.mxu0 0.0
    %991 = vmatpush2.msra.mxu0 0.0
    %992 = vmatprep.subr.mxu0 0.0
    %993 = vmatpush2.msra.mxu0 0.0
    %994 = vmatprep.subr.mxu0 0.0
    %995 = vmatpush2.msra.mxu0 0.0
    %996 = vmatprep.mubr.f32.mxu0 0.0
    %997 = vmatmul.mubr.f32.gmra.mxu0 %v867
    %v998 = vpop.f32.mrf.mxu0
    %v999 = vadd.f32 0.0, %v998
    %v1000 = vpop.f32.mrf.mxu0
    %v1001 = vadd.f32 0.0, %v1000
    %1002 = vdwg.mxu0
    %1003 = vmatprep.subr.mxu0 %v931
    %1004 = vmatpush1.msra.mxu0 %v930
    %1005 = vmatprep.subr.mxu0 %v927
    %1006 = vmatpush1.msra.mxu0 %v926
    %1007 = vmatprep.subr.mxu0 %v923
    %1008 = vmatpush1.msra.mxu0 %v922
    %1009 = vmatprep.subr.mxu0 %v919
    %1010 = vmatpush1.msra.mxu0 %v918
    %1011 = vmatprep.subr.mxu0 %v915
    %1012 = vmatpush1.msra.mxu0 %v914
    %1013 = vmatprep.subr.mxu0 %v911
    %1014 = vmatpush1.msra.mxu0 %v910
    %1015 = vmatprep.subr.mxu0 %v907
    %1016 = vmatpush1.msra.mxu0 %v906
    %1017 = vmatprep.subr.mxu0 %v903
    %1018 = vmatpush1.msra.mxu0 %v902
    %1019 = vmatprep.subr.mxu0 %v899
    %1020 = vmatpush1.msra.mxu0 %v898
    %1021 = vmatprep.subr.mxu0 %v895
    %1022 = vmatpush1.msra.mxu0 %v894
    %1023 = vmatprep.subr.mxu0 %v891
    %1024 = vmatpush1.msra.mxu0 %v890
    %1025 = vmatprep.subr.mxu0 %v887
    %1026 = vmatpush1.msra.mxu0 %v886
    %1027 = vmatprep.subr.mxu0 %v883
    %1028 = vmatpush1.msra.mxu0 %v882
    %1029 = vmatprep.subr.mxu0 %v879
    %1030 = vmatpush1.msra.mxu0 %v878
    %1031 = vmatprep.subr.mxu0 %v875
    %1032 = vmatpush1.msra.mxu0 %v874
    %1033 = vmatprep.subr.mxu0 %v871
    %1034 = vmatpush1.msra.mxu0 %v870
    %1035 = vmatprep.subr.mxu0 0.0
    %1036 = vmatpush2.msra.mxu0 0.0
    %1037 = vmatprep.subr.mxu0 0.0
    %1038 = vmatpush2.msra.mxu0 0.0
    %1039 = vmatprep.subr.mxu0 0.0
    %1040 = vmatpush2.msra.mxu0 0.0
    %1041 = vmatprep.subr.mxu0 0.0
    %1042 = vmatpush2.msra.mxu0 0.0
    %1043 = vmatprep.subr.mxu0 0.0
    %1044 = vmatpush2.msra.mxu0 0.0
    %1045 = vmatprep.subr.mxu0 0.0
    %1046 = vmatpush2.msra.mxu0 0.0
    %1047 = vmatprep.subr.mxu0 0.0
    %1048 = vmatpush2.msra.mxu0 0.0
    %1049 = vmatprep.subr.mxu0 0.0
    %1050 = vmatpush2.msra.mxu0 0.0
    %1051 = vmatprep.subr.mxu0 0.0
    %1052 = vmatpush2.msra.mxu0 0.0
    %1053 = vmatprep.subr.mxu0 0.0
    %1054 = vmatpush2.msra.mxu0 0.0
    %1055 = vmatprep.subr.mxu0 0.0
    %1056 = vmatpush2.msra.mxu0 0.0
    %1057 = vmatprep.subr.mxu0 0.0
    %1058 = vmatpush2.msra.mxu0 0.0
    %1059 = vmatprep.subr.mxu0 0.0
    %1060 = vmatpush2.msra.mxu0 0.0
    %1061 = vmatprep.subr.mxu0 0.0
    %1062 = vmatpush2.msra.mxu0 0.0
    %1063 = vmatprep.subr.mxu0 0.0
    %1064 = vmatpush2.msra.mxu0 0.0
    %1065 = vmatprep.subr.mxu0 0.0
    %1066 = vmatpush2.msra.mxu0 0.0
    %1067 = vmatprep.mubr.f32.mxu0 0.0
    %1068 = vmatmul.mubr.f32.gmra.mxu0 %v867
    %v1069 = vpop.f32.mrf.mxu0
    %v1070 = vadd.f32 0.0, %v1069
    %v1071 = vpop.f32.mrf.mxu0
    %v1072 = vadd.f32 0.0, %v1071
    %1073 = vdwg.mxu0
    %v1078 = vcombine.low %v999, %v1001
    %v1079 = vcombine.low %v1070, %v1072
    %v1081 = vunpack.c.l.s4 1966171168
    %v1082 = vunpack.c.0.s8 %v1081
    %v1083 = vlaneseq
    %v1084 = vshrl.u32 %v1083, 7
    %v1085 = vsub.s32 %v1082, %v1084
    %v1086 = vrot.slane %v1078, %v1085
    %v1088 = vunpack.c.l.s4 1966171168
    %v1089 = vunpack.c.0.s8 %v1088
    %v1090 = vlaneseq
    %v1091 = vshrl.u32 %v1090, 7
    %v1092 = vsub.s32 %v1089, %v1091
    %v1093 = vrot.slane %v1079, %v1092
    %v1094 = vcombine.low %v1086, %v1093
    %v1096 = vunpack.c.l.s4 1966171168
    %v1097 = vunpack.c.0.s8 %v1096
    %v1098 = vlaneseq
    %v1099 = vshrl.u32 %v1098, 7
    %v1100 = vsub.s32 %v1097, %v1099
    %v1101 = vrot.slane %v1094, %v1100
    %v1103 = vadd.f32 %v866, %v1101
    %v1104 = vxor.u32 %v1103, 2147483648
    %v1105 = vmul.f32 %v1104, 1.442695
    %v1106 = vpow.pop %v1105
    %v1107 = vadd.f32 %v1106, 1.0
    %v1108 = vrcp.pop %v1107
    %v1109 = vmul.f32 1.0, %v1108
    %v1111 = vrot.slane %v1103, 1
    %v1113 = vxor.u32 %v1111, 2147483648
    %v1114 = vmul.f32 %v1113, 1.442695
    %v1115 = vpow.pop %v1114
    %v1116 = vadd.f32 %v1115, 1.0
    %v1117 = vrcp.pop %v1116
    %v1118 = vmul.f32 1.0, %v1117
    %v1119 = vrot.slane %v1103, 2
    %v1121 = vtanh.pop %v1119
    %v1122 = vrot.slane %v1103, 3
    %v1124 = vxor.u32 %v1122, 2147483648
    %v1125 = vmul.f32 %v1124, 1.442695
    %v1126 = vpow.pop %v1125
    %v1127 = vadd.f32 %v1126, 1.0
    %v1128 = vrcp.pop %v1127
    %v1129 = vmul.f32 1.0, %v1128
    %v1130 = vld [vmem:[#allocation4] sm:$0x1]
    %v1131 = vmul.f32 %v1118, %v1130
    %v1132 = vmul.f32 %v1109, %v1121
    %v1133 = vadd.f32 %v1131, %v1132
    %v1134 = vtanh.pop %v1133
    %v1135 = vmul.f32 %v1129, %v1134
    %1136 = vst [vmem:[#allocation4] sm:$0x1] %v1133
    %1137 = vst [vmem:[#allocation3] sm:$0x1] %v1135
    %1138 = vst [vmem:[#allocation5 + $0x2] sm:$0x1] %v1135
    %s1139 = scalar_lea.vmem [#allocation2], 3
    %v1140 = vld [vmem:[%s1139] ss:$8 sm:$0xf]
    %v1141 = vld [vmem:[#allocation3] sm:$0x1]
    %v1142 = vld [vmem:[#allocation11] sm:$0xff]
    %v1143 = vld [vmem:[#allocation11 + $0x8] sm:$0xff]
    %v1144 = vld [vmem:[#allocation11 + $0x10] sm:$0xff]
    %v1145 = vld [vmem:[#allocation11 + $0x18] sm:$0xff]
    %v1146 = vld [vmem:[#allocation11 + $0x20] sm:$0xff]
    %v1147 = vld [vmem:[#allocation11 + $0x28] sm:$0xff]
    %v1148 = vld [vmem:[#allocation11 + $0x30] sm:$0xff]
    %v1149 = vld [vmem:[#allocation11 + $0x38] sm:$0xff]
    %v1150 = vld [vmem:[#allocation11 + $0x40] sm:$0xff]
    %v1151 = vld [vmem:[#allocation11 + $0x48] sm:$0xff]
    %v1152 = vld [vmem:[#allocation11 + $0x50] sm:$0xff]
    %v1153 = vld [vmem:[#allocation11 + $0x58] sm:$0xff]
    %v1154 = vld [vmem:[#allocation11 + $0x60] sm:$0xff]
    %v1155 = vld [vmem:[#allocation11 + $0x68] sm:$0xff]
    %v1156 = vld [vmem:[#allocation11 + $0x70] sm:$0xff]
    %v1157 = vld [vmem:[#allocation11 + $0x78] sm:$0xff]
    %v1158 = vld [vmem:[#allocation11 + $0x80] sm:$0xff]
    %v1159 = vld [vmem:[#allocation11 + $0x88] sm:$0xff]
    %v1160 = vld [vmem:[#allocation11 + $0x90] sm:$0xff]
    %v1161 = vld [vmem:[#allocation11 + $0x98] sm:$0xff]
    %v1162 = vld [vmem:[#allocation11 + $0xa0] sm:$0xff]
    %v1163 = vld [vmem:[#allocation11 + $0xa8] sm:$0xff]
    %v1164 = vld [vmem:[#allocation11 + $0xb0] sm:$0xff]
    %v1165 = vld [vmem:[#allocation11 + $0xb8] sm:$0xff]
    %v1166 = vld [vmem:[#allocation11 + $0xc0] sm:$0xff]
    %v1167 = vld [vmem:[#allocation11 + $0xc8] sm:$0xff]
    %v1168 = vld [vmem:[#allocation11 + $0xd0] sm:$0xff]
    %v1169 = vld [vmem:[#allocation11 + $0xd8] sm:$0xff]
    %v1170 = vld [vmem:[#allocation11 + $0xe0] sm:$0xff]
    %v1171 = vld [vmem:[#allocation11 + $0xe8] sm:$0xff]
    %v1172 = vld [vmem:[#allocation11 + $0xf0] sm:$0xff]
    %v1173 = vld [vmem:[#allocation11 + $0xf8] sm:$0xff]
    %v1174 = vld [vmem:[#allocation11 + $0x100] sm:$0xff]
    %v1175 = vld [vmem:[#allocation11 + $0x108] sm:$0xff]
    %v1176 = vld [vmem:[#allocation11 + $0x110] sm:$0xff]
    %v1177 = vld [vmem:[#allocation11 + $0x118] sm:$0xff]
    %v1178 = vld [vmem:[#allocation11 + $0x120] sm:$0xff]
    %v1179 = vld [vmem:[#allocation11 + $0x128] sm:$0xff]
    %v1180 = vld [vmem:[#allocation11 + $0x130] sm:$0xff]
    %v1181 = vld [vmem:[#allocation11 + $0x138] sm:$0xff]
    %v1182 = vld [vmem:[#allocation11 + $0x140] sm:$0xff]
    %v1183 = vld [vmem:[#allocation11 + $0x148] sm:$0xff]
    %v1184 = vld [vmem:[#allocation11 + $0x150] sm:$0xff]
    %v1185 = vld [vmem:[#allocation11 + $0x158] sm:$0xff]
    %v1186 = vld [vmem:[#allocation11 + $0x160] sm:$0xff]
    %v1187 = vld [vmem:[#allocation11 + $0x168] sm:$0xff]
    %v1188 = vld [vmem:[#allocation11 + $0x170] sm:$0xff]
    %v1189 = vld [vmem:[#allocation11 + $0x178] sm:$0xff]
    %v1190 = vld [vmem:[#allocation11 + $0x180] sm:$0xff]
    %v1191 = vld [vmem:[#allocation11 + $0x188] sm:$0xff]
    %v1192 = vld [vmem:[#allocation11 + $0x190] sm:$0xff]
    %v1193 = vld [vmem:[#allocation11 + $0x198] sm:$0xff]
    %v1194 = vld [vmem:[#allocation11 + $0x1a0] sm:$0xff]
    %v1195 = vld [vmem:[#allocation11 + $0x1a8] sm:$0xff]
    %v1196 = vld [vmem:[#allocation11 + $0x1b0] sm:$0xff]
    %v1197 = vld [vmem:[#allocation11 + $0x1b8] sm:$0xff]
    %v1198 = vld [vmem:[#allocation11 + $0x1c0] sm:$0xff]
    %v1199 = vld [vmem:[#allocation11 + $0x1c8] sm:$0xff]
    %v1200 = vld [vmem:[#allocation11 + $0x1d0] sm:$0xff]
    %v1201 = vld [vmem:[#allocation11 + $0x1d8] sm:$0xff]
    %v1202 = vld [vmem:[#allocation11 + $0x1e0] sm:$0xff]
    %v1203 = vld [vmem:[#allocation11 + $0x1e8] sm:$0xff]
    %v1204 = vld [vmem:[#allocation11 + $0x1f0] sm:$0xff]
    %v1205 = vld [vmem:[#allocation11 + $0x1f8] sm:$0xff]
    %1206 = vmatprep.subr.mxu0 %v1203
    %1207 = vmatpush1.msra.mxu0 %v1202
    %1208 = vmatprep.subr.mxu0 %v1199
    %1209 = vmatpush1.msra.mxu0 %v1198
    %1210 = vmatprep.subr.mxu0 %v1195
    %1211 = vmatpush1.msra.mxu0 %v1194
    %1212 = vmatprep.subr.mxu0 %v1191
    %1213 = vmatpush1.msra.mxu0 %v1190
    %1214 = vmatprep.subr.mxu0 %v1187
    %1215 = vmatpush1.msra.mxu0 %v1186
    %1216 = vmatprep.subr.mxu0 %v1183
    %1217 = vmatpush1.msra.mxu0 %v1182
    %1218 = vmatprep.subr.mxu0 %v1179
    %1219 = vmatpush1.msra.mxu0 %v1178
    %1220 = vmatprep.subr.mxu0 %v1175
    %1221 = vmatpush1.msra.mxu0 %v1174
    %1222 = vmatprep.subr.mxu0 %v1171
    %1223 = vmatpush1.msra.mxu0 %v1170
    %1224 = vmatprep.subr.mxu0 %v1167
    %1225 = vmatpush1.msra.mxu0 %v1166
    %1226 = vmatprep.subr.mxu0 %v1163
    %1227 = vmatpush1.msra.mxu0 %v1162
    %1228 = vmatprep.subr.mxu0 %v1159
    %1229 = vmatpush1.msra.mxu0 %v1158
    %1230 = vmatprep.subr.mxu0 %v1155
    %1231 = vmatpush1.msra.mxu0 %v1154
    %1232 = vmatprep.subr.mxu0 %v1151
    %1233 = vmatpush1.msra.mxu0 %v1150
    %1234 = vmatprep.subr.mxu0 %v1147
    %1235 = vmatpush1.msra.mxu0 %v1146
    %1236 = vmatprep.subr.mxu0 %v1143
    %1237 = vmatpush1.msra.mxu0 %v1142
    %1238 = vmatprep.subr.mxu0 0.0
    %1239 = vmatpush2.msra.mxu0 0.0
    %1240 = vmatprep.subr.mxu0 0.0
    %1241 = vmatpush2.msra.mxu0 0.0
    %1242 = vmatprep.subr.mxu0 0.0
    %1243 = vmatpush2.msra.mxu0 0.0
    %1244 = vmatprep.subr.mxu0 0.0
    %1245 = vmatpush2.msra.mxu0 0.0
    %1246 = vmatprep.subr.mxu0 0.0
    %1247 = vmatpush2.msra.mxu0 0.0
    %1248 = vmatprep.subr.mxu0 0.0
    %1249 = vmatpush2.msra.mxu0 0.0
    %1250 = vmatprep.subr.mxu0 0.0
    %1251 = vmatpush2.msra.mxu0 0.0
    %1252 = vmatprep.subr.mxu0 0.0
    %1253 = vmatpush2.msra.mxu0 0.0
    %1254 = vmatprep.subr.mxu0 0.0
    %1255 = vmatpush2.msra.mxu0 0.0
    %1256 = vmatprep.subr.mxu0 0.0
    %1257 = vmatpush2.msra.mxu0 0.0
    %1258 = vmatprep.subr.mxu0 0.0
    %1259 = vmatpush2.msra.mxu0 0.0
    %1260 = vmatprep.subr.mxu0 0.0
    %1261 = vmatpush2.msra.mxu0 0.0
    %1262 = vmatprep.subr.mxu0 0.0
    %1263 = vmatpush2.msra.mxu0 0.0
    %1264 = vmatprep.subr.mxu0 0.0
    %1265 = vmatpush2.msra.mxu0 0.0
    %1266 = vmatprep.subr.mxu0 0.0
    %1267 = vmatpush2.msra.mxu0 0.0
    %1268 = vmatprep.subr.mxu0 0.0
    %1269 = vmatpush2.msra.mxu0 0.0
    %1270 = vmatprep.mubr.f32.mxu0 0.0
    %1271 = vmatmul.mubr.f32.gmra.mxu0 %v1141
    %v1272 = vpop.f32.mrf.mxu0
    %v1273 = vadd.f32 0.0, %v1272
    %v1274 = vpop.f32.mrf.mxu0
    %v1275 = vadd.f32 0.0, %v1274
    %1276 = vdwg.mxu0
    %1277 = vmatprep.subr.mxu0 %v1205
    %1278 = vmatpush1.msra.mxu0 %v1204
    %1279 = vmatprep.subr.mxu0 %v1201
    %1280 = vmatpush1.msra.mxu0 %v1200
    %1281 = vmatprep.subr.mxu0 %v1197
    %1282 = vmatpush1.msra.mxu0 %v1196
    %1283 = vmatprep.subr.mxu0 %v1193
    %1284 = vmatpush1.msra.mxu0 %v1192
    %1285 = vmatprep.subr.mxu0 %v1189
    %1286 = vmatpush1.msra.mxu0 %v1188
    %1287 = vmatprep.subr.mxu0 %v1185
    %1288 = vmatpush1.msra.mxu0 %v1184
    %1289 = vmatprep.subr.mxu0 %v1181
    %1290 = vmatpush1.msra.mxu0 %v1180
    %1291 = vmatprep.subr.mxu0 %v1177
    %1292 = vmatpush1.msra.mxu0 %v1176
    %1293 = vmatprep.subr.mxu0 %v1173
    %1294 = vmatpush1.msra.mxu0 %v1172
    %1295 = vmatprep.subr.mxu0 %v1169
    %1296 = vmatpush1.msra.mxu0 %v1168
    %1297 = vmatprep.subr.mxu0 %v1165
    %1298 = vmatpush1.msra.mxu0 %v1164
    %1299 = vmatprep.subr.mxu0 %v1161
    %1300 = vmatpush1.msra.mxu0 %v1160
    %1301 = vmatprep.subr.mxu0 %v1157
    %1302 = vmatpush1.msra.mxu0 %v1156
    %1303 = vmatprep.subr.mxu0 %v1153
    %1304 = vmatpush1.msra.mxu0 %v1152
    %1305 = vmatprep.subr.mxu0 %v1149
    %1306 = vmatpush1.msra.mxu0 %v1148
    %1307 = vmatprep.subr.mxu0 %v1145
    %1308 = vmatpush1.msra.mxu0 %v1144
    %1309 = vmatprep.subr.mxu0 0.0
    %1310 = vmatpush2.msra.mxu0 0.0
    %1311 = vmatprep.subr.mxu0 0.0
    %1312 = vmatpush2.msra.mxu0 0.0
    %1313 = vmatprep.subr.mxu0 0.0
    %1314 = vmatpush2.msra.mxu0 0.0
    %1315 = vmatprep.subr.mxu0 0.0
    %1316 = vmatpush2.msra.mxu0 0.0
    %1317 = vmatprep.subr.mxu0 0.0
    %1318 = vmatpush2.msra.mxu0 0.0
    %1319 = vmatprep.subr.mxu0 0.0
    %1320 = vmatpush2.msra.mxu0 0.0
    %1321 = vmatprep.subr.mxu0 0.0
    %1322 = vmatpush2.msra.mxu0 0.0
    %1323 = vmatprep.subr.mxu0 0.0
    %1324 = vmatpush2.msra.mxu0 0.0
    %1325 = vmatprep.subr.mxu0 0.0
    %1326 = vmatpush2.msra.mxu0 0.0
    %1327 = vmatprep.subr.mxu0 0.0
    %1328 = vmatpush2.msra.mxu0 0.0
    %1329 = vmatprep.subr.mxu0 0.0
    %1330 = vmatpush2.msra.mxu0 0.0
    %1331 = vmatprep.subr.mxu0 0.0
    %1332 = vmatpush2.msra.mxu0 0.0
    %1333 = vmatprep.subr.mxu0 0.0
    %1334 = vmatpush2.msra.mxu0 0.0
    %1335 = vmatprep.subr.mxu0 0.0
    %1336 = vmatpush2.msra.mxu0 0.0
    %1337 = vmatprep.subr.mxu0 0.0
    %1338 = vmatpush2.msra.mxu0 0.0
    %1339 = vmatprep.subr.mxu0 0.0
    %1340 = vmatpush2.msra.mxu0 0.0
    %1341 = vmatprep.mubr.f32.mxu0 0.0
    %1342 = vmatmul.mubr.f32.gmra.mxu0 %v1141
    %v1343 = vpop.f32.mrf.mxu0
    %v1344 = vadd.f32 0.0, %v1343
    %v1345 = vpop.f32.mrf.mxu0
    %v1346 = vadd.f32 0.0, %v1345
    %1347 = vdwg.mxu0
    %v1352 = vcombine.low %v1273, %v1275
    %v1353 = vcombine.low %v1344, %v1346
    %v1355 = vunpack.c.l.s4 1966171168
    %v1356 = vunpack.c.0.s8 %v1355
    %v1357 = vlaneseq
    %v1358 = vshrl.u32 %v1357, 7
    %v1359 = vsub.s32 %v1356, %v1358
    %v1360 = vrot.slane %v1352, %v1359
    %v1362 = vunpack.c.l.s4 1966171168
    %v1363 = vunpack.c.0.s8 %v1362
    %v1364 = vlaneseq
    %v1365 = vshrl.u32 %v1364, 7
    %v1366 = vsub.s32 %v1363, %v1365
    %v1367 = vrot.slane %v1353, %v1366
    %v1368 = vcombine.low %v1360, %v1367
    %v1370 = vunpack.c.l.s4 1966171168
    %v1371 = vunpack.c.0.s8 %v1370
    %v1372 = vlaneseq
    %v1373 = vshrl.u32 %v1372, 7
    %v1374 = vsub.s32 %v1371, %v1373
    %v1375 = vrot.slane %v1368, %v1374
    %v1377 = vadd.f32 %v1140, %v1375
    %v1378 = vxor.u32 %v1377, 2147483648
    %v1379 = vmul.f32 %v1378, 1.442695
    %v1380 = vpow.pop %v1379
    %v1381 = vadd.f32 %v1380, 1.0
    %v1382 = vrcp.pop %v1381
    %v1383 = vmul.f32 1.0, %v1382
    %v1385 = vrot.slane %v1377, 1
    %v1387 = vxor.u32 %v1385, 2147483648
    %v1388 = vmul.f32 %v1387, 1.442695
    %v1389 = vpow.pop %v1388
    %v1390 = vadd.f32 %v1389, 1.0
    %v1391 = vrcp.pop %v1390
    %v1392 = vmul.f32 1.0, %v1391
    %v1393 = vrot.slane %v1377, 2
    %v1395 = vtanh.pop %v1393
    %v1396 = vrot.slane %v1377, 3
    %v1398 = vxor.u32 %v1396, 2147483648
    %v1399 = vmul.f32 %v1398, 1.442695
    %v1400 = vpow.pop %v1399
    %v1401 = vadd.f32 %v1400, 1.0
    %v1402 = vrcp.pop %v1401
    %v1403 = vmul.f32 1.0, %v1402
    %v1404 = vld [vmem:[#allocation4] sm:$0x1]
    %v1405 = vmul.f32 %v1392, %v1404
    %v1406 = vmul.f32 %v1383, %v1395
    %v1407 = vadd.f32 %v1405, %v1406
    %v1408 = vtanh.pop %v1407
    %v1409 = vmul.f32 %v1403, %v1408
    %1410 = vst [vmem:[#allocation4] sm:$0x1] %v1407
    %1411 = vst [vmem:[#allocation3] sm:$0x1] %v1409
    %1412 = vst [vmem:[#allocation5 + $0x3] sm:$0x1] %v1409
    %s1413 = scalar_lea.vmem [#allocation2], 4
    %v1414 = vld [vmem:[%s1413] ss:$8 sm:$0xf]
    %v1415 = vld [vmem:[#allocation3] sm:$0x1]
    %v1416 = vld [vmem:[#allocation11] sm:$0xff]
    %v1417 = vld [vmem:[#allocation11 + $0x8] sm:$0xff]
    %v1418 = vld [vmem:[#allocation11 + $0x10] sm:$0xff]
    %v1419 = vld [vmem:[#allocation11 + $0x18] sm:$0xff]
    %v1420 = vld [vmem:[#allocation11 + $0x20] sm:$0xff]
    %v1421 = vld [vmem:[#allocation11 + $0x28] sm:$0xff]
    %v1422 = vld [vmem:[#allocation11 + $0x30] sm:$0xff]
    %v1423 = vld [vmem:[#allocation11 + $0x38] sm:$0xff]
    %v1424 = vld [vmem:[#allocation11 + $0x40] sm:$0xff]
    %v1425 = vld [vmem:[#allocation11 + $0x48] sm:$0xff]
    %v1426 = vld [vmem:[#allocation11 + $0x50] sm:$0xff]
    %v1427 = vld [vmem:[#allocation11 + $0x58] sm:$0xff]
    %v1428 = vld [vmem:[#allocation11 + $0x60] sm:$0xff]
    %v1429 = vld [vmem:[#allocation11 + $0x68] sm:$0xff]
    %v1430 = vld [vmem:[#allocation11 + $0x70] sm:$0xff]
    %v1431 = vld [vmem:[#allocation11 + $0x78] sm:$0xff]
    %v1432 = vld [vmem:[#allocation11 + $0x80] sm:$0xff]
    %v1433 = vld [vmem:[#allocation11 + $0x88] sm:$0xff]
    %v1434 = vld [vmem:[#allocation11 + $0x90] sm:$0xff]
    %v1435 = vld [vmem:[#allocation11 + $0x98] sm:$0xff]
    %v1436 = vld [vmem:[#allocation11 + $0xa0] sm:$0xff]
    %v1437 = vld [vmem:[#allocation11 + $0xa8] sm:$0xff]
    %v1438 = vld [vmem:[#allocation11 + $0xb0] sm:$0xff]
    %v1439 = vld [vmem:[#allocation11 + $0xb8] sm:$0xff]
    %v1440 = vld [vmem:[#allocation11 + $0xc0] sm:$0xff]
    %v1441 = vld [vmem:[#allocation11 + $0xc8] sm:$0xff]
    %v1442 = vld [vmem:[#allocation11 + $0xd0] sm:$0xff]
    %v1443 = vld [vmem:[#allocation11 + $0xd8] sm:$0xff]
    %v1444 = vld [vmem:[#allocation11 + $0xe0] sm:$0xff]
    %v1445 = vld [vmem:[#allocation11 + $0xe8] sm:$0xff]
    %v1446 = vld [vmem:[#allocation11 + $0xf0] sm:$0xff]
    %v1447 = vld [vmem:[#allocation11 + $0xf8] sm:$0xff]
    %v1448 = vld [vmem:[#allocation11 + $0x100] sm:$0xff]
    %v1449 = vld [vmem:[#allocation11 + $0x108] sm:$0xff]
    %v1450 = vld [vmem:[#allocation11 + $0x110] sm:$0xff]
    %v1451 = vld [vmem:[#allocation11 + $0x118] sm:$0xff]
    %v1452 = vld [vmem:[#allocation11 + $0x120] sm:$0xff]
    %v1453 = vld [vmem:[#allocation11 + $0x128] sm:$0xff]
    %v1454 = vld [vmem:[#allocation11 + $0x130] sm:$0xff]
    %v1455 = vld [vmem:[#allocation11 + $0x138] sm:$0xff]
    %v1456 = vld [vmem:[#allocation11 + $0x140] sm:$0xff]
    %v1457 = vld [vmem:[#allocation11 + $0x148] sm:$0xff]
    %v1458 = vld [vmem:[#allocation11 + $0x150] sm:$0xff]
    %v1459 = vld [vmem:[#allocation11 + $0x158] sm:$0xff]
    %v1460 = vld [vmem:[#allocation11 + $0x160] sm:$0xff]
    %v1461 = vld [vmem:[#allocation11 + $0x168] sm:$0xff]
    %v1462 = vld [vmem:[#allocation11 + $0x170] sm:$0xff]
    %v1463 = vld [vmem:[#allocation11 + $0x178] sm:$0xff]
    %v1464 = vld [vmem:[#allocation11 + $0x180] sm:$0xff]
    %v1465 = vld [vmem:[#allocation11 + $0x188] sm:$0xff]
    %v1466 = vld [vmem:[#allocation11 + $0x190] sm:$0xff]
    %v1467 = vld [vmem:[#allocation11 + $0x198] sm:$0xff]
    %v1468 = vld [vmem:[#allocation11 + $0x1a0] sm:$0xff]
    %v1469 = vld [vmem:[#allocation11 + $0x1a8] sm:$0xff]
    %v1470 = vld [vmem:[#allocation11 + $0x1b0] sm:$0xff]
    %v1471 = vld [vmem:[#allocation11 + $0x1b8] sm:$0xff]
    %v1472 = vld [vmem:[#allocation11 + $0x1c0] sm:$0xff]
    %v1473 = vld [vmem:[#allocation11 + $0x1c8] sm:$0xff]
    %v1474 = vld [vmem:[#allocation11 + $0x1d0] sm:$0xff]
    %v1475 = vld [vmem:[#allocation11 + $0x1d8] sm:$0xff]
    %v1476 = vld [vmem:[#allocation11 + $0x1e0] sm:$0xff]
    %v1477 = vld [vmem:[#allocation11 + $0x1e8] sm:$0xff]
    %v1478 = vld [vmem:[#allocation11 + $0x1f0] sm:$0xff]
    %v1479 = vld [vmem:[#allocation11 + $0x1f8] sm:$0xff]
    %1480 = vmatprep.subr.mxu0 %v1477
    %1481 = vmatpush1.msra.mxu0 %v1476
    %1482 = vmatprep.subr.mxu0 %v1473
    %1483 = vmatpush1.msra.mxu0 %v1472
    %1484 = vmatprep.subr.mxu0 %v1469
    %1485 = vmatpush1.msra.mxu0 %v1468
    %1486 = vmatprep.subr.mxu0 %v1465
    %1487 = vmatpush1.msra.mxu0 %v1464
    %1488 = vmatprep.subr.mxu0 %v1461
    %1489 = vmatpush1.msra.mxu0 %v1460
    %1490 = vmatprep.subr.mxu0 %v1457
    %1491 = vmatpush1.msra.mxu0 %v1456
    %1492 = vmatprep.subr.mxu0 %v1453
    %1493 = vmatpush1.msra.mxu0 %v1452
    %1494 = vmatprep.subr.mxu0 %v1449
    %1495 = vmatpush1.msra.mxu0 %v1448
    %1496 = vmatprep.subr.mxu0 %v1445
    %1497 = vmatpush1.msra.mxu0 %v1444
    %1498 = vmatprep.subr.mxu0 %v1441
    %1499 = vmatpush1.msra.mxu0 %v1440
    %1500 = vmatprep.subr.mxu0 %v1437
    %1501 = vmatpush1.msra.mxu0 %v1436
    %1502 = vmatprep.subr.mxu0 %v1433
    %1503 = vmatpush1.msra.mxu0 %v1432
    %1504 = vmatprep.subr.mxu0 %v1429
    %1505 = vmatpush1.msra.mxu0 %v1428
    %1506 = vmatprep.subr.mxu0 %v1425
    %1507 = vmatpush1.msra.mxu0 %v1424
    %1508 = vmatprep.subr.mxu0 %v1421
    %1509 = vmatpush1.msra.mxu0 %v1420
    %1510 = vmatprep.subr.mxu0 %v1417
    %1511 = vmatpush1.msra.mxu0 %v1416
    %1512 = vmatprep.subr.mxu0 0.0
    %1513 = vmatpush2.msra.mxu0 0.0
    %1514 = vmatprep.subr.mxu0 0.0
    %1515 = vmatpush2.msra.mxu0 0.0
    %1516 = vmatprep.subr.mxu0 0.0
    %1517 = vmatpush2.msra.mxu0 0.0
    %1518 = vmatprep.subr.mxu0 0.0
    %1519 = vmatpush2.msra.mxu0 0.0
    %1520 = vmatprep.subr.mxu0 0.0
    %1521 = vmatpush2.msra.mxu0 0.0
    %1522 = vmatprep.subr.mxu0 0.0
    %1523 = vmatpush2.msra.mxu0 0.0
    %1524 = vmatprep.subr.mxu0 0.0
    %1525 = vmatpush2.msra.mxu0 0.0
    %1526 = vmatprep.subr.mxu0 0.0
    %1527 = vmatpush2.msra.mxu0 0.0
    %1528 = vmatprep.subr.mxu0 0.0
    %1529 = vmatpush2.msra.mxu0 0.0
    %1530 = vmatprep.subr.mxu0 0.0
    %1531 = vmatpush2.msra.mxu0 0.0
    %1532 = vmatprep.subr.mxu0 0.0
    %1533 = vmatpush2.msra.mxu0 0.0
    %1534 = vmatprep.subr.mxu0 0.0
    %1535 = vmatpush2.msra.mxu0 0.0
    %1536 = vmatprep.subr.mxu0 0.0
    %1537 = vmatpush2.msra.mxu0 0.0
    %1538 = vmatprep.subr.mxu0 0.0
    %1539 = vmatpush2.msra.mxu0 0.0
    %1540 = vmatprep.subr.mxu0 0.0
    %1541 = vmatpush2.msra.mxu0 0.0
    %1542 = vmatprep.subr.mxu0 0.0
    %1543 = vmatpush2.msra.mxu0 0.0
    %1544 = vmatprep.mubr.f32.mxu0 0.0
    %1545 = vmatmul.mubr.f32.gmra.mxu0 %v1415
    %v1546 = vpop.f32.mrf.mxu0
    %v1547 = vadd.f32 0.0, %v1546
    %v1548 = vpop.f32.mrf.mxu0
    %v1549 = vadd.f32 0.0, %v1548
    %1550 = vdwg.mxu0
    %1551 = vmatprep.subr.mxu0 %v1479
    %1552 = vmatpush1.msra.mxu0 %v1478
    %1553 = vmatprep.subr.mxu0 %v1475
    %1554 = vmatpush1.msra.mxu0 %v1474
    %1555 = vmatprep.subr.mxu0 %v1471
    %1556 = vmatpush1.msra.mxu0 %v1470
    %1557 = vmatprep.subr.mxu0 %v1467
    %1558 = vmatpush1.msra.mxu0 %v1466
    %1559 = vmatprep.subr.mxu0 %v1463
    %1560 = vmatpush1.msra.mxu0 %v1462
    %1561 = vmatprep.subr.mxu0 %v1459
    %1562 = vmatpush1.msra.mxu0 %v1458
    %1563 = vmatprep.subr.mxu0 %v1455
    %1564 = vmatpush1.msra.mxu0 %v1454
    %1565 = vmatprep.subr.mxu0 %v1451
    %1566 = vmatpush1.msra.mxu0 %v1450
    %1567 = vmatprep.subr.mxu0 %v1447
    %1568 = vmatpush1.msra.mxu0 %v1446
    %1569 = vmatprep.subr.mxu0 %v1443
    %1570 = vmatpush1.msra.mxu0 %v1442
    %1571 = vmatprep.subr.mxu0 %v1439
    %1572 = vmatpush1.msra.mxu0 %v1438
    %1573 = vmatprep.subr.mxu0 %v1435
    %1574 = vmatpush1.msra.mxu0 %v1434
    %1575 = vmatprep.subr.mxu0 %v1431
    %1576 = vmatpush1.msra.mxu0 %v1430
    %1577 = vmatprep.subr.mxu0 %v1427
    %1578 = vmatpush1.msra.mxu0 %v1426
    %1579 = vmatprep.subr.mxu0 %v1423
    %1580 = vmatpush1.msra.mxu0 %v1422
    %1581 = vmatprep.subr.mxu0 %v1419
    %1582 = vmatpush1.msra.mxu0 %v1418
    %1583 = vmatprep.subr.mxu0 0.0
    %1584 = vmatpush2.msra.mxu0 0.0
    %1585 = vmatprep.subr.mxu0 0.0
    %1586 = vmatpush2.msra.mxu0 0.0
    %1587 = vmatprep.subr.mxu0 0.0
    %1588 = vmatpush2.msra.mxu0 0.0
    %1589 = vmatprep.subr.mxu0 0.0
    %1590 = vmatpush2.msra.mxu0 0.0
    %1591 = vmatprep.subr.mxu0 0.0
    %1592 = vmatpush2.msra.mxu0 0.0
    %1593 = vmatprep.subr.mxu0 0.0
    %1594 = vmatpush2.msra.mxu0 0.0
    %1595 = vmatprep.subr.mxu0 0.0
    %1596 = vmatpush2.msra.mxu0 0.0
    %1597 = vmatprep.subr.mxu0 0.0
    %1598 = vmatpush2.msra.mxu0 0.0
    %1599 = vmatprep.subr.mxu0 0.0
    %1600 = vmatpush2.msra.mxu0 0.0
    %1601 = vmatprep.subr.mxu0 0.0
    %1602 = vmatpush2.msra.mxu0 0.0
    %1603 = vmatprep.subr.mxu0 0.0
    %1604 = vmatpush2.msra.mxu0 0.0
    %1605 = vmatprep.subr.mxu0 0.0
    %1606 = vmatpush2.msra.mxu0 0.0
    %1607 = vmatprep.subr.mxu0 0.0
    %1608 = vmatpush2.msra.mxu0 0.0
    %1609 = vmatprep.subr.mxu0 0.0
    %1610 = vmatpush2.msra.mxu0 0.0
    %1611 = vmatprep.subr.mxu0 0.0
    %1612 = vmatpush2.msra.mxu0 0.0
    %1613 = vmatprep.subr.mxu0 0.0
    %1614 = vmatpush2.msra.mxu0 0.0
    %1615 = vmatprep.mubr.f32.mxu0 0.0
    %1616 = vmatmul.mubr.f32.gmra.mxu0 %v1415
    %v1617 = vpop.f32.mrf.mxu0
    %v1618 = vadd.f32 0.0, %v1617
    %v1619 = vpop.f32.mrf.mxu0
    %v1620 = vadd.f32 0.0, %v1619
    %1621 = vdwg.mxu0
    %v1626 = vcombine.low %v1547, %v1549
    %v1627 = vcombine.low %v1618, %v1620
    %v1629 = vunpack.c.l.s4 1966171168
    %v1630 = vunpack.c.0.s8 %v1629
    %v1631 = vlaneseq
    %v1632 = vshrl.u32 %v1631, 7
    %v1633 = vsub.s32 %v1630, %v1632
    %v1634 = vrot.slane %v1626, %v1633
    %v1636 = vunpack.c.l.s4 1966171168
    %v1637 = vunpack.c.0.s8 %v1636
    %v1638 = vlaneseq
    %v1639 = vshrl.u32 %v1638, 7
    %v1640 = vsub.s32 %v1637, %v1639
    %v1641 = vrot.slane %v1627, %v1640
    %v1642 = vcombine.low %v1634, %v1641
    %v1644 = vunpack.c.l.s4 1966171168
    %v1645 = vunpack.c.0.s8 %v1644
    %v1646 = vlaneseq
    %v1647 = vshrl.u32 %v1646, 7
    %v1648 = vsub.s32 %v1645, %v1647
    %v1649 = vrot.slane %v1642, %v1648
    %v1651 = vadd.f32 %v1414, %v1649
    %v1652 = vxor.u32 %v1651, 2147483648
    %v1653 = vmul.f32 %v1652, 1.442695
    %v1654 = vpow.pop %v1653
    %v1655 = vadd.f32 %v1654, 1.0
    %v1656 = vrcp.pop %v1655
    %v1657 = vmul.f32 1.0, %v1656
    %v1659 = vrot.slane %v1651, 1
    %v1661 = vxor.u32 %v1659, 2147483648
    %v1662 = vmul.f32 %v1661, 1.442695
    %v1663 = vpow.pop %v1662
    %v1664 = vadd.f32 %v1663, 1.0
    %v1665 = vrcp.pop %v1664
    %v1666 = vmul.f32 1.0, %v1665
    %v1667 = vrot.slane %v1651, 2
    %v1669 = vtanh.pop %v1667
    %v1670 = vrot.slane %v1651, 3
    %v1672 = vxor.u32 %v1670, 2147483648
    %v1673 = vmul.f32 %v1672, 1.442695
    %v1674 = vpow.pop %v1673
    %v1675 = vadd.f32 %v1674, 1.0
    %v1676 = vrcp.pop %v1675
    %v1677 = vmul.f32 1.0, %v1676
    %v1678 = vld [vmem:[#allocation4] sm:$0x1]
    %v1679 = vmul.f32 %v1666, %v1678
    %v1680 = vmul.f32 %v1657, %v1669
    %v1681 = vadd.f32 %v1679, %v1680
    %v1682 = vtanh.pop %v1681
    %v1683 = vmul.f32 %v1677, %v1682
    %1684 = vst [vmem:[#allocation4] sm:$0x1] %v1681
    %1685 = vst [vmem:[#allocation3] sm:$0x1] %v1683
    %1686 = vst [vmem:[#allocation5 + $0x4] sm:$0x1] %v1683
    %s1687 = scalar_lea.vmem [#allocation2], 5
    %v1688 = vld [vmem:[%s1687] ss:$8 sm:$0xf]
    %v1689 = vld [vmem:[#allocation3] sm:$0x1]
    %v1690 = vld [vmem:[#allocation11] sm:$0xff]
    %v1691 = vld [vmem:[#allocation11 + $0x8] sm:$0xff]
    %v1692 = vld [vmem:[#allocation11 + $0x10] sm:$0xff]
    %v1693 = vld [vmem:[#allocation11 + $0x18] sm:$0xff]
    %v1694 = vld [vmem:[#allocation11 + $0x20] sm:$0xff]
    %v1695 = vld [vmem:[#allocation11 + $0x28] sm:$0xff]
    %v1696 = vld [vmem:[#allocation11 + $0x30] sm:$0xff]
    %v1697 = vld [vmem:[#allocation11 + $0x38] sm:$0xff]
    %v1698 = vld [vmem:[#allocation11 + $0x40] sm:$0xff]
    %v1699 = vld [vmem:[#allocation11 + $0x48] sm:$0xff]
    %v1700 = vld [vmem:[#allocation11 + $0x50] sm:$0xff]
    %v1701 = vld [vmem:[#allocation11 + $0x58] sm:$0xff]
    %v1702 = vld [vmem:[#allocation11 + $0x60] sm:$0xff]
    %v1703 = vld [vmem:[#allocation11 + $0x68] sm:$0xff]
    %v1704 = vld [vmem:[#allocation11 + $0x70] sm:$0xff]
    %v1705 = vld [vmem:[#allocation11 + $0x78] sm:$0xff]
    %v1706 = vld [vmem:[#allocation11 + $0x80] sm:$0xff]
    %v1707 = vld [vmem:[#allocation11 + $0x88] sm:$0xff]
    %v1708 = vld [vmem:[#allocation11 + $0x90] sm:$0xff]
    %v1709 = vld [vmem:[#allocation11 + $0x98] sm:$0xff]
    %v1710 = vld [vmem:[#allocation11 + $0xa0] sm:$0xff]
    %v1711 = vld [vmem:[#allocation11 + $0xa8] sm:$0xff]
    %v1712 = vld [vmem:[#allocation11 + $0xb0] sm:$0xff]
    %v1713 = vld [vmem:[#allocation11 + $0xb8] sm:$0xff]
    %v1714 = vld [vmem:[#allocation11 + $0xc0] sm:$0xff]
    %v1715 = vld [vmem:[#allocation11 + $0xc8] sm:$0xff]
    %v1716 = vld [vmem:[#allocation11 + $0xd0] sm:$0xff]
    %v1717 = vld [vmem:[#allocation11 + $0xd8] sm:$0xff]
    %v1718 = vld [vmem:[#allocation11 + $0xe0] sm:$0xff]
    %v1719 = vld [vmem:[#allocation11 + $0xe8] sm:$0xff]
    %v1720 = vld [vmem:[#allocation11 + $0xf0] sm:$0xff]
    %v1721 = vld [vmem:[#allocation11 + $0xf8] sm:$0xff]
    %v1722 = vld [vmem:[#allocation11 + $0x100] sm:$0xff]
    %v1723 = vld [vmem:[#allocation11 + $0x108] sm:$0xff]
    %v1724 = vld [vmem:[#allocation11 + $0x110] sm:$0xff]
    %v1725 = vld [vmem:[#allocation11 + $0x118] sm:$0xff]
    %v1726 = vld [vmem:[#allocation11 + $0x120] sm:$0xff]
    %v1727 = vld [vmem:[#allocation11 + $0x128] sm:$0xff]
    %v1728 = vld [vmem:[#allocation11 + $0x130] sm:$0xff]
    %v1729 = vld [vmem:[#allocation11 + $0x138] sm:$0xff]
    %v1730 = vld [vmem:[#allocation11 + $0x140] sm:$0xff]
    %v1731 = vld [vmem:[#allocation11 + $0x148] sm:$0xff]
    %v1732 = vld [vmem:[#allocation11 + $0x150] sm:$0xff]
    %v1733 = vld [vmem:[#allocation11 + $0x158] sm:$0xff]
    %v1734 = vld [vmem:[#allocation11 + $0x160] sm:$0xff]
    %v1735 = vld [vmem:[#allocation11 + $0x168] sm:$0xff]
    %v1736 = vld [vmem:[#allocation11 + $0x170] sm:$0xff]
    %v1737 = vld [vmem:[#allocation11 + $0x178] sm:$0xff]
    %v1738 = vld [vmem:[#allocation11 + $0x180] sm:$0xff]
    %v1739 = vld [vmem:[#allocation11 + $0x188] sm:$0xff]
    %v1740 = vld [vmem:[#allocation11 + $0x190] sm:$0xff]
    %v1741 = vld [vmem:[#allocation11 + $0x198] sm:$0xff]
    %v1742 = vld [vmem:[#allocation11 + $0x1a0] sm:$0xff]
    %v1743 = vld [vmem:[#allocation11 + $0x1a8] sm:$0xff]
    %v1744 = vld [vmem:[#allocation11 + $0x1b0] sm:$0xff]
    %v1745 = vld [vmem:[#allocation11 + $0x1b8] sm:$0xff]
    %v1746 = vld [vmem:[#allocation11 + $0x1c0] sm:$0xff]
    %v1747 = vld [vmem:[#allocation11 + $0x1c8] sm:$0xff]
    %v1748 = vld [vmem:[#allocation11 + $0x1d0] sm:$0xff]
    %v1749 = vld [vmem:[#allocation11 + $0x1d8] sm:$0xff]
    %v1750 = vld [vmem:[#allocation11 + $0x1e0] sm:$0xff]
    %v1751 = vld [vmem:[#allocation11 + $0x1e8] sm:$0xff]
    %v1752 = vld [vmem:[#allocation11 + $0x1f0] sm:$0xff]
    %v1753 = vld [vmem:[#allocation11 + $0x1f8] sm:$0xff]
    %1754 = vmatprep.subr.mxu0 %v1751
    %1755 = vmatpush1.msra.mxu0 %v1750
    %1756 = vmatprep.subr.mxu0 %v1747
    %1757 = vmatpush1.msra.mxu0 %v1746
    %1758 = vmatprep.subr.mxu0 %v1743
    %1759 = vmatpush1.msra.mxu0 %v1742
    %1760 = vmatprep.subr.mxu0 %v1739
    %1761 = vmatpush1.msra.mxu0 %v1738
    %1762 = vmatprep.subr.mxu0 %v1735
    %1763 = vmatpush1.msra.mxu0 %v1734
    %1764 = vmatprep.subr.mxu0 %v1731
    %1765 = vmatpush1.msra.mxu0 %v1730
    %1766 = vmatprep.subr.mxu0 %v1727
    %1767 = vmatpush1.msra.mxu0 %v1726
    %1768 = vmatprep.subr.mxu0 %v1723
    %1769 = vmatpush1.msra.mxu0 %v1722
    %1770 = vmatprep.subr.mxu0 %v1719
    %1771 = vmatpush1.msra.mxu0 %v1718
    %1772 = vmatprep.subr.mxu0 %v1715
    %1773 = vmatpush1.msra.mxu0 %v1714
    %1774 = vmatprep.subr.mxu0 %v1711
    %1775 = vmatpush1.msra.mxu0 %v1710
    %1776 = vmatprep.subr.mxu0 %v1707
    %1777 = vmatpush1.msra.mxu0 %v1706
    %1778 = vmatprep.subr.mxu0 %v1703
    %1779 = vmatpush1.msra.mxu0 %v1702
    %1780 = vmatprep.subr.mxu0 %v1699
    %1781 = vmatpush1.msra.mxu0 %v1698
    %1782 = vmatprep.subr.mxu0 %v1695
    %1783 = vmatpush1.msra.mxu0 %v1694
    %1784 = vmatprep.subr.mxu0 %v1691
    %1785 = vmatpush1.msra.mxu0 %v1690
    %1786 = vmatprep.subr.mxu0 0.0
    %1787 = vmatpush2.msra.mxu0 0.0
    %1788 = vmatprep.subr.mxu0 0.0
    %1789 = vmatpush2.msra.mxu0 0.0
    %1790 = vmatprep.subr.mxu0 0.0
    %1791 = vmatpush2.msra.mxu0 0.0
    %1792 = vmatprep.subr.mxu0 0.0
    %1793 = vmatpush2.msra.mxu0 0.0
    %1794 = vmatprep.subr.mxu0 0.0
    %1795 = vmatpush2.msra.mxu0 0.0
    %1796 = vmatprep.subr.mxu0 0.0
    %1797 = vmatpush2.msra.mxu0 0.0
    %1798 = vmatprep.subr.mxu0 0.0
    %1799 = vmatpush2.msra.mxu0 0.0
    %1800 = vmatprep.subr.mxu0 0.0
    %1801 = vmatpush2.msra.mxu0 0.0
    %1802 = vmatprep.subr.mxu0 0.0
    %1803 = vmatpush2.msra.mxu0 0.0
    %1804 = vmatprep.subr.mxu0 0.0
    %1805 = vmatpush2.msra.mxu0 0.0
    %1806 = vmatprep.subr.mxu0 0.0
    %1807 = vmatpush2.msra.mxu0 0.0
    %1808 = vmatprep.subr.mxu0 0.0
    %1809 = vmatpush2.msra.mxu0 0.0
    %1810 = vmatprep.subr.mxu0 0.0
    %1811 = vmatpush2.msra.mxu0 0.0
    %1812 = vmatprep.subr.mxu0 0.0
    %1813 = vmatpush2.msra.mxu0 0.0
    %1814 = vmatprep.subr.mxu0 0.0
    %1815 = vmatpush2.msra.mxu0 0.0
    %1816 = vmatprep.subr.mxu0 0.0
    %1817 = vmatpush2.msra.mxu0 0.0
    %1818 = vmatprep.mubr.f32.mxu0 0.0
    %1819 = vmatmul.mubr.f32.gmra.mxu0 %v1689
    %v1820 = vpop.f32.mrf.mxu0
    %v1821 = vadd.f32 0.0, %v1820
    %v1822 = vpop.f32.mrf.mxu0
    %v1823 = vadd.f32 0.0, %v1822
    %1824 = vdwg.mxu0
    %1825 = vmatprep.subr.mxu0 %v1753
    %1826 = vmatpush1.msra.mxu0 %v1752
    %1827 = vmatprep.subr.mxu0 %v1749
    %1828 = vmatpush1.msra.mxu0 %v1748
    %1829 = vmatprep.subr.mxu0 %v1745
    %1830 = vmatpush1.msra.mxu0 %v1744
    %1831 = vmatprep.subr.mxu0 %v1741
    %1832 = vmatpush1.msra.mxu0 %v1740
    %1833 = vmatprep.subr.mxu0 %v1737
    %1834 = vmatpush1.msra.mxu0 %v1736
    %1835 = vmatprep.subr.mxu0 %v1733
    %1836 = vmatpush1.msra.mxu0 %v1732
    %1837 = vmatprep.subr.mxu0 %v1729
    %1838 = vmatpush1.msra.mxu0 %v1728
    %1839 = vmatprep.subr.mxu0 %v1725
    %1840 = vmatpush1.msra.mxu0 %v1724
    %1841 = vmatprep.subr.mxu0 %v1721
    %1842 = vmatpush1.msra.mxu0 %v1720
    %1843 = vmatprep.subr.mxu0 %v1717
    %1844 = vmatpush1.msra.mxu0 %v1716
    %1845 = vmatprep.subr.mxu0 %v1713
    %1846 = vmatpush1.msra.mxu0 %v1712
    %1847 = vmatprep.subr.mxu0 %v1709
    %1848 = vmatpush1.msra.mxu0 %v1708
    %1849 = vmatprep.subr.mxu0 %v1705
    %1850 = vmatpush1.msra.mxu0 %v1704
    %1851 = vmatprep.subr.mxu0 %v1701
    %1852 = vmatpush1.msra.mxu0 %v1700
    %1853 = vmatprep.subr.mxu0 %v1697
    %1854 = vmatpush1.msra.mxu0 %v1696
    %1855 = vmatprep.subr.mxu0 %v1693
    %1856 = vmatpush1.msra.mxu0 %v1692
    %1857 = vmatprep.subr.mxu0 0.0
    %1858 = vmatpush2.msra.mxu0 0.0
    %1859 = vmatprep.subr.mxu0 0.0
    %1860 = vmatpush2.msra.mxu0 0.0
    %1861 = vmatprep.subr.mxu0 0.0
    %1862 = vmatpush2.msra.mxu0 0.0
    %1863 = vmatprep.subr.mxu0 0.0
    %1864 = vmatpush2.msra.mxu0 0.0
    %1865 = vmatprep.subr.mxu0 0.0
    %1866 = vmatpush2.msra.mxu0 0.0
    %1867 = vmatprep.subr.mxu0 0.0
    %1868 = vmatpush2.msra.mxu0 0.0
    %1869 = vmatprep.subr.mxu0 0.0
    %1870 = vmatpush2.msra.mxu0 0.0
    %1871 = vmatprep.subr.mxu0 0.0
    %1872 = vmatpush2.msra.mxu0 0.0
    %1873 = vmatprep.subr.mxu0 0.0
    %1874 = vmatpush2.msra.mxu0 0.0
    %1875 = vmatprep.subr.mxu0 0.0
    %1876 = vmatpush2.msra.mxu0 0.0
    %1877 = vmatprep.subr.mxu0 0.0
    %1878 = vmatpush2.msra.mxu0 0.0
    %1879 = vmatprep.subr.mxu0 0.0
    %1880 = vmatpush2.msra.mxu0 0.0
    %1881 = vmatprep.subr.mxu0 0.0
    %1882 = vmatpush2.msra.mxu0 0.0
    %1883 = vmatprep.subr.mxu0 0.0
    %1884 = vmatpush2.msra.mxu0 0.0
    %1885 = vmatprep.subr.mxu0 0.0
    %1886 = vmatpush2.msra.mxu0 0.0
    %1887 = vmatprep.subr.mxu0 0.0
    %1888 = vmatpush2.msra.mxu0 0.0
    %1889 = vmatprep.mubr.f32.mxu0 0.0
    %1890 = vmatmul.mubr.f32.gmra.mxu0 %v1689
    %v1891 = vpop.f32.mrf.mxu0
    %v1892 = vadd.f32 0.0, %v1891
    %v1893 = vpop.f32.mrf.mxu0
    %v1894 = vadd.f32 0.0, %v1893
    %1895 = vdwg.mxu0
    %v1900 = vcombine.low %v1821, %v1823
    %v1901 = vcombine.low %v1892, %v1894
    %v1903 = vunpack.c.l.s4 1966171168
    %v1904 = vunpack.c.0.s8 %v1903
    %v1905 = vlaneseq
    %v1906 = vshrl.u32 %v1905, 7
    %v1907 = vsub.s32 %v1904, %v1906
    %v1908 = vrot.slane %v1900, %v1907
    %v1910 = vunpack.c.l.s4 1966171168
    %v1911 = vunpack.c.0.s8 %v1910
    %v1912 = vlaneseq
    %v1913 = vshrl.u32 %v1912, 7
    %v1914 = vsub.s32 %v1911, %v1913
    %v1915 = vrot.slane %v1901, %v1914
    %v1916 = vcombine.low %v1908, %v1915
    %v1918 = vunpack.c.l.s4 1966171168
    %v1919 = vunpack.c.0.s8 %v1918
    %v1920 = vlaneseq
    %v1921 = vshrl.u32 %v1920, 7
    %v1922 = vsub.s32 %v1919, %v1921
    %v1923 = vrot.slane %v1916, %v1922
    %v1925 = vadd.f32 %v1688, %v1923
    %v1926 = vxor.u32 %v1925, 2147483648
    %v1927 = vmul.f32 %v1926, 1.442695
    %v1928 = vpow.pop %v1927
    %v1929 = vadd.f32 %v1928, 1.0
    %v1930 = vrcp.pop %v1929
    %v1931 = vmul.f32 1.0, %v1930
    %v1933 = vrot.slane %v1925, 1
    %v1935 = vxor.u32 %v1933, 2147483648
    %v1936 = vmul.f32 %v1935, 1.442695
    %v1937 = vpow.pop %v1936
    %v1938 = vadd.f32 %v1937, 1.0
    %v1939 = vrcp.pop %v1938
    %v1940 = vmul.f32 1.0, %v1939
    %v1941 = vrot.slane %v1925, 2
    %v1943 = vtanh.pop %v1941
    %v1944 = vrot.slane %v1925, 3
    %v1946 = vxor.u32 %v1944, 2147483648
    %v1947 = vmul.f32 %v1946, 1.442695
    %v1948 = vpow.pop %v1947
    %v1949 = vadd.f32 %v1948, 1.0
    %v1950 = vrcp.pop %v1949
    %v1951 = vmul.f32 1.0, %v1950
    %v1952 = vld [vmem:[#allocation4] sm:$0x1]
    %v1953 = vmul.f32 %v1940, %v1952
    %v1954 = vmul.f32 %v1931, %v1943
    %v1955 = vadd.f32 %v1953, %v1954
    %v1956 = vtanh.pop %v1955
    %v1957 = vmul.f32 %v1951, %v1956
    %1958 = vst [vmem:[#allocation4] sm:$0x1] %v1955
    %1959 = vst [vmem:[#allocation3] sm:$0x1] %v1957
    %1960 = vst [vmem:[#allocation5 + $0x5] sm:$0x1] %v1957
    %s1961 = scalar_lea.vmem [#allocation2], 6
    %v1962 = vld [vmem:[%s1961] ss:$8 sm:$0xf]
    %v1963 = vld [vmem:[#allocation3] sm:$0x1]
    %v1964 = vld [vmem:[#allocation11] sm:$0xff]
    %v1965 = vld [vmem:[#allocation11 + $0x8] sm:$0xff]
    %v1966 = vld [vmem:[#allocation11 + $0x10] sm:$0xff]
    %v1967 = vld [vmem:[#allocation11 + $0x18] sm:$0xff]
    %v1968 = vld [vmem:[#allocation11 + $0x20] sm:$0xff]
    %v1969 = vld [vmem:[#allocation11 + $0x28] sm:$0xff]
    %v1970 = vld [vmem:[#allocation11 + $0x30] sm:$0xff]
    %v1971 = vld [vmem:[#allocation11 + $0x38] sm:$0xff]
    %v1972 = vld [vmem:[#allocation11 + $0x40] sm:$0xff]
    %v1973 = vld [vmem:[#allocation11 + $0x48] sm:$0xff]
    %v1974 = vld [vmem:[#allocation11 + $0x50] sm:$0xff]
    %v1975 = vld [vmem:[#allocation11 + $0x58] sm:$0xff]
    %v1976 = vld [vmem:[#allocation11 + $0x60] sm:$0xff]
    %v1977 = vld [vmem:[#allocation11 + $0x68] sm:$0xff]
    %v1978 = vld [vmem:[#allocation11 + $0x70] sm:$0xff]
    %v1979 = vld [vmem:[#allocation11 + $0x78] sm:$0xff]
    %v1980 = vld [vmem:[#allocation11 + $0x80] sm:$0xff]
    %v1981 = vld [vmem:[#allocation11 + $0x88] sm:$0xff]
    %v1982 = vld [vmem:[#allocation11 + $0x90] sm:$0xff]
    %v1983 = vld [vmem:[#allocation11 + $0x98] sm:$0xff]
    %v1984 = vld [vmem:[#allocation11 + $0xa0] sm:$0xff]
    %v1985 = vld [vmem:[#allocation11 + $0xa8] sm:$0xff]
    %v1986 = vld [vmem:[#allocation11 + $0xb0] sm:$0xff]
    %v1987 = vld [vmem:[#allocation11 + $0xb8] sm:$0xff]
    %v1988 = vld [vmem:[#allocation11 + $0xc0] sm:$0xff]
    %v1989 = vld [vmem:[#allocation11 + $0xc8] sm:$0xff]
    %v1990 = vld [vmem:[#allocation11 + $0xd0] sm:$0xff]
    %v1991 = vld [vmem:[#allocation11 + $0xd8] sm:$0xff]
    %v1992 = vld [vmem:[#allocation11 + $0xe0] sm:$0xff]
    %v1993 = vld [vmem:[#allocation11 + $0xe8] sm:$0xff]
    %v1994 = vld [vmem:[#allocation11 + $0xf0] sm:$0xff]
    %v1995 = vld [vmem:[#allocation11 + $0xf8] sm:$0xff]
    %v1996 = vld [vmem:[#allocation11 + $0x100] sm:$0xff]
    %v1997 = vld [vmem:[#allocation11 + $0x108] sm:$0xff]
    %v1998 = vld [vmem:[#allocation11 + $0x110] sm:$0xff]
    %v1999 = vld [vmem:[#allocation11 + $0x118] sm:$0xff]
    %v2000 = vld [vmem:[#allocation11 + $0x120] sm:$0xff]
    %v2001 = vld [vmem:[#allocation11 + $0x128] sm:$0xff]
    %v2002 = vld [vmem:[#allocation11 + $0x130] sm:$0xff]
    %v2003 = vld [vmem:[#allocation11 + $0x138] sm:$0xff]
    %v2004 = vld [vmem:[#allocation11 + $0x140] sm:$0xff]
    %v2005 = vld [vmem:[#allocation11 + $0x148] sm:$0xff]
    %v2006 = vld [vmem:[#allocation11 + $0x150] sm:$0xff]
    %v2007 = vld [vmem:[#allocation11 + $0x158] sm:$0xff]
    %v2008 = vld [vmem:[#allocation11 + $0x160] sm:$0xff]
    %v2009 = vld [vmem:[#allocation11 + $0x168] sm:$0xff]
    %v2010 = vld [vmem:[#allocation11 + $0x170] sm:$0xff]
    %v2011 = vld [vmem:[#allocation11 + $0x178] sm:$0xff]
    %v2012 = vld [vmem:[#allocation11 + $0x180] sm:$0xff]
    %v2013 = vld [vmem:[#allocation11 + $0x188] sm:$0xff]
    %v2014 = vld [vmem:[#allocation11 + $0x190] sm:$0xff]
    %v2015 = vld [vmem:[#allocation11 + $0x198] sm:$0xff]
    %v2016 = vld [vmem:[#allocation11 + $0x1a0] sm:$0xff]
    %v2017 = vld [vmem:[#allocation11 + $0x1a8] sm:$0xff]
    %v2018 = vld [vmem:[#allocation11 + $0x1b0] sm:$0xff]
    %v2019 = vld [vmem:[#allocation11 + $0x1b8] sm:$0xff]
    %v2020 = vld [vmem:[#allocation11 + $0x1c0] sm:$0xff]
    %v2021 = vld [vmem:[#allocation11 + $0x1c8] sm:$0xff]
    %v2022 = vld [vmem:[#allocation11 + $0x1d0] sm:$0xff]
    %v2023 = vld [vmem:[#allocation11 + $0x1d8] sm:$0xff]
    %v2024 = vld [vmem:[#allocation11 + $0x1e0] sm:$0xff]
    %v2025 = vld [vmem:[#allocation11 + $0x1e8] sm:$0xff]
    %v2026 = vld [vmem:[#allocation11 + $0x1f0] sm:$0xff]
    %v2027 = vld [vmem:[#allocation11 + $0x1f8] sm:$0xff]
    %2028 = vmatprep.subr.mxu0 %v2025
    %2029 = vmatpush1.msra.mxu0 %v2024
    %2030 = vmatprep.subr.mxu0 %v2021
    %2031 = vmatpush1.msra.mxu0 %v2020
    %2032 = vmatprep.subr.mxu0 %v2017
    %2033 = vmatpush1.msra.mxu0 %v2016
    %2034 = vmatprep.subr.mxu0 %v2013
    %2035 = vmatpush1.msra.mxu0 %v2012
    %2036 = vmatprep.subr.mxu0 %v2009
    %2037 = vmatpush1.msra.mxu0 %v2008
    %2038 = vmatprep.subr.mxu0 %v2005
    %2039 = vmatpush1.msra.mxu0 %v2004
    %2040 = vmatprep.subr.mxu0 %v2001
    %2041 = vmatpush1.msra.mxu0 %v2000
    %2042 = vmatprep.subr.mxu0 %v1997
    %2043 = vmatpush1.msra.mxu0 %v1996
    %2044 = vmatprep.subr.mxu0 %v1993
    %2045 = vmatpush1.msra.mxu0 %v1992
    %2046 = vmatprep.subr.mxu0 %v1989
    %2047 = vmatpush1.msra.mxu0 %v1988
    %2048 = vmatprep.subr.mxu0 %v1985
    %2049 = vmatpush1.msra.mxu0 %v1984
    %2050 = vmatprep.subr.mxu0 %v1981
    %2051 = vmatpush1.msra.mxu0 %v1980
    %2052 = vmatprep.subr.mxu0 %v1977
    %2053 = vmatpush1.msra.mxu0 %v1976
    %2054 = vmatprep.subr.mxu0 %v1973
    %2055 = vmatpush1.msra.mxu0 %v1972
    %2056 = vmatprep.subr.mxu0 %v1969
    %2057 = vmatpush1.msra.mxu0 %v1968
    %2058 = vmatprep.subr.mxu0 %v1965
    %2059 = vmatpush1.msra.mxu0 %v1964
    %2060 = vmatprep.subr.mxu0 0.0
    %2061 = vmatpush2.msra.mxu0 0.0
    %2062 = vmatprep.subr.mxu0 0.0
    %2063 = vmatpush2.msra.mxu0 0.0
    %2064 = vmatprep.subr.mxu0 0.0
    %2065 = vmatpush2.msra.mxu0 0.0
    %2066 = vmatprep.subr.mxu0 0.0
    %2067 = vmatpush2.msra.mxu0 0.0
    %2068 = vmatprep.subr.mxu0 0.0
    %2069 = vmatpush2.msra.mxu0 0.0
    %2070 = vmatprep.subr.mxu0 0.0
    %2071 = vmatpush2.msra.mxu0 0.0
    %2072 = vmatprep.subr.mxu0 0.0
    %2073 = vmatpush2.msra.mxu0 0.0
    %2074 = vmatprep.subr.mxu0 0.0
    %2075 = vmatpush2.msra.mxu0 0.0
    %2076 = vmatprep.subr.mxu0 0.0
    %2077 = vmatpush2.msra.mxu0 0.0
    %2078 = vmatprep.subr.mxu0 0.0
    %2079 = vmatpush2.msra.mxu0 0.0
    %2080 = vmatprep.subr.mxu0 0.0
    %2081 = vmatpush2.msra.mxu0 0.0
    %2082 = vmatprep.subr.mxu0 0.0
    %2083 = vmatpush2.msra.mxu0 0.0
    %2084 = vmatprep.subr.mxu0 0.0
    %2085 = vmatpush2.msra.mxu0 0.0
    %2086 = vmatprep.subr.mxu0 0.0
    %2087 = vmatpush2.msra.mxu0 0.0
    %2088 = vmatprep.subr.mxu0 0.0
    %2089 = vmatpush2.msra.mxu0 0.0
    %2090 = vmatprep.subr.mxu0 0.0
    %2091 = vmatpush2.msra.mxu0 0.0
    %2092 = vmatprep.mubr.f32.mxu0 0.0
    %2093 = vmatmul.mubr.f32.gmra.mxu0 %v1963
    %v2094 = vpop.f32.mrf.mxu0
    %v2095 = vadd.f32 0.0, %v2094
    %v2096 = vpop.f32.mrf.mxu0
    %v2097 = vadd.f32 0.0, %v2096
    %2098 = vdwg.mxu0
    %2099 = vmatprep.subr.mxu0 %v2027
    %2100 = vmatpush1.msra.mxu0 %v2026
    %2101 = vmatprep.subr.mxu0 %v2023
    %2102 = vmatpush1.msra.mxu0 %v2022
    %2103 = vmatprep.subr.mxu0 %v2019
    %2104 = vmatpush1.msra.mxu0 %v2018
    %2105 = vmatprep.subr.mxu0 %v2015
    %2106 = vmatpush1.msra.mxu0 %v2014
    %2107 = vmatprep.subr.mxu0 %v2011
    %2108 = vmatpush1.msra.mxu0 %v2010
    %2109 = vmatprep.subr.mxu0 %v2007
    %2110 = vmatpush1.msra.mxu0 %v2006
    %2111 = vmatprep.subr.mxu0 %v2003
    %2112 = vmatpush1.msra.mxu0 %v2002
    %2113 = vmatprep.subr.mxu0 %v1999
    %2114 = vmatpush1.msra.mxu0 %v1998
    %2115 = vmatprep.subr.mxu0 %v1995
    %2116 = vmatpush1.msra.mxu0 %v1994
    %2117 = vmatprep.subr.mxu0 %v1991
    %2118 = vmatpush1.msra.mxu0 %v1990
    %2119 = vmatprep.subr.mxu0 %v1987
    %2120 = vmatpush1.msra.mxu0 %v1986
    %2121 = vmatprep.subr.mxu0 %v1983
    %2122 = vmatpush1.msra.mxu0 %v1982
    %2123 = vmatprep.subr.mxu0 %v1979
    %2124 = vmatpush1.msra.mxu0 %v1978
    %2125 = vmatprep.subr.mxu0 %v1975
    %2126 = vmatpush1.msra.mxu0 %v1974
    %2127 = vmatprep.subr.mxu0 %v1971
    %2128 = vmatpush1.msra.mxu0 %v1970
    %2129 = vmatprep.subr.mxu0 %v1967
    %2130 = vmatpush1.msra.mxu0 %v1966
    %2131 = vmatprep.subr.mxu0 0.0
    %2132 = vmatpush2.msra.mxu0 0.0
    %2133 = vmatprep.subr.mxu0 0.0
    %2134 = vmatpush2.msra.mxu0 0.0
    %2135 = vmatprep.subr.mxu0 0.0
    %2136 = vmatpush2.msra.mxu0 0.0
    %2137 = vmatprep.subr.mxu0 0.0
    %2138 = vmatpush2.msra.mxu0 0.0
    %2139 = vmatprep.subr.mxu0 0.0
    %2140 = vmatpush2.msra.mxu0 0.0
    %2141 = vmatprep.subr.mxu0 0.0
    %2142 = vmatpush2.msra.mxu0 0.0
    %2143 = vmatprep.subr.mxu0 0.0
    %2144 = vmatpush2.msra.mxu0 0.0
    %2145 = vmatprep.subr.mxu0 0.0
    %2146 = vmatpush2.msra.mxu0 0.0
    %2147 = vmatprep.subr.mxu0 0.0
    %2148 = vmatpush2.msra.mxu0 0.0
    %2149 = vmatprep.subr.mxu0 0.0
    %2150 = vmatpush2.msra.mxu0 0.0
    %2151 = vmatprep.subr.mxu0 0.0
    %2152 = vmatpush2.msra.mxu0 0.0
    %2153 = vmatprep.subr.mxu0 0.0
    %2154 = vmatpush2.msra.mxu0 0.0
    %2155 = vmatprep.subr.mxu0 0.0
    %2156 = vmatpush2.msra.mxu0 0.0
    %2157 = vmatprep.subr.mxu0 0.0
    %2158 = vmatpush2.msra.mxu0 0.0
    %2159 = vmatprep.subr.mxu0 0.0
    %2160 = vmatpush2.msra.mxu0 0.0
    %2161 = vmatprep.subr.mxu0 0.0
    %2162 = vmatpush2.msra.mxu0 0.0
    %2163 = vmatprep.mubr.f32.mxu0 0.0
    %2164 = vmatmul.mubr.f32.gmra.mxu0 %v1963
    %v2165 = vpop.f32.mrf.mxu0
    %v2166 = vadd.f32 0.0, %v2165
    %v2167 = vpop.f32.mrf.mxu0
    %v2168 = vadd.f32 0.0, %v2167
    %2169 = vdwg.mxu0
    %v2174 = vcombine.low %v2095, %v2097
    %v2175 = vcombine.low %v2166, %v2168
    %v2177 = vunpack.c.l.s4 1966171168
    %v2178 = vunpack.c.0.s8 %v2177
    %v2179 = vlaneseq
    %v2180 = vshrl.u32 %v2179, 7
    %v2181 = vsub.s32 %v2178, %v2180
    %v2182 = vrot.slane %v2174, %v2181
    %v2184 = vunpack.c.l.s4 1966171168
    %v2185 = vunpack.c.0.s8 %v2184
    %v2186 = vlaneseq
    %v2187 = vshrl.u32 %v2186, 7
    %v2188 = vsub.s32 %v2185, %v2187
    %v2189 = vrot.slane %v2175, %v2188
    %v2190 = vcombine.low %v2182, %v2189
    %v2192 = vunpack.c.l.s4 1966171168
    %v2193 = vunpack.c.0.s8 %v2192
    %v2194 = vlaneseq
    %v2195 = vshrl.u32 %v2194, 7
    %v2196 = vsub.s32 %v2193, %v2195
    %v2197 = vrot.slane %v2190, %v2196
    %v2199 = vadd.f32 %v1962, %v2197
    %v2200 = vxor.u32 %v2199, 2147483648
    %v2201 = vmul.f32 %v2200, 1.442695
    %v2202 = vpow.pop %v2201
    %v2203 = vadd.f32 %v2202, 1.0
    %v2204 = vrcp.pop %v2203
    %v2205 = vmul.f32 1.0, %v2204
    %v2207 = vrot.slane %v2199, 1
    %v2209 = vxor.u32 %v2207, 2147483648
    %v2210 = vmul.f32 %v2209, 1.442695
    %v2211 = vpow.pop %v2210
    %v2212 = vadd.f32 %v2211, 1.0
    %v2213 = vrcp.pop %v2212
    %v2214 = vmul.f32 1.0, %v2213
    %v2215 = vrot.slane %v2199, 2
    %v2217 = vtanh.pop %v2215
    %v2218 = vrot.slane %v2199, 3
    %v2220 = vxor.u32 %v2218, 2147483648
    %v2221 = vmul.f32 %v2220, 1.442695
    %v2222 = vpow.pop %v2221
    %v2223 = vadd.f32 %v2222, 1.0
    %v2224 = vrcp.pop %v2223
    %v2225 = vmul.f32 1.0, %v2224
    %v2226 = vld [vmem:[#allocation4] sm:$0x1]
    %v2227 = vmul.f32 %v2214, %v2226
    %v2228 = vmul.f32 %v2205, %v2217
    %v2229 = vadd.f32 %v2227, %v2228
    %v2230 = vtanh.pop %v2229
    %v2231 = vmul.f32 %v2225, %v2230
    %2232 = vst [vmem:[#allocation4] sm:$0x1] %v2229
    %2233 = vst [vmem:[#allocation3] sm:$0x1] %v2231
    %2234 = vst [vmem:[#allocation5 + $0x6] sm:$0x1] %v2231
    %s2235 = scalar_lea.vmem [#allocation2], 7
    %v2236 = vld [vmem:[%s2235] ss:$8 sm:$0xf]
    %v2237 = vld [vmem:[#allocation3] sm:$0x1]
    %v2238 = vld [vmem:[#allocation11] sm:$0xff]
    %v2239 = vld [vmem:[#allocation11 + $0x8] sm:$0xff]
    %v2240 = vld [vmem:[#allocation11 + $0x10] sm:$0xff]
    %v2241 = vld [vmem:[#allocation11 + $0x18] sm:$0xff]
    %v2242 = vld [vmem:[#allocation11 + $0x20] sm:$0xff]
    %v2243 = vld [vmem:[#allocation11 + $0x28] sm:$0xff]
    %v2244 = vld [vmem:[#allocation11 + $0x30] sm:$0xff]
    %v2245 = vld [vmem:[#allocation11 + $0x38] sm:$0xff]
    %v2246 = vld [vmem:[#allocation11 + $0x40] sm:$0xff]
    %v2247 = vld [vmem:[#allocation11 + $0x48] sm:$0xff]
    %v2248 = vld [vmem:[#allocation11 + $0x50] sm:$0xff]
    %v2249 = vld [vmem:[#allocation11 + $0x58] sm:$0xff]
    %v2250 = vld [vmem:[#allocation11 + $0x60] sm:$0xff]
    %v2251 = vld [vmem:[#allocation11 + $0x68] sm:$0xff]
    %v2252 = vld [vmem:[#allocation11 + $0x70] sm:$0xff]
    %v2253 = vld [vmem:[#allocation11 + $0x78] sm:$0xff]
    %v2254 = vld [vmem:[#allocation11 + $0x80] sm:$0xff]
    %v2255 = vld [vmem:[#allocation11 + $0x88] sm:$0xff]
    %v2256 = vld [vmem:[#allocation11 + $0x90] sm:$0xff]
    %v2257 = vld [vmem:[#allocation11 + $0x98] sm:$0xff]
    %v2258 = vld [vmem:[#allocation11 + $0xa0] sm:$0xff]
    %v2259 = vld [vmem:[#allocation11 + $0xa8] sm:$0xff]
    %v2260 = vld [vmem:[#allocation11 + $0xb0] sm:$0xff]
    %v2261 = vld [vmem:[#allocation11 + $0xb8] sm:$0xff]
    %v2262 = vld [vmem:[#allocation11 + $0xc0] sm:$0xff]
    %v2263 = vld [vmem:[#allocation11 + $0xc8] sm:$0xff]
    %v2264 = vld [vmem:[#allocation11 + $0xd0] sm:$0xff]
    %v2265 = vld [vmem:[#allocation11 + $0xd8] sm:$0xff]
    %v2266 = vld [vmem:[#allocation11 + $0xe0] sm:$0xff]
    %v2267 = vld [vmem:[#allocation11 + $0xe8] sm:$0xff]
    %v2268 = vld [vmem:[#allocation11 + $0xf0] sm:$0xff]
    %v2269 = vld [vmem:[#allocation11 + $0xf8] sm:$0xff]
    %v2270 = vld [vmem:[#allocation11 + $0x100] sm:$0xff]
    %v2271 = vld [vmem:[#allocation11 + $0x108] sm:$0xff]
    %v2272 = vld [vmem:[#allocation11 + $0x110] sm:$0xff]
    %v2273 = vld [vmem:[#allocation11 + $0x118] sm:$0xff]
    %v2274 = vld [vmem:[#allocation11 + $0x120] sm:$0xff]
    %v2275 = vld [vmem:[#allocation11 + $0x128] sm:$0xff]
    %v2276 = vld [vmem:[#allocation11 + $0x130] sm:$0xff]
    %v2277 = vld [vmem:[#allocation11 + $0x138] sm:$0xff]
    %v2278 = vld [vmem:[#allocation11 + $0x140] sm:$0xff]
    %v2279 = vld [vmem:[#allocation11 + $0x148] sm:$0xff]
    %v2280 = vld [vmem:[#allocation11 + $0x150] sm:$0xff]
    %v2281 = vld [vmem:[#allocation11 + $0x158] sm:$0xff]
    %v2282 = vld [vmem:[#allocation11 + $0x160] sm:$0xff]
    %v2283 = vld [vmem:[#allocation11 + $0x168] sm:$0xff]
    %v2284 = vld [vmem:[#allocation11 + $0x170] sm:$0xff]
    %v2285 = vld [vmem:[#allocation11 + $0x178] sm:$0xff]
    %v2286 = vld [vmem:[#allocation11 + $0x180] sm:$0xff]
    %v2287 = vld [vmem:[#allocation11 + $0x188] sm:$0xff]
    %v2288 = vld [vmem:[#allocation11 + $0x190] sm:$0xff]
    %v2289 = vld [vmem:[#allocation11 + $0x198] sm:$0xff]
    %v2290 = vld [vmem:[#allocation11 + $0x1a0] sm:$0xff]
    %v2291 = vld [vmem:[#allocation11 + $0x1a8] sm:$0xff]
    %v2292 = vld [vmem:[#allocation11 + $0x1b0] sm:$0xff]
    %v2293 = vld [vmem:[#allocation11 + $0x1b8] sm:$0xff]
    %v2294 = vld [vmem:[#allocation11 + $0x1c0] sm:$0xff]
    %v2295 = vld [vmem:[#allocation11 + $0x1c8] sm:$0xff]
    %v2296 = vld [vmem:[#allocation11 + $0x1d0] sm:$0xff]
    %v2297 = vld [vmem:[#allocation11 + $0x1d8] sm:$0xff]
    %v2298 = vld [vmem:[#allocation11 + $0x1e0] sm:$0xff]
    %v2299 = vld [vmem:[#allocation11 + $0x1e8] sm:$0xff]
    %v2300 = vld [vmem:[#allocation11 + $0x1f0] sm:$0xff]
    %v2301 = vld [vmem:[#allocation11 + $0x1f8] sm:$0xff]
    %2302 = vmatprep.subr.mxu0 %v2299
    %2303 = vmatpush1.msra.mxu0 %v2298
    %2304 = vmatprep.subr.mxu0 %v2295
    %2305 = vmatpush1.msra.mxu0 %v2294
    %2306 = vmatprep.subr.mxu0 %v2291
    %2307 = vmatpush1.msra.mxu0 %v2290
    %2308 = vmatprep.subr.mxu0 %v2287
    %2309 = vmatpush1.msra.mxu0 %v2286
    %2310 = vmatprep.subr.mxu0 %v2283
    %2311 = vmatpush1.msra.mxu0 %v2282
    %2312 = vmatprep.subr.mxu0 %v2279
    %2313 = vmatpush1.msra.mxu0 %v2278
    %2314 = vmatprep.subr.mxu0 %v2275
    %2315 = vmatpush1.msra.mxu0 %v2274
    %2316 = vmatprep.subr.mxu0 %v2271
    %2317 = vmatpush1.msra.mxu0 %v2270
    %2318 = vmatprep.subr.mxu0 %v2267
    %2319 = vmatpush1.msra.mxu0 %v2266
    %2320 = vmatprep.subr.mxu0 %v2263
    %2321 = vmatpush1.msra.mxu0 %v2262
    %2322 = vmatprep.subr.mxu0 %v2259
    %2323 = vmatpush1.msra.mxu0 %v2258
    %2324 = vmatprep.subr.mxu0 %v2255
    %2325 = vmatpush1.msra.mxu0 %v2254
    %2326 = vmatprep.subr.mxu0 %v2251
    %2327 = vmatpush1.msra.mxu0 %v2250
    %2328 = vmatprep.subr.mxu0 %v2247
    %2329 = vmatpush1.msra.mxu0 %v2246
    %2330 = vmatprep.subr.mxu0 %v2243
    %2331 = vmatpush1.msra.mxu0 %v2242
    %2332 = vmatprep.subr.mxu0 %v2239
    %2333 = vmatpush1.msra.mxu0 %v2238
    %2334 = vmatprep.subr.mxu0 0.0
    %2335 = vmatpush2.msra.mxu0 0.0
    %2336 = vmatprep.subr.mxu0 0.0
    %2337 = vmatpush2.msra.mxu0 0.0
    %2338 = vmatprep.subr.mxu0 0.0
    %2339 = vmatpush2.msra.mxu0 0.0
    %2340 = vmatprep.subr.mxu0 0.0
    %2341 = vmatpush2.msra.mxu0 0.0
    %2342 = vmatprep.subr.mxu0 0.0
    %2343 = vmatpush2.msra.mxu0 0.0
    %2344 = vmatprep.subr.mxu0 0.0
    %2345 = vmatpush2.msra.mxu0 0.0
    %2346 = vmatprep.subr.mxu0 0.0
    %2347 = vmatpush2.msra.mxu0 0.0
    %2348 = vmatprep.subr.mxu0 0.0
    %2349 = vmatpush2.msra.mxu0 0.0
    %2350 = vmatprep.subr.mxu0 0.0
    %2351 = vmatpush2.msra.mxu0 0.0
    %2352 = vmatprep.subr.mxu0 0.0
    %2353 = vmatpush2.msra.mxu0 0.0
    %2354 = vmatprep.subr.mxu0 0.0
    %2355 = vmatpush2.msra.mxu0 0.0
    %2356 = vmatprep.subr.mxu0 0.0
    %2357 = vmatpush2.msra.mxu0 0.0
    %2358 = vmatprep.subr.mxu0 0.0
    %2359 = vmatpush2.msra.mxu0 0.0
    %2360 = vmatprep.subr.mxu0 0.0
    %2361 = vmatpush2.msra.mxu0 0.0
    %2362 = vmatprep.subr.mxu0 0.0
    %2363 = vmatpush2.msra.mxu0 0.0
    %2364 = vmatprep.subr.mxu0 0.0
    %2365 = vmatpush2.msra.mxu0 0.0
    %2366 = vmatprep.mubr.f32.mxu0 0.0
    %2367 = vmatmul.mubr.f32.gmra.mxu0 %v2237
    %v2368 = vpop.f32.mrf.mxu0
    %v2369 = vadd.f32 0.0, %v2368
    %v2370 = vpop.f32.mrf.mxu0
    %v2371 = vadd.f32 0.0, %v2370
    %2372 = vdwg.mxu0
    %2373 = vmatprep.subr.mxu0 %v2301
    %2374 = vmatpush1.msra.mxu0 %v2300
    %2375 = vmatprep.subr.mxu0 %v2297
    %2376 = vmatpush1.msra.mxu0 %v2296
    %2377 = vmatprep.subr.mxu0 %v2293
    %2378 = vmatpush1.msra.mxu0 %v2292
    %2379 = vmatprep.subr.mxu0 %v2289
    %2380 = vmatpush1.msra.mxu0 %v2288
    %2381 = vmatprep.subr.mxu0 %v2285
    %2382 = vmatpush1.msra.mxu0 %v2284
    %2383 = vmatprep.subr.mxu0 %v2281
    %2384 = vmatpush1.msra.mxu0 %v2280
    %2385 = vmatprep.subr.mxu0 %v2277
    %2386 = vmatpush1.msra.mxu0 %v2276
    %2387 = vmatprep.subr.mxu0 %v2273
    %2388 = vmatpush1.msra.mxu0 %v2272
    %2389 = vmatprep.subr.mxu0 %v2269
    %2390 = vmatpush1.msra.mxu0 %v2268
    %2391 = vmatprep.subr.mxu0 %v2265
    %2392 = vmatpush1.msra.mxu0 %v2264
    %2393 = vmatprep.subr.mxu0 %v2261
    %2394 = vmatpush1.msra.mxu0 %v2260
    %2395 = vmatprep.subr.mxu0 %v2257
    %2396 = vmatpush1.msra.mxu0 %v2256
    %2397 = vmatprep.subr.mxu0 %v2253
    %2398 = vmatpush1.msra.mxu0 %v2252
    %2399 = vmatprep.subr.mxu0 %v2249
    %2400 = vmatpush1.msra.mxu0 %v2248
    %2401 = vmatprep.subr.mxu0 %v2245
    %2402 = vmatpush1.msra.mxu0 %v2244
    %2403 = vmatprep.subr.mxu0 %v2241
    %2404 = vmatpush1.msra.mxu0 %v2240
    %2405 = vmatprep.subr.mxu0 0.0
    %2406 = vmatpush2.msra.mxu0 0.0
    %2407 = vmatprep.subr.mxu0 0.0
    %2408 = vmatpush2.msra.mxu0 0.0
    %2409 = vmatprep.subr.mxu0 0.0
    %2410 = vmatpush2.msra.mxu0 0.0
    %2411 = vmatprep.subr.mxu0 0.0
    %2412 = vmatpush2.msra.mxu0 0.0
    %2413 = vmatprep.subr.mxu0 0.0
    %2414 = vmatpush2.msra.mxu0 0.0
    %2415 = vmatprep.subr.mxu0 0.0
    %2416 = vmatpush2.msra.mxu0 0.0
    %2417 = vmatprep.subr.mxu0 0.0
    %2418 = vmatpush2.msra.mxu0 0.0
    %2419 = vmatprep.subr.mxu0 0.0
    %2420 = vmatpush2.msra.mxu0 0.0
    %2421 = vmatprep.subr.mxu0 0.0
    %2422 = vmatpush2.msra.mxu0 0.0
    %2423 = vmatprep.subr.mxu0 0.0
    %2424 = vmatpush2.msra.mxu0 0.0
    %2425 = vmatprep.subr.mxu0 0.0
    %2426 = vmatpush2.msra.mxu0 0.0
    %2427 = vmatprep.subr.mxu0 0.0
    %2428 = vmatpush2.msra.mxu0 0.0
    %2429 = vmatprep.subr.mxu0 0.0
    %2430 = vmatpush2.msra.mxu0 0.0
    %2431 = vmatprep.subr.mxu0 0.0
    %2432 = vmatpush2.msra.mxu0 0.0
    %2433 = vmatprep.subr.mxu0 0.0
    %2434 = vmatpush2.msra.mxu0 0.0
    %2435 = vmatprep.subr.mxu0 0.0
    %2436 = vmatpush2.msra.mxu0 0.0
    %2437 = vmatprep.mubr.f32.mxu0 0.0
    %2438 = vmatmul.mubr.f32.gmra.mxu0 %v2237
    %v2439 = vpop.f32.mrf.mxu0
    %v2440 = vadd.f32 0.0, %v2439
    %v2441 = vpop.f32.mrf.mxu0
    %v2442 = vadd.f32 0.0, %v2441
    %2443 = vdwg.mxu0
    %v2448 = vcombine.low %v2369, %v2371
    %v2449 = vcombine.low %v2440, %v2442
    %v2451 = vunpack.c.l.s4 1966171168
    %v2452 = vunpack.c.0.s8 %v2451
    %v2453 = vlaneseq
    %v2454 = vshrl.u32 %v2453, 7
    %v2455 = vsub.s32 %v2452, %v2454
    %v2456 = vrot.slane %v2448, %v2455
    %v2458 = vunpack.c.l.s4 1966171168
    %v2459 = vunpack.c.0.s8 %v2458
    %v2460 = vlaneseq
    %v2461 = vshrl.u32 %v2460, 7
    %v2462 = vsub.s32 %v2459, %v2461
    %v2463 = vrot.slane %v2449, %v2462
    %v2464 = vcombine.low %v2456, %v2463
    %v2466 = vunpack.c.l.s4 1966171168
    %v2467 = vunpack.c.0.s8 %v2466
    %v2468 = vlaneseq
    %v2469 = vshrl.u32 %v2468, 7
    %v2470 = vsub.s32 %v2467, %v2469
    %v2471 = vrot.slane %v2464, %v2470
    %v2473 = vadd.f32 %v2236, %v2471
    %v2474 = vxor.u32 %v2473, 2147483648
    %v2475 = vmul.f32 %v2474, 1.442695
    %v2476 = vpow.pop %v2475
    %v2477 = vadd.f32 %v2476, 1.0
    %v2478 = vrcp.pop %v2477
    %v2479 = vmul.f32 1.0, %v2478
    %v2481 = vrot.slane %v2473, 1
    %v2483 = vxor.u32 %v2481, 2147483648
    %v2484 = vmul.f32 %v2483, 1.442695
    %v2485 = vpow.pop %v2484
    %v2486 = vadd.f32 %v2485, 1.0
    %v2487 = vrcp.pop %v2486
    %v2488 = vmul.f32 1.0, %v2487
    %v2489 = vrot.slane %v2473, 2
    %v2491 = vtanh.pop %v2489
    %v2492 = vrot.slane %v2473, 3
    %v2494 = vxor.u32 %v2492, 2147483648
    %v2495 = vmul.f32 %v2494, 1.442695
    %v2496 = vpow.pop %v2495
    %v2497 = vadd.f32 %v2496, 1.0
    %v2498 = vrcp.pop %v2497
    %v2499 = vmul.f32 1.0, %v2498
    %v2500 = vld [vmem:[#allocation4] sm:$0x1]
    %v2501 = vmul.f32 %v2488, %v2500
    %v2502 = vmul.f32 %v2479, %v2491
    %v2503 = vadd.f32 %v2501, %v2502
    %v2504 = vtanh.pop %v2503
    %v2505 = vmul.f32 %v2499, %v2504
    %2506 = vst [vmem:[#allocation4] sm:$0x1] %v2503
    %2507 = vst [vmem:[#allocation3] sm:$0x1] %v2505
    %2508 = vst [vmem:[#allocation5 + $0x7] sm:$0x1] %v2505
    %v2509 = vld [vmem:[#allocation5] sm:$0xff]
    %v2510 = vld [vmem:[%s4] sm:$0x1]
    %v2512 = vlaneseq
    %v2513 = vshrl.u32 %v2512, 7
    %v2514 = vsub.s32 0, %v2513
    %v2515 = vrot.slane %v2510, %v2514
    %v2517 = vmul.f32 %v2509, %v2515
    %v2518 = vld [vmem:[%s5] sm:$0x1]
    %v2520 = vlaneseq
    %v2521 = vshrl.u32 %v2520, 7
    %v2522 = vsub.s32 0, %v2521
    %v2523 = vrot.slane %v2518, %v2522
    %v2525 = vadd.f32 %v2517, %v2523
    %v2526 = vmax.f32 %v2525, 0.0
    %v2527 = vld [vmem:[#allocation12] sm:$0xff]
    %v2528 = vld [vmem:[#allocation12 + $0x8] sm:$0xff]
    %v2529 = vld [vmem:[#allocation12 + $0x10] sm:$0xff]
    %v2530 = vld [vmem:[#allocation12 + $0x18] sm:$0xff]
    %v2531 = vld [vmem:[#allocation12 + $0x20] sm:$0xff]
    %v2532 = vld [vmem:[#allocation12 + $0x28] sm:$0xff]
    %v2533 = vld [vmem:[#allocation12 + $0x30] sm:$0xff]
    %v2534 = vld [vmem:[#allocation12 + $0x38] sm:$0xff]
    %v2535 = vld [vmem:[#allocation12 + $0x40] sm:$0xff]
    %v2536 = vld [vmem:[#allocation12 + $0x48] sm:$0xff]
    %v2537 = vld [vmem:[#allocation12 + $0x50] sm:$0xff]
    %v2538 = vld [vmem:[#allocation12 + $0x58] sm:$0xff]
    %v2539 = vld [vmem:[#allocation12 + $0x60] sm:$0xff]
    %v2540 = vld [vmem:[#allocation12 + $0x68] sm:$0xff]
    %v2541 = vld [vmem:[#allocation12 + $0x70] sm:$0xff]
    %v2542 = vld [vmem:[#allocation12 + $0x78] sm:$0xff]
    %v2543 = vld [vmem:[%s7] sm:$0x1]
    %v2545 = vlaneseq
    %v2546 = vshrl.u32 %v2545, 7
    %v2547 = vsub.s32 0, %v2546
    %v2548 = vrot.slane %v2543, %v2547
    %2550 = vmatprep.subr.mxu0 0.0
    %2551 = vmatpush1.msra.mxu0 %v2542
    %2552 = vmatprep.subr.mxu0 0.0
    %2553 = vmatpush1.msra.mxu0 %v2541
    %2554 = vmatprep.subr.mxu0 0.0
    %2555 = vmatpush1.msra.mxu0 %v2540
    %2556 = vmatprep.subr.mxu0 0.0
    %2557 = vmatpush1.msra.mxu0 %v2539
    %2558 = vmatprep.subr.mxu0 0.0
    %2559 = vmatpush1.msra.mxu0 %v2538
    %2560 = vmatprep.subr.mxu0 0.0
    %2561 = vmatpush1.msra.mxu0 %v2537
    %2562 = vmatprep.subr.mxu0 0.0
    %2563 = vmatpush1.msra.mxu0 %v2536
    %2564 = vmatprep.subr.mxu0 0.0
    %2565 = vmatpush1.msra.mxu0 %v2535
    %2566 = vmatprep.subr.mxu0 0.0
    %2567 = vmatpush1.msra.mxu0 %v2534
    %2568 = vmatprep.subr.mxu0 0.0
    %2569 = vmatpush1.msra.mxu0 %v2533
    %2570 = vmatprep.subr.mxu0 0.0
    %2571 = vmatpush1.msra.mxu0 %v2532
    %2572 = vmatprep.subr.mxu0 0.0
    %2573 = vmatpush1.msra.mxu0 %v2531
    %2574 = vmatprep.subr.mxu0 0.0
    %2575 = vmatpush1.msra.mxu0 %v2530
    %2576 = vmatprep.subr.mxu0 0.0
    %2577 = vmatpush1.msra.mxu0 %v2529
    %2578 = vmatprep.subr.mxu0 0.0
    %2579 = vmatpush1.msra.mxu0 %v2528
    %2580 = vmatprep.subr.mxu0 0.0
    %2581 = vmatpush1.msra.mxu0 %v2527
    %2582 = vmatprep.subr.mxu0 0.0
    %2583 = vmatpush2.msra.mxu0 0.0
    %2584 = vmatprep.subr.mxu0 0.0
    %2585 = vmatpush2.msra.mxu0 0.0
    %2586 = vmatprep.subr.mxu0 0.0
    %2587 = vmatpush2.msra.mxu0 0.0
    %2588 = vmatprep.subr.mxu0 0.0
    %2589 = vmatpush2.msra.mxu0 0.0
    %2590 = vmatprep.subr.mxu0 0.0
    %2591 = vmatpush2.msra.mxu0 0.0
    %2592 = vmatprep.subr.mxu0 0.0
    %2593 = vmatpush2.msra.mxu0 0.0
    %2594 = vmatprep.subr.mxu0 0.0
    %2595 = vmatpush2.msra.mxu0 0.0
    %2596 = vmatprep.subr.mxu0 0.0
    %2597 = vmatpush2.msra.mxu0 0.0
    %2598 = vmatprep.subr.mxu0 0.0
    %2599 = vmatpush2.msra.mxu0 0.0
    %2600 = vmatprep.subr.mxu0 0.0
    %2601 = vmatpush2.msra.mxu0 0.0
    %2602 = vmatprep.subr.mxu0 0.0
    %2603 = vmatpush2.msra.mxu0 0.0
    %2604 = vmatprep.subr.mxu0 0.0
    %2605 = vmatpush2.msra.mxu0 0.0
    %2606 = vmatprep.subr.mxu0 0.0
    %2607 = vmatpush2.msra.mxu0 0.0
    %2608 = vmatprep.subr.mxu0 0.0
    %2609 = vmatpush2.msra.mxu0 0.0
    %2610 = vmatprep.subr.mxu0 0.0
    %2611 = vmatpush2.msra.mxu0 0.0
    %2612 = vmatprep.subr.mxu0 0.0
    %2613 = vmatpush2.msra.mxu0 0.0
    %2614 = vmatprep.mubr.f32.mxu0 0.0
    %2615 = vmatmul.mubr.f32.gmra.mxu0 %v2526
    %v2616 = vpop.f32.mrf.mxu0
    %v2617 = vadd.f32 %v2548, %v2616
    %v2618 = vpop.f32.mrf.mxu0
    %2619 = vdwg.mxu0
    %2620 = vst [vmem:[#allocation14] sm:$0xff] %v2617
    // Predicated region
    $region50: #{tpu_custom_call.1} parent=1 // pred_check
      _
    $region51: #{tpu_custom_call.1} parent=1 // pred_check_branch
      %2622 = sbr.rel (0) target = $region53
    $region52: #{tpu_custom_call.1} parent=1 // pred_region
      %s2624 = ssub.s32 128, 128
      %2625 = vsyncadd [#allocation8], %s2624
      %s2627 = sshll.u32 [#allocation14], 4
      %s2628 = int_to_ptr.vmem [resolvable:$true] %s2627
      %2630 = dma.vmem_to_hbm [thread:$0]  %s2628, 128, %s8, [#allocation8]
    $region53: #{tpu_custom_call.1} parent=1 // pred_fallthru
      _
    // Predicated region
    $region54: #{tpu_custom_call.1} parent=1 // pred_check
      _
    $region55: #{tpu_custom_call.1} parent=1 // pred_check_branch
      %2632 = sbr.rel (0) target = $region57
    $region56: #{tpu_custom_call.1} parent=1 // pred_region
      %2633 = dma.done [#allocation8], 128
    $region57: #{tpu_custom_call.1} parent=1 // pred_fallthru
      _
    %2634 = vsyncpa [#allocation7], 1
    %2635 = vsyncpa [#allocation10], 1
    %2636 = vsyncpa [#allocation13], 1
    %2637 = vsyncpa [#allocation8], 1

</llo_original>
